<compile_context>
chip_gen: v7x
topology: tpu7x:2x2x1
jax: 0.10.0
libtpu: 0.0.40
codegen_flags: <defaults>
</compile_context>

<pallas_src>
import functools

import jax
import jax.numpy as jnp
from jax.experimental import pallas as pl
from jax.experimental.pallas import tpu as pltpu


# --------------------------------------------------------------------------- helpers
def _round_up(a, b):
    return (a + b - 1) // b * b


def _pick_tile(n, prefer):
    for t in prefer:
        if t <= n and n % t == 0:
            return t
    return n


def _pick_q_tile(n_padded, batch):
    """Largest aligned q tile that still leaves ~4 parallel grid steps (v7x)."""
    tq = 128
    for t in (1024, 512, 256, 128):
        if n_padded % t == 0:
            tq = t
            break
    while tq > 128 and batch * (n_padded // tq) < 4:
        tq //= 2
    return tq


def _vmem_limit_bytes():
    # Derive the scoped-VMEM cap from the chip (128 MiB on v5e/v6e, 64 MiB per
    # TensorCore on v7x) instead of hard-coding 32 MiB.
    try:
        info = pltpu.get_tpu_info()
        cap = getattr(info, "vmem_capacity_bytes", None)
        if cap:
            return int(min(cap * 0.7, 96 * 1024 * 1024))
    except Exception:
        pass
    return 48 * 1024 * 1024  # safe on every generation


# --------------------------------------------------------------------------- fused QKV projection
def _qkv_kernel(x_ref, w_ref, b_ref, o_ref):
    # x: (tm, C), w: (C, tn) bf16, b: (1, tn) f32 -> o: (tm, tn) bf16
    x = x_ref[...].astype(jnp.bfloat16)
    y = jnp.dot(x, w_ref[...], preferred_element_type=jnp.float32)
    o_ref[...] = (y + b_ref[...]).astype(o_ref.dtype)


def qkv_projection(x2d, w_bf16, b, *, vmem_limit):
    M, C = x2d.shape
    C3 = w_bf16.shape[1]

    # Row tile: large tiles, pad M instead of falling back to a whole-array block.
    tm = min(512, _round_up(M, 8))
    for t in (512, 256, 128):
        if M % t == 0:
            tm = t
            break
    Mp = _round_up(M, tm)
    if Mp != M:
        x2d = jnp.pad(x2d, ((0, Mp - M), (0, 0)))

    # Column tile over 3C keeps the bf16 weight block VMEM-bounded at large C.
    tn = C3
    for t in (2048, 1536, 1024, 768, 512, 384, 256, 128):
        if C3 % t == 0:
            tn = t
            break

    out = pl.pallas_call(
        _qkv_kernel,
        out_shape=jax.ShapeDtypeStruct((Mp, C3), jnp.bfloat16),
        grid=(Mp // tm, C3 // tn),
        in_specs=[
            pl.BlockSpec((tm, C), lambda i, j: (i, 0)),
            pl.BlockSpec((C, tn), lambda i, j: (0, j)),
            pl.BlockSpec((1, tn), lambda i, j: (0, j)),
        ],
        out_specs=pl.BlockSpec((tm, tn), lambda i, j: (i, j)),
        compiler_params=pltpu.CompilerParams(
            dimension_semantics=("parallel", "parallel"),
            vmem_limit_bytes=vmem_limit),
    )(x2d, w_bf16, b.reshape(1, C3))
    return out[:M] if Mp != M else out


# --------------------------------------------------------------------------- flash attention + fused output projection
def _flash_attn_proj_kernel(q_ref, k_ref, v_ref, wp_ref, bp_ref, o_ref,
                            m_sc, l_sc, acc_sc, out_sc, qs_sc,
                            *, scale, num_heads, seq_len, tk, mask_keys):
    # q_ref: (tq, D) bf16   k_ref/v_ref: (tk, D) bf16
    # wp_ref: (H, D, C) bf16 fully resident   bp_ref: (1, C) f32
    # o_ref: (tq, C) bf16, written once at the last (head, kv) step.
    h = pl.program_id(2)
    ki = pl.program_id(3)
    kn = pl.num_programs(3)

    @pl.when(ki == 0)
    def _():
        # Fresh (q-tile, head): reset online-softmax state and cache the
        # scale-folded q tile (scale applied in f32, then cast to bf16).
        m_sc[...] = jnp.full_like(m_sc, -jnp.inf)
        l_sc[...] = jnp.zeros_like(l_sc)
        acc_sc[...] = jnp.zeros_like(acc_sc)
        qs_sc[...] = (q_ref[...].astype(jnp.float32) * scale).astype(jnp.bfloat16)

    s = jax.lax.dot_general(qs_sc[...], k_ref[...], (((1,), (1,)), ((), ())),
                            preferred_element_type=jnp.float32)        # (tq, tk)
    if mask_keys:
        col = jax.lax.broadcasted_iota(jnp.int32, s.shape, 1) + ki * tk
        s = jnp.where(col < seq_len, s, -jnp.inf)

    m_prev = m_sc[...]
    m_new = jnp.maximum(m_prev, jnp.max(s, axis=-1, keepdims=True))
    alpha = jnp.exp(m_prev - m_new)
    p = jnp.exp(s - m_new)            # f32 exp: safe on all chip generations
    l_sc[...] = alpha * l_sc[...] + jnp.sum(p, axis=-1, keepdims=True)
    acc_sc[...] = alpha * acc_sc[...] + jnp.dot(
        p.astype(jnp.bfloat16), v_ref[...], preferred_element_type=jnp.float32)
    m_sc[...] = m_new

    @pl.when(ki == kn - 1)
    def _():
        # Head finished: fold its context into the fused output projection.
        # TODO(synk): on v6e/v7x, pairing two heads into one (tq, 2D) x (2D, C)
        # matmul would fill the 256-deep MXU; per-head K=D matmuls run at 50%.
        ctx = (acc_sc[...] * pl.reciprocal(l_sc[...], approx=False)
               ).astype(jnp.bfloat16)
        contrib = jnp.dot(ctx, wp_ref[h], preferred_element_type=jnp.float32)

        @pl.when(h == 0)
        def _():
            out_sc[...] = bp_ref[...] + contrib        # bias folded into head 0

        @pl.when(h > 0)
        def _():
            out_sc[...] = out_sc[...] + contrib

        @pl.when(h == num_heads - 1)
        def _():
            o_ref[...] = out_sc[...].astype(o_ref.dtype)   # single bf16 store


def _flash_attention_proj(qkv, wp_heads, bproj, *, num_heads, scale, seq_len,
                          fused_layout, out_dtype, vmem_limit):
    if fused_layout:
        B, Np, C3 = qkv.shape
        C = C3 // 3
    else:
        _, B, _, Np, _ = qkv.shape
        C = wp_heads.shape[0] * wp_heads.shape[1]
    D = C // num_heads

    tq = _pick_q_tile(Np, B)
    tk = _pick_tile(Np, (512, 256, 128))
    mask_keys = seq_len < Np

    if fused_layout:
        # Slice per-(batch, head) q/k/v tiles straight out of the fused (B,N,3C)
        # tensor: the torch reshape/permute costs zero extra HBM passes.
        q_spec = pl.BlockSpec((None, tq, D), lambda b, qi, h, ki: (b, qi, h))
        k_spec = pl.BlockSpec((None, tk, D), lambda b, qi, h, ki: (b, ki, num_heads + h))
        v_spec = pl.BlockSpec((None, tk, D), lambda b, qi, h, ki: (b, ki, 2 * num_heads + h))
    else:
        # (3, B, H, N, D) layout fallback for head_dim not a multiple of 128.
        q_spec = pl.BlockSpec((None, None, None, tq, D), lambda b, qi, h, ki: (0, b, h, qi, 0))
        k_spec = pl.BlockSpec((None, None, None, tk, D), lambda b, qi, h, ki: (1, b, h, ki, 0))
        v_spec = pl.BlockSpec((None, None, None, tk, D), lambda b, qi, h, ki: (2, b, h, ki, 0))

    kern = functools.partial(
        _flash_attn_proj_kernel, scale=scale, num_heads=num_heads,
        seq_len=seq_len, tk=tk, mask_keys=mask_keys)

    grid = (B, Np // tq, num_heads, Np // tk)
    # TODO(synk): on v5e, pl.Buffered(3) on the k/v specs would further hide
    # exposed K/V DMA latency if profiling shows it.
    return pl.pallas_call(
        kern,
        out_shape=jax.ShapeDtypeStruct((B, Np, C), out_dtype),
        grid_spec=pltpu.PrefetchScalarGridSpec(
            num_scalar_prefetch=0,
            grid=grid,
            in_specs=[
                q_spec, k_spec, v_spec,
                # W_proj fully resident in VMEM (C*C bf16); per-head (D, C)
                # slice is selected inside the kernel -> no per-head DMA.
                pl.BlockSpec((num_heads, D, C), lambda b, qi, h, ki: (0, 0, 0)),
                pl.BlockSpec((1, C), lambda b, qi, h, ki: (0, 0)),
            ],
            out_specs=pl.BlockSpec((None, tq, C), lambda b, qi, h, ki: (b, qi, 0)),
            scratch_shapes=[
                pltpu.VMEM((tq, 1), jnp.float32),    # running max
                pltpu.VMEM((tq, 1), jnp.float32),    # running denom
                pltpu.VMEM((tq, D), jnp.float32),    # per-head context accumulator
                pltpu.VMEM((tq, C), jnp.float32),    # fused-proj accumulator (lane dense)
                pltpu.VMEM((tq, D), jnp.bfloat16),   # scale-folded q tile
            ]),
        compiler_params=pltpu.CompilerParams(
            dimension_semantics=("parallel", "parallel", "arbitrary", "arbitrary"),
            vmem_limit_bytes=vmem_limit),
    )(qkv, qkv, qkv, wp_heads, bproj.reshape(1, C))


# --------------------------------------------------------------------------- full module forward
def attention_forward(x, prm, num_heads, out_dtype=jnp.bfloat16):
    """Forward of the torch Attention module. x: (B, N, C) -> (B, N, C).

    Output is bf16 by default (mixed-precision policy, halves the HBM
    writeback); pass out_dtype=jnp.float32 for a full-precision store.
    """
    B, N, C = x.shape
    assert C % num_heads == 0
    D = C // num_heads
    scale = float(D) ** (-0.5)
    vmem_limit = _vmem_limit_bytes()

    # Pad the token axis to a multiple of 128 so all tiles stay lane/sublane
    # aligned; padded keys are masked with -inf inside the online softmax.
    Np = _round_up(N, 128)
    xp = jnp.pad(x, ((0, 0), (0, Np - N), (0, 0))) if Np != N else x

    # Weights fed to the MXU in bf16; biases and accumulation stay f32.
    wqkv = prm["wqkv"].astype(jnp.bfloat16)                             # (C, 3C)
    wp_heads = prm["wproj"].astype(jnp.bfloat16).reshape(num_heads, D, C)

    qkv = qkv_projection(xp.reshape(B * Np, C), wqkv, prm["bqkv"],
                         vmem_limit=vmem_limit)                         # (B*Np, 3C) bf16
    qkv = qkv.reshape(B, Np, 3 * C)

    if D % 128 == 0:
        out = _flash_attention_proj(
            qkv, wp_heads, prm["bproj"], num_heads=num_heads, scale=scale,
            seq_len=N, fused_layout=True, out_dtype=out_dtype,
            vmem_limit=vmem_limit)
    else:
        # head_dim not lane-aligned (e.g. UniFormer's 64): materialize the
        # (3, B, H, N, D) layout once in plain JAX and reuse the same kernel.
        # TODO(synk): pack two 64-wide heads per 128-lane block to avoid this
        # extra HBM pass and the half-empty lane layout.
        t = qkv.reshape(B, Np, 3, num_heads, D).transpose(2, 0, 3, 1, 4)
        out = _flash_attention_proj(
            t, wp_heads, prm["bproj"], num_heads=num_heads, scale=scale,
            seq_len=N, fused_layout=False, out_dtype=out_dtype,
            vmem_limit=vmem_limit)

    out = out[:, :N, :] if Np != N else out
    return out   # proj_drop is identity at the module default drop=0.0


# --------------------------------------------------------------------------- pure-JAX reference
def attention_reference(x, prm, num_heads):
    B, N, C = x.shape
    D = C // num_heads
    scale = float(D) ** (-0.5)
    hi = jax.lax.Precision.HIGHEST
    qkv = jnp.dot(x, prm["wqkv"], precision=hi) + prm["bqkv"]            # (B,N,3C)
    qkv = qkv.reshape(B, N, 3, num_heads, D).transpose(2, 0, 3, 1, 4)
    q, k, v = qkv[0], qkv[1], qkv[2]                                     # (B,H,N,D)
    attn = jnp.einsum("bhqd,bhkd->bhqk", q, k, precision=hi) * scale
    attn = jax.nn.softmax(attn, axis=-1)
    ctx = jnp.einsum("bhqk,bhkd->bhqd", attn, v, precision=hi)
    ctx = jnp.transpose(ctx, (0, 2, 1, 3)).reshape(B, N, C)
    return jnp.dot(ctx, prm["wproj"], precision=hi) + prm["bproj"]


# --------------------------------------------------------------------------- params / main
def init_params(key, dim):
    k1, k2, k3, k4 = jax.random.split(key, 4)
    s = dim ** (-0.5)
    return dict(
        wqkv=s * jax.random.normal(k1, (dim, 3 * dim), jnp.float32),
        bqkv=0.02 * jax.random.normal(k2, (3 * dim,), jnp.float32),
        wproj=s * jax.random.normal(k3, (dim, dim), jnp.float32),
        bproj=0.02 * jax.random.normal(k4, (dim,), jnp.float32),
    )


def _run_case(name, B, N, C, H, key):
    kx, kp = jax.random.split(key)
    x = jax.random.normal(kx, (B, N, C), jnp.float32)
    prm = init_params(kp, C)

    out = jax.block_until_ready(attention_forward(x, prm, H))
    ref = jax.block_until_ready(attention_reference(x, prm, H))

    assert out.shape == (B, N, C), (name, out.shape)
    err = float(jnp.max(jnp.abs(out.astype(jnp.float32) - ref)))
    mag = float(jnp.max(jnp.abs(ref)))
    # The gap vs the f32 reference is dominated by the deliberate bf16
    # MXU-input / bf16-output policy (~0.4% relative per rounding).
    assert err < 5e-2 + 3e-2 * mag, (name, err, mag)


if __name__ == "__main__":
    root = jax.random.PRNGKey(0)
    k1, k2 = jax.random.split(root)

    # Case 1: lane-aligned head_dim = 128 -> fused-qkv fast path, no padding.
    _run_case("head_dim128_fused", B=2, N=128, C=512, H=4, key=k1)

    # Case 2: UniFormer-style head_dim = 64 and ragged N = 196 (14x14 tokens)
    # -> (3,B,H,N,D) fallback layout + N padding with key masking.
    _run_case("head_dim64_ragged", B=2, N=196, C=256, H=4, key=k2)

    print("KERNEL_OK")
</pallas_src>

<mosaic_0001>
module attributes {stable_mosaic.version = 11 : i64} {
  func.func @_qkv_kernel(%arg0: i32, %arg1: i32, %arg2: memref<256x512xf32, #tpu.memory_space<vmem>>, %arg3: memref<512x1536xbf16, #tpu.memory_space<vmem>>, %arg4: memref<1x1536xf32, #tpu.memory_space<vmem>>, %arg5: memref<256x1536xbf16, #tpu.memory_space<vmem>>) attributes {dimension_semantics = [#tpu.dimension_semantics<parallel>, #tpu.dimension_semantics<parallel>], iteration_bounds = array<i64: 1, 1>, scalar_prefetch = 0 : i64, scratch_operands = 0 : i64, tpu.core_type = #tpu.core_type<tc>, window_params = [{transform_indices = @transform_0, window_bounds = array<i64: 256, 512>}, {transform_indices = @transform_1, window_bounds = array<i64: 512, 1536>}, {transform_indices = @transform_2, window_bounds = array<i64: 1, 1536>}, {transform_indices = @transform_3, window_bounds = array<i64: 256, 1536>}]} {
    %c0 = arith.constant 0 : index
    %c0_0 = arith.constant 0 : index
    %0 = vector.load %arg2[%c0, %c0_0] : memref<256x512xf32, #tpu.memory_space<vmem>>, vector<256x512xf32>
    %1 = arith.truncf %0 : vector<256x512xf32> to vector<256x512xbf16>
    %c0_1 = arith.constant 0 : index
    %c0_2 = arith.constant 0 : index
    %2 = vector.load %arg3[%c0_1, %c0_2] : memref<512x1536xbf16, #tpu.memory_space<vmem>>, vector<512x1536xbf16>
    %cst = arith.constant dense<0.000000e+00> : vector<256x1536xf32>
    %3 = tpu.matmul %1, %2, %cst {dimension_numbers = #tpu.dot_dimension_numbers<[1], [0], [0], [1], [0, 0, 1, 1], [], []>} : vector<256x512xbf16>, vector<512x1536xbf16>, vector<256x1536xf32> -> vector<256x1536xf32>
    %c0_3 = arith.constant 0 : index
    %c0_4 = arith.constant 0 : index
    %4 = vector.load %arg4[%c0_3, %c0_4] : memref<1x1536xf32, #tpu.memory_space<vmem>>, vector<1x1536xf32>
    %5 = vector.broadcast %4 : vector<1x1536xf32> to vector<256x1536xf32>
    %6 = arith.addf %3, %5 : vector<256x1536xf32>
    %7 = arith.truncf %6 : vector<256x1536xf32> to vector<256x1536xbf16>
    %c0_5 = arith.constant 0 : index
    %c0_6 = arith.constant 0 : index
    %8 = vector.load %arg5[%c0_5, %c0_6] : memref<256x1536xbf16, #tpu.memory_space<vmem>>, vector<256x1536xbf16>
    tpu.vector_store %arg5[%c0_5, %c0_6], %7 {strides = array<i32>} : memref<256x1536xbf16, #tpu.memory_space<vmem>>, vector<256x1536xbf16>,
    return
  }
  func.func @transform_0(%arg0: i32, %arg1: i32) -> (i32, i32) {
    %c0_i32 = arith.constant 0 : i32
    %c0_i32_0 = arith.constant 0 : i32
    return %arg0, %c0_i32 : i32, i32
  }
  func.func @transform_1(%arg0: i32, %arg1: i32) -> (i32, i32) {
    %c0_i32 = arith.constant 0 : i32
    %c0_i32_0 = arith.constant 0 : i32
    return %c0_i32, %arg1 : i32, i32
  }
  func.func @transform_2(%arg0: i32, %arg1: i32) -> (i32, i32) {
    %c0_i32 = arith.constant 0 : i32
    %c0_i32_0 = arith.constant 0 : i32
    return %c0_i32, %arg1 : i32, i32
  }
  func.func @transform_3(%arg0: i32, %arg1: i32) -> (i32, i32) {
    %c0_i32 = arith.constant 0 : i32
    return %arg0, %arg1 : i32, i32
  }
}

</mosaic_0001>

<llo_original>
// kernel: tpu_custom_call.1
$region0: #{tpu_custom_call.1}
  #allocation0 [shape = 'u32[]', space=smem, size = 0x4, offset = 0x4, fixed_abs, tag = 'smem constant byte address 0x4 - core index']
  #allocation1 [shape = 'u32[144,128]{1,0:T(1,128)}', space=vmem, size = 0x12000, scoped, tag = 'internal scratch']
  %s0 = inlined_call_operand.hbm [shape: f32[256,512], index: 0, kind: input, shape index: {}]
  %s1 = inlined_call_operand.hbm [shape: bf16[512,1536], index: 1, kind: input, shape index: {}]
  %s2 = inlined_call_operand.hbm [shape: f32[1,1536], index: 2, kind: input, shape index: {}]
  %s3 = inlined_call_operand.hbm [shape: bf16[256,1536], index: 3, kind: output, shape index: {}]
  %s4 = sld [smem:[#allocation0]]
  $region34: #{tpu_custom_call.1} parent=0
    _
  %s6 = ssub.s32 1, %s4
  %s7 = scalar_select 0, %s6, %s4
  $region1: #{tpu_custom_call.1} parent=0
    #allocation2 [shape = 'u8[524288]{0}', space=vmem, size = 0x80000, scoped, tag = 'input window, operand 0, single buffered']
    #allocation3 [shape = 's32[1]{0}', space=sflag, size = 0x4, scoped, tag = 'scoped memory for tpu_custom_call.1']
    #allocation4 [shape = 's32[1]{0}', space=sflag, size = 0x4, scoped, tag = 'scoped memory for tpu_custom_call.1']
    #allocation5 [shape = 'u8[1572864]{0}', space=vmem, size = 0x180000, scoped, tag = 'input window, operand 1, single buffered']
    #allocation6 [shape = 's32[1]{0}', space=sflag, size = 0x4, scoped, tag = 'scoped memory for tpu_custom_call.1']
    #allocation7 [shape = 'u8[6144]{0}', space=vmem, size = 0x1800, scoped, tag = 'input window, operand 2, single buffered']
    #allocation8 [shape = 'u8[786432]{0}', space=vmem, size = 0xc0000, scoped, tag = 'output window, operand 0, single buffered']
    %8 = vsyncpa [#allocation3], 0
    %9 = vsyncpa [#allocation6], 0
    %10 = vsyncpa [#allocation4], 0
    // Predicated region
    $region2: #{tpu_custom_call.1} parent=1 // pred_check
      _
    $region3: #{tpu_custom_call.1} parent=1 // pred_check_branch
      %12 = sbr.rel (0) target = $region5
    $region4: #{tpu_custom_call.1} parent=1 // pred_region
      %s14 = ssub.s32 16384, 16384
      %15 = vsyncadd [#allocation3], %s14
      %s16 = sshll.u32 [#allocation2], 4
      %s17 = int_to_ptr.vmem [resolvable:$true] %s16
      %22 = dma.hbm_to_vmem [thread:$0]  %s0, 16384, %s17, [#allocation3], 512, 512, 32
    $region5: #{tpu_custom_call.1} parent=1 // pred_fallthru
      _
    // Predicated region
    $region6: #{tpu_custom_call.1} parent=1 // pred_check
      _
    $region7: #{tpu_custom_call.1} parent=1 // pred_check_branch
      %24 = sbr.rel (0) target = $region9
    $region8: #{tpu_custom_call.1} parent=1 // pred_region
      %s26 = ssub.s32 49152, 49152
      %27 = vsyncadd [#allocation6], %s26
      %s28 = sshll.u32 [#allocation5], 4
      %s29 = int_to_ptr.vmem [resolvable:$true] %s28
      %34 = dma.hbm_to_vmem [thread:$0]  %s1, 49152, %s29, [#allocation6], 768, 768, 48
    $region9: #{tpu_custom_call.1} parent=1 // pred_fallthru
      _
    // Predicated region
    $region10: #{tpu_custom_call.1} parent=1 // pred_check
      _
    $region11: #{tpu_custom_call.1} parent=1 // pred_check_branch
      %36 = sbr.rel (0) target = $region13
    $region12: #{tpu_custom_call.1} parent=1 // pred_region
      %s38 = ssub.s32 192, 192
      %39 = vsyncadd [#allocation6], %s38
      %s41 = sshll.u32 [#allocation7], 4
      %s42 = int_to_ptr.vmem [resolvable:$true] %s41
      %44 = dma.hbm_to_vmem [thread:$0]  %s2, 192, %s42, [#allocation6]
    $region13: #{tpu_custom_call.1} parent=1 // pred_fallthru
      _
    // Predicated region
    $region14: #{tpu_custom_call.1} parent=1 // pred_check
      _
    $region15: #{tpu_custom_call.1} parent=1 // pred_check_branch
      %46 = sbr.rel (0) target = $region17
    $region16: #{tpu_custom_call.1} parent=1 // pred_region
      %47 = dma.done [#allocation3], 16384
    $region17: #{tpu_custom_call.1} parent=1 // pred_fallthru
      _
    // Predicated region
    $region18: #{tpu_custom_call.1} parent=1 // pred_check
      _
    $region19: #{tpu_custom_call.1} parent=1 // pred_check_branch
      %49 = sbr.rel (0) target = $region21
    $region20: #{tpu_custom_call.1} parent=1 // pred_region
      %50 = dma.done [#allocation6], 49152
    $region21: #{tpu_custom_call.1} parent=1 // pred_fallthru
      _
    // Predicated region
    $region22: #{tpu_custom_call.1} parent=1 // pred_check
      _
    $region23: #{tpu_custom_call.1} parent=1 // pred_check_branch
      %52 = sbr.rel (0) target = $region25
    $region24: #{tpu_custom_call.1} parent=1 // pred_region
      %53 = dma.done [#allocation6], 192
    $region25: #{tpu_custom_call.1} parent=1 // pred_fallthru
      _
    %v54 = vld [vmem:[#allocation2] sm:$0xff]
    %v55 = vld [vmem:[#allocation2 + $0x8] sm:$0xff]
    %v56 = vld [vmem:[#allocation2 + $0x10] sm:$0xff]
    %v57 = vld [vmem:[#allocation2 + $0x18] sm:$0xff]
    %v58 = vld [vmem:[#allocation2 + $0x20] sm:$0xff]
    %v59 = vld [vmem:[#allocation2 + $0x28] sm:$0xff]
    %v60 = vld [vmem:[#allocation2 + $0x30] sm:$0xff]
    %v61 = vld [vmem:[#allocation2 + $0x38] sm:$0xff]
    %v62 = vld [vmem:[#allocation2 + $0x40] sm:$0xff]
    %v63 = vld [vmem:[#allocation2 + $0x48] sm:$0xff]
    %v64 = vld [vmem:[#allocation2 + $0x50] sm:$0xff]
    %v65 = vld [vmem:[#allocation2 + $0x58] sm:$0xff]
    %v66 = vld [vmem:[#allocation2 + $0x60] sm:$0xff]
    %v67 = vld [vmem:[#allocation2 + $0x68] sm:$0xff]
    %v68 = vld [vmem:[#allocation2 + $0x70] sm:$0xff]
    %v69 = vld [vmem:[#allocation2 + $0x78] sm:$0xff]
    %v70 = vld [vmem:[#allocation2 + $0x80] sm:$0xff]
    %v71 = vld [vmem:[#allocation2 + $0x88] sm:$0xff]
    %v72 = vld [vmem:[#allocation2 + $0x90] sm:$0xff]
    %v73 = vld [vmem:[#allocation2 + $0x98] sm:$0xff]
    %v74 = vld [vmem:[#allocation2 + $0xa0] sm:$0xff]
    %v75 = vld [vmem:[#allocation2 + $0xa8] sm:$0xff]
    %v76 = vld [vmem:[#allocation2 + $0xb0] sm:$0xff]
    %v77 = vld [vmem:[#allocation2 + $0xb8] sm:$0xff]
    %v78 = vld [vmem:[#allocation2 + $0xc0] sm:$0xff]
    %v79 = vld [vmem:[#allocation2 + $0xc8] sm:$0xff]
    %v80 = vld [vmem:[#allocation2 + $0xd0] sm:$0xff]
    %v81 = vld [vmem:[#allocation2 + $0xd8] sm:$0xff]
    %v82 = vld [vmem:[#allocation2 + $0xe0] sm:$0xff]
    %v83 = vld [vmem:[#allocation2 + $0xe8] sm:$0xff]
    %v84 = vld [vmem:[#allocation2 + $0xf0] sm:$0xff]
    %v85 = vld [vmem:[#allocation2 + $0xf8] sm:$0xff]
    %v86 = vld [vmem:[#allocation2 + $0x100] sm:$0xff]
    %v87 = vld [vmem:[#allocation2 + $0x108] sm:$0xff]
    %v88 = vld [vmem:[#allocation2 + $0x110] sm:$0xff]
    %v89 = vld [vmem:[#allocation2 + $0x118] sm:$0xff]
    %v90 = vld [vmem:[#allocation2 + $0x120] sm:$0xff]
    %v91 = vld [vmem:[#allocation2 + $0x128] sm:$0xff]
    %v92 = vld [vmem:[#allocation2 + $0x130] sm:$0xff]
    %v93 = vld [vmem:[#allocation2 + $0x138] sm:$0xff]
    %v94 = vld [vmem:[#allocation2 + $0x140] sm:$0xff]
    %v95 = vld [vmem:[#allocation2 + $0x148] sm:$0xff]
    %v96 = vld [vmem:[#allocation2 + $0x150] sm:$0xff]
    %v97 = vld [vmem:[#allocation2 + $0x158] sm:$0xff]
    %v98 = vld [vmem:[#allocation2 + $0x160] sm:$0xff]
    %v99 = vld [vmem:[#allocation2 + $0x168] sm:$0xff]
    %v100 = vld [vmem:[#allocation2 + $0x170] sm:$0xff]
    %v101 = vld [vmem:[#allocation2 + $0x178] sm:$0xff]
    %v102 = vld [vmem:[#allocation2 + $0x180] sm:$0xff]
    %v103 = vld [vmem:[#allocation2 + $0x188] sm:$0xff]
    %v104 = vld [vmem:[#allocation2 + $0x190] sm:$0xff]
    %v105 = vld [vmem:[#allocation2 + $0x198] sm:$0xff]
    %v106 = vld [vmem:[#allocation2 + $0x1a0] sm:$0xff]
    %v107 = vld [vmem:[#allocation2 + $0x1a8] sm:$0xff]
    %v108 = vld [vmem:[#allocation2 + $0x1b0] sm:$0xff]
    %v109 = vld [vmem:[#allocation2 + $0x1b8] sm:$0xff]
    %v110 = vld [vmem:[#allocation2 + $0x1c0] sm:$0xff]
    %v111 = vld [vmem:[#allocation2 + $0x1c8] sm:$0xff]
    %v112 = vld [vmem:[#allocation2 + $0x1d0] sm:$0xff]
    %v113 = vld [vmem:[#allocation2 + $0x1d8] sm:$0xff]
    %v114 = vld [vmem:[#allocation2 + $0x1e0] sm:$0xff]
    %v115 = vld [vmem:[#allocation2 + $0x1e8] sm:$0xff]
    %v116 = vld [vmem:[#allocation2 + $0x1f0] sm:$0xff]
    %v117 = vld [vmem:[#allocation2 + $0x1f8] sm:$0xff]
    %v118 = vld [vmem:[#allocation2 + $0x200] sm:$0xff]
    %v119 = vld [vmem:[#allocation2 + $0x208] sm:$0xff]
    %v120 = vld [vmem:[#allocation2 + $0x210] sm:$0xff]
    %v121 = vld [vmem:[#allocation2 + $0x218] sm:$0xff]
    %v122 = vld [vmem:[#allocation2 + $0x220] sm:$0xff]
    %v123 = vld [vmem:[#allocation2 + $0x228] sm:$0xff]
    %v124 = vld [vmem:[#allocation2 + $0x230] sm:$0xff]
    %v125 = vld [vmem:[#allocation2 + $0x238] sm:$0xff]
    %v126 = vld [vmem:[#allocation2 + $0x240] sm:$0xff]
    %v127 = vld [vmem:[#allocation2 + $0x248] sm:$0xff]
    %v128 = vld [vmem:[#allocation2 + $0x250] sm:$0xff]
    %v129 = vld [vmem:[#allocation2 + $0x258] sm:$0xff]
    %v130 = vld [vmem:[#allocation2 + $0x260] sm:$0xff]
    %v131 = vld [vmem:[#allocation2 + $0x268] sm:$0xff]
    %v132 = vld [vmem:[#allocation2 + $0x270] sm:$0xff]
    %v133 = vld [vmem:[#allocation2 + $0x278] sm:$0xff]
    %v134 = vld [vmem:[#allocation2 + $0x280] sm:$0xff]
    %v135 = vld [vmem:[#allocation2 + $0x288] sm:$0xff]
    %v136 = vld [vmem:[#allocation2 + $0x290] sm:$0xff]
    %v137 = vld [vmem:[#allocation2 + $0x298] sm:$0xff]
    %v138 = vld [vmem:[#allocation2 + $0x2a0] sm:$0xff]
    %v139 = vld [vmem:[#allocation2 + $0x2a8] sm:$0xff]
    %v140 = vld [vmem:[#allocation2 + $0x2b0] sm:$0xff]
    %v141 = vld [vmem:[#allocation2 + $0x2b8] sm:$0xff]
    %v142 = vld [vmem:[#allocation2 + $0x2c0] sm:$0xff]
    %v143 = vld [vmem:[#allocation2 + $0x2c8] sm:$0xff]
    %v144 = vld [vmem:[#allocation2 + $0x2d0] sm:$0xff]
    %v145 = vld [vmem:[#allocation2 + $0x2d8] sm:$0xff]
    %v146 = vld [vmem:[#allocation2 + $0x2e0] sm:$0xff]
    %v147 = vld [vmem:[#allocation2 + $0x2e8] sm:$0xff]
    %v148 = vld [vmem:[#allocation2 + $0x2f0] sm:$0xff]
    %v149 = vld [vmem:[#allocation2 + $0x2f8] sm:$0xff]
    %v150 = vld [vmem:[#allocation2 + $0x300] sm:$0xff]
    %v151 = vld [vmem:[#allocation2 + $0x308] sm:$0xff]
    %v152 = vld [vmem:[#allocation2 + $0x310] sm:$0xff]
    %v153 = vld [vmem:[#allocation2 + $0x318] sm:$0xff]
    %v154 = vld [vmem:[#allocation2 + $0x320] sm:$0xff]
    %v155 = vld [vmem:[#allocation2 + $0x328] sm:$0xff]
    %v156 = vld [vmem:[#allocation2 + $0x330] sm:$0xff]
    %v157 = vld [vmem:[#allocation2 + $0x338] sm:$0xff]
    %v158 = vld [vmem:[#allocation2 + $0x340] sm:$0xff]
    %v159 = vld [vmem:[#allocation2 + $0x348] sm:$0xff]
    %v160 = vld [vmem:[#allocation2 + $0x350] sm:$0xff]
    %v161 = vld [vmem:[#allocation2 + $0x358] sm:$0xff]
    %v162 = vld [vmem:[#allocation2 + $0x360] sm:$0xff]
    %v163 = vld [vmem:[#allocation2 + $0x368] sm:$0xff]
    %v164 = vld [vmem:[#allocation2 + $0x370] sm:$0xff]
    %v165 = vld [vmem:[#allocation2 + $0x378] sm:$0xff]
    %v166 = vld [vmem:[#allocation2 + $0x380] sm:$0xff]
    %v167 = vld [vmem:[#allocation2 + $0x388] sm:$0xff]
    %v168 = vld [vmem:[#allocation2 + $0x390] sm:$0xff]
    %v169 = vld [vmem:[#allocation2 + $0x398] sm:$0xff]
    %v170 = vld [vmem:[#allocation2 + $0x3a0] sm:$0xff]
    %v171 = vld [vmem:[#allocation2 + $0x3a8] sm:$0xff]
    %v172 = vld [vmem:[#allocation2 + $0x3b0] sm:$0xff]
    %v173 = vld [vmem:[#allocation2 + $0x3b8] sm:$0xff]
    %v174 = vld [vmem:[#allocation2 + $0x3c0] sm:$0xff]
    %v175 = vld [vmem:[#allocation2 + $0x3c8] sm:$0xff]
    %v176 = vld [vmem:[#allocation2 + $0x3d0] sm:$0xff]
    %v177 = vld [vmem:[#allocation2 + $0x3d8] sm:$0xff]
    %v178 = vld [vmem:[#allocation2 + $0x3e0] sm:$0xff]
    %v179 = vld [vmem:[#allocation2 + $0x3e8] sm:$0xff]
    %v180 = vld [vmem:[#allocation2 + $0x3f0] sm:$0xff]
    %v181 = vld [vmem:[#allocation2 + $0x3f8] sm:$0xff]
    %v182 = vpack.c.bf16 %v58, %v54
    %v183 = vpack.c.bf16 %v59, %v55
    %v184 = vpack.c.bf16 %v60, %v56
    %v185 = vpack.c.bf16 %v61, %v57
    %v186 = vpack.c.bf16 %v66, %v62
    %v187 = vpack.c.bf16 %v67, %v63
    %v188 = vpack.c.bf16 %v68, %v64
    %v189 = vpack.c.bf16 %v69, %v65
    %v190 = vpack.c.bf16 %v74, %v70
    %v191 = vpack.c.bf16 %v75, %v71
    %v192 = vpack.c.bf16 %v76, %v72
    %v193 = vpack.c.bf16 %v77, %v73
    %v194 = vpack.c.bf16 %v82, %v78
    %v195 = vpack.c.bf16 %v83, %v79
    %v196 = vpack.c.bf16 %v84, %v80
    %v197 = vpack.c.bf16 %v85, %v81
    %v198 = vpack.c.bf16 %v90, %v86
    %v199 = vpack.c.bf16 %v91, %v87
    %v200 = vpack.c.bf16 %v92, %v88
    %v201 = vpack.c.bf16 %v93, %v89
    %v202 = vpack.c.bf16 %v98, %v94
    %v203 = vpack.c.bf16 %v99, %v95
    %v204 = vpack.c.bf16 %v100, %v96
    %v205 = vpack.c.bf16 %v101, %v97
    %v206 = vpack.c.bf16 %v106, %v102
    %v207 = vpack.c.bf16 %v107, %v103
    %v208 = vpack.c.bf16 %v108, %v104
    %v209 = vpack.c.bf16 %v109, %v105
    %v210 = vpack.c.bf16 %v114, %v110
    %v211 = vpack.c.bf16 %v115, %v111
    %v212 = vpack.c.bf16 %v116, %v112
    %v213 = vpack.c.bf16 %v117, %v113
    %v214 = vpack.c.bf16 %v122, %v118
    %v215 = vpack.c.bf16 %v123, %v119
    %v216 = vpack.c.bf16 %v124, %v120
    %v217 = vpack.c.bf16 %v125, %v121
    %v218 = vpack.c.bf16 %v130, %v126
    %v219 = vpack.c.bf16 %v131, %v127
    %v220 = vpack.c.bf16 %v132, %v128
    %v221 = vpack.c.bf16 %v133, %v129
    %v222 = vpack.c.bf16 %v138, %v134
    %v223 = vpack.c.bf16 %v139, %v135
    %v224 = vpack.c.bf16 %v140, %v136
    %v225 = vpack.c.bf16 %v141, %v137
    %v226 = vpack.c.bf16 %v146, %v142
    %v227 = vpack.c.bf16 %v147, %v143
    %v228 = vpack.c.bf16 %v148, %v144
    %v229 = vpack.c.bf16 %v149, %v145
    %v230 = vpack.c.bf16 %v154, %v150
    %v231 = vpack.c.bf16 %v155, %v151
    %v232 = vpack.c.bf16 %v156, %v152
    %v233 = vpack.c.bf16 %v157, %v153
    %v234 = vpack.c.bf16 %v162, %v158
    %v235 = vpack.c.bf16 %v163, %v159
    %v236 = vpack.c.bf16 %v164, %v160
    %v237 = vpack.c.bf16 %v165, %v161
    %v238 = vpack.c.bf16 %v170, %v166
    %v239 = vpack.c.bf16 %v171, %v167
    %v240 = vpack.c.bf16 %v172, %v168
    %v241 = vpack.c.bf16 %v173, %v169
    %v242 = vpack.c.bf16 %v178, %v174
    %v243 = vpack.c.bf16 %v179, %v175
    %v244 = vpack.c.bf16 %v180, %v176
    %v245 = vpack.c.bf16 %v181, %v177
    %v246 = vld [vmem:[#allocation5] sm:$0xff]
    %v247 = vld [vmem:[#allocation5 + $0x8] sm:$0xff]
    %v248 = vld [vmem:[#allocation5 + $0x10] sm:$0xff]
    %v249 = vld [vmem:[#allocation5 + $0x18] sm:$0xff]
    %v250 = vld [vmem:[#allocation5 + $0x20] sm:$0xff]
    %v251 = vld [vmem:[#allocation5 + $0x28] sm:$0xff]
    %v252 = vld [vmem:[#allocation5 + $0x30] sm:$0xff]
    %v253 = vld [vmem:[#allocation5 + $0x38] sm:$0xff]
    %v254 = vld [vmem:[#allocation5 + $0x40] sm:$0xff]
    %v255 = vld [vmem:[#allocation5 + $0x48] sm:$0xff]
    %v256 = vld [vmem:[#allocation5 + $0x50] sm:$0xff]
    %v257 = vld [vmem:[#allocation5 + $0x58] sm:$0xff]
    %v258 = vld [vmem:[#allocation5 + $0x60] sm:$0xff]
    %v259 = vld [vmem:[#allocation5 + $0x68] sm:$0xff]
    %v260 = vld [vmem:[#allocation5 + $0x70] sm:$0xff]
    %v261 = vld [vmem:[#allocation5 + $0x78] sm:$0xff]
    %v262 = vld [vmem:[#allocation5 + $0x80] sm:$0xff]
    %v263 = vld [vmem:[#allocation5 + $0x88] sm:$0xff]
    %v264 = vld [vmem:[#allocation5 + $0x90] sm:$0xff]
    %v265 = vld [vmem:[#allocation5 + $0x98] sm:$0xff]
    %v266 = vld [vmem:[#allocation5 + $0xa0] sm:$0xff]
    %v267 = vld [vmem:[#allocation5 + $0xa8] sm:$0xff]
    %v268 = vld [vmem:[#allocation5 + $0xb0] sm:$0xff]
    %v269 = vld [vmem:[#allocation5 + $0xb8] sm:$0xff]
    %v270 = vld [vmem:[#allocation5 + $0xc0] sm:$0xff]
    %v271 = vld [vmem:[#allocation5 + $0xc8] sm:$0xff]
    %v272 = vld [vmem:[#allocation5 + $0xd0] sm:$0xff]
    %v273 = vld [vmem:[#allocation5 + $0xd8] sm:$0xff]
    %v274 = vld [vmem:[#allocation5 + $0xe0] sm:$0xff]
    %v275 = vld [vmem:[#allocation5 + $0xe8] sm:$0xff]
    %v276 = vld [vmem:[#allocation5 + $0xf0] sm:$0xff]
    %v277 = vld [vmem:[#allocation5 + $0xf8] sm:$0xff]
    %v278 = vld [vmem:[#allocation5 + $0x100] sm:$0xff]
    %v279 = vld [vmem:[#allocation5 + $0x108] sm:$0xff]
    %v280 = vld [vmem:[#allocation5 + $0x110] sm:$0xff]
    %v281 = vld [vmem:[#allocation5 + $0x118] sm:$0xff]
    %v282 = vld [vmem:[#allocation5 + $0x120] sm:$0xff]
    %v283 = vld [vmem:[#allocation5 + $0x128] sm:$0xff]
    %v284 = vld [vmem:[#allocation5 + $0x130] sm:$0xff]
    %v285 = vld [vmem:[#allocation5 + $0x138] sm:$0xff]
    %v286 = vld [vmem:[#allocation5 + $0x140] sm:$0xff]
    %v287 = vld [vmem:[#allocation5 + $0x148] sm:$0xff]
    %v288 = vld [vmem:[#allocation5 + $0x150] sm:$0xff]
    %v289 = vld [vmem:[#allocation5 + $0x158] sm:$0xff]
    %v290 = vld [vmem:[#allocation5 + $0x160] sm:$0xff]
    %v291 = vld [vmem:[#allocation5 + $0x168] sm:$0xff]
    %v292 = vld [vmem:[#allocation5 + $0x170] sm:$0xff]
    %v293 = vld [vmem:[#allocation5 + $0x178] sm:$0xff]
    %v294 = vld [vmem:[#allocation5 + $0x180] sm:$0xff]
    %v295 = vld [vmem:[#allocation5 + $0x188] sm:$0xff]
    %v296 = vld [vmem:[#allocation5 + $0x190] sm:$0xff]
    %v297 = vld [vmem:[#allocation5 + $0x198] sm:$0xff]
    %v298 = vld [vmem:[#allocation5 + $0x1a0] sm:$0xff]
    %v299 = vld [vmem:[#allocation5 + $0x1a8] sm:$0xff]
    %v300 = vld [vmem:[#allocation5 + $0x1b0] sm:$0xff]
    %v301 = vld [vmem:[#allocation5 + $0x1b8] sm:$0xff]
    %v302 = vld [vmem:[#allocation5 + $0x1c0] sm:$0xff]
    %v303 = vld [vmem:[#allocation5 + $0x1c8] sm:$0xff]
    %v304 = vld [vmem:[#allocation5 + $0x1d0] sm:$0xff]
    %v305 = vld [vmem:[#allocation5 + $0x1d8] sm:$0xff]
    %v306 = vld [vmem:[#allocation5 + $0x1e0] sm:$0xff]
    %v307 = vld [vmem:[#allocation5 + $0x1e8] sm:$0xff]
    %v308 = vld [vmem:[#allocation5 + $0x1f0] sm:$0xff]
    %v309 = vld [vmem:[#allocation5 + $0x1f8] sm:$0xff]
    %v310 = vld [vmem:[#allocation5 + $0x200] sm:$0xff]
    %v311 = vld [vmem:[#allocation5 + $0x208] sm:$0xff]
    %v312 = vld [vmem:[#allocation5 + $0x210] sm:$0xff]
    %v313 = vld [vmem:[#allocation5 + $0x218] sm:$0xff]
    %v314 = vld [vmem:[#allocation5 + $0x220] sm:$0xff]
    %v315 = vld [vmem:[#allocation5 + $0x228] sm:$0xff]
    %v316 = vld [vmem:[#allocation5 + $0x230] sm:$0xff]
    %v317 = vld [vmem:[#allocation5 + $0x238] sm:$0xff]
    %v318 = vld [vmem:[#allocation5 + $0x240] sm:$0xff]
    %v319 = vld [vmem:[#allocation5 + $0x248] sm:$0xff]
    %v320 = vld [vmem:[#allocation5 + $0x250] sm:$0xff]
    %v321 = vld [vmem:[#allocation5 + $0x258] sm:$0xff]
    %v322 = vld [vmem:[#allocation5 + $0x260] sm:$0xff]
    %v323 = vld [vmem:[#allocation5 + $0x268] sm:$0xff]
    %v324 = vld [vmem:[#allocation5 + $0x270] sm:$0xff]
    %v325 = vld [vmem:[#allocation5 + $0x278] sm:$0xff]
    %v326 = vld [vmem:[#allocation5 + $0x280] sm:$0xff]
    %v327 = vld [vmem:[#allocation5 + $0x288] sm:$0xff]
    %v328 = vld [vmem:[#allocation5 + $0x290] sm:$0xff]
    %v329 = vld [vmem:[#allocation5 + $0x298] sm:$0xff]
    %v330 = vld [vmem:[#allocation5 + $0x2a0] sm:$0xff]
    %v331 = vld [vmem:[#allocation5 + $0x2a8] sm:$0xff]
    %v332 = vld [vmem:[#allocation5 + $0x2b0] sm:$0xff]
    %v333 = vld [vmem:[#allocation5 + $0x2b8] sm:$0xff]
    %v334 = vld [vmem:[#allocation5 + $0x2c0] sm:$0xff]
    %v335 = vld [vmem:[#allocation5 + $0x2c8] sm:$0xff]
    %v336 = vld [vmem:[#allocation5 + $0x2d0] sm:$0xff]
    %v337 = vld [vmem:[#allocation5 + $0x2d8] sm:$0xff]
    %v338 = vld [vmem:[#allocation5 + $0x2e0] sm:$0xff]
    %v339 = vld [vmem:[#allocation5 + $0x2e8] sm:$0xff]
    %v340 = vld [vmem:[#allocation5 + $0x2f0] sm:$0xff]
    %v341 = vld [vmem:[#allocation5 + $0x2f8] sm:$0xff]
    %v342 = vld [vmem:[#allocation5 + $0x300] sm:$0xff]
    %v343 = vld [vmem:[#allocation5 + $0x308] sm:$0xff]
    %v344 = vld [vmem:[#allocation5 + $0x310] sm:$0xff]
    %v345 = vld [vmem:[#allocation5 + $0x318] sm:$0xff]
    %v346 = vld [vmem:[#allocation5 + $0x320] sm:$0xff]
    %v347 = vld [vmem:[#allocation5 + $0x328] sm:$0xff]
    %v348 = vld [vmem:[#allocation5 + $0x330] sm:$0xff]
    %v349 = vld [vmem:[#allocation5 + $0x338] sm:$0xff]
    %v350 = vld [vmem:[#allocation5 + $0x340] sm:$0xff]
    %v351 = vld [vmem:[#allocation5 + $0x348] sm:$0xff]
    %v352 = vld [vmem:[#allocation5 + $0x350] sm:$0xff]
    %v353 = vld [vmem:[#allocation5 + $0x358] sm:$0xff]
    %v354 = vld [vmem:[#allocation5 + $0x360] sm:$0xff]
    %v355 = vld [vmem:[#allocation5 + $0x368] sm:$0xff]
    %v356 = vld [vmem:[#allocation5 + $0x370] sm:$0xff]
    %v357 = vld [vmem:[#allocation5 + $0x378] sm:$0xff]
    %v358 = vld [vmem:[#allocation5 + $0x380] sm:$0xff]
    %v359 = vld [vmem:[#allocation5 + $0x388] sm:$0xff]
    %v360 = vld [vmem:[#allocation5 + $0x390] sm:$0xff]
    %v361 = vld [vmem:[#allocation5 + $0x398] sm:$0xff]
    %v362 = vld [vmem:[#allocation5 + $0x3a0] sm:$0xff]
    %v363 = vld [vmem:[#allocation5 + $0x3a8] sm:$0xff]
    %v364 = vld [vmem:[#allocation5 + $0x3b0] sm:$0xff]
    %v365 = vld [vmem:[#allocation5 + $0x3b8] sm:$0xff]
    %v366 = vld [vmem:[#allocation5 + $0x3c0] sm:$0xff]
    %v367 = vld [vmem:[#allocation5 + $0x3c8] sm:$0xff]
    %v368 = vld [vmem:[#allocation5 + $0x3d0] sm:$0xff]
    %v369 = vld [vmem:[#allocation5 + $0x3d8] sm:$0xff]
    %v370 = vld [vmem:[#allocation5 + $0x3e0] sm:$0xff]
    %v371 = vld [vmem:[#allocation5 + $0x3e8] sm:$0xff]
    %v372 = vld [vmem:[#allocation5 + $0x3f0] sm:$0xff]
    %v373 = vld [vmem:[#allocation5 + $0x3f8] sm:$0xff]
    %v374 = vld [vmem:[#allocation5 + $0x400] sm:$0xff]
    %v375 = vld [vmem:[#allocation5 + $0x408] sm:$0xff]
    %v376 = vld [vmem:[#allocation5 + $0x410] sm:$0xff]
    %v377 = vld [vmem:[#allocation5 + $0x418] sm:$0xff]
    %v378 = vld [vmem:[#allocation5 + $0x420] sm:$0xff]
    %v379 = vld [vmem:[#allocation5 + $0x428] sm:$0xff]
    %v380 = vld [vmem:[#allocation5 + $0x430] sm:$0xff]
    %v381 = vld [vmem:[#allocation5 + $0x438] sm:$0xff]
    %v382 = vld [vmem:[#allocation5 + $0x440] sm:$0xff]
    %v383 = vld [vmem:[#allocation5 + $0x448] sm:$0xff]
    %v384 = vld [vmem:[#allocation5 + $0x450] sm:$0xff]
    %v385 = vld [vmem:[#allocation5 + $0x458] sm:$0xff]
    %v386 = vld [vmem:[#allocation5 + $0x460] sm:$0xff]
    %v387 = vld [vmem:[#allocation5 + $0x468] sm:$0xff]
    %v388 = vld [vmem:[#allocation5 + $0x470] sm:$0xff]
    %v389 = vld [vmem:[#allocation5 + $0x478] sm:$0xff]
    %v390 = vld [vmem:[#allocation5 + $0x480] sm:$0xff]
    %v391 = vld [vmem:[#allocation5 + $0x488] sm:$0xff]
    %v392 = vld [vmem:[#allocation5 + $0x490] sm:$0xff]
    %v393 = vld [vmem:[#allocation5 + $0x498] sm:$0xff]
    %v394 = vld [vmem:[#allocation5 + $0x4a0] sm:$0xff]
    %v395 = vld [vmem:[#allocation5 + $0x4a8] sm:$0xff]
    %v396 = vld [vmem:[#allocation5 + $0x4b0] sm:$0xff]
    %v397 = vld [vmem:[#allocation5 + $0x4b8] sm:$0xff]
    %v398 = vld [vmem:[#allocation5 + $0x4c0] sm:$0xff]
    %v399 = vld [vmem:[#allocation5 + $0x4c8] sm:$0xff]
    %v400 = vld [vmem:[#allocation5 + $0x4d0] sm:$0xff]
    %v401 = vld [vmem:[#allocation5 + $0x4d8] sm:$0xff]
    %v402 = vld [vmem:[#allocation5 + $0x4e0] sm:$0xff]
    %v403 = vld [vmem:[#allocation5 + $0x4e8] sm:$0xff]
    %v404 = vld [vmem:[#allocation5 + $0x4f0] sm:$0xff]
    %v405 = vld [vmem:[#allocation5 + $0x4f8] sm:$0xff]
    %v406 = vld [vmem:[#allocation5 + $0x500] sm:$0xff]
    %v407 = vld [vmem:[#allocation5 + $0x508] sm:$0xff]
    %v408 = vld [vmem:[#allocation5 + $0x510] sm:$0xff]
    %v409 = vld [vmem:[#allocation5 + $0x518] sm:$0xff]
    %v410 = vld [vmem:[#allocation5 + $0x520] sm:$0xff]
    %v411 = vld [vmem:[#allocation5 + $0x528] sm:$0xff]
    %v412 = vld [vmem:[#allocation5 + $0x530] sm:$0xff]
    %v413 = vld [vmem:[#allocation5 + $0x538] sm:$0xff]
    %v414 = vld [vmem:[#allocation5 + $0x540] sm:$0xff]
    %v415 = vld [vmem:[#allocation5 + $0x548] sm:$0xff]
    %v416 = vld [vmem:[#allocation5 + $0x550] sm:$0xff]
    %v417 = vld [vmem:[#allocation5 + $0x558] sm:$0xff]
    %v418 = vld [vmem:[#allocation5 + $0x560] sm:$0xff]
    %v419 = vld [vmem:[#allocation5 + $0x568] sm:$0xff]
    %v420 = vld [vmem:[#allocation5 + $0x570] sm:$0xff]
    %v421 = vld [vmem:[#allocation5 + $0x578] sm:$0xff]
    %v422 = vld [vmem:[#allocation5 + $0x580] sm:$0xff]
    %v423 = vld [vmem:[#allocation5 + $0x588] sm:$0xff]
    %v424 = vld [vmem:[#allocation5 + $0x590] sm:$0xff]
    %v425 = vld [vmem:[#allocation5 + $0x598] sm:$0xff]
    %v426 = vld [vmem:[#allocation5 + $0x5a0] sm:$0xff]
    %v427 = vld [vmem:[#allocation5 + $0x5a8] sm:$0xff]
    %v428 = vld [vmem:[#allocation5 + $0x5b0] sm:$0xff]
    %v429 = vld [vmem:[#allocation5 + $0x5b8] sm:$0xff]
    %v430 = vld [vmem:[#allocation5 + $0x5c0] sm:$0xff]
    %v431 = vld [vmem:[#allocation5 + $0x5c8] sm:$0xff]
    %v432 = vld [vmem:[#allocation5 + $0x5d0] sm:$0xff]
    %v433 = vld [vmem:[#allocation5 + $0x5d8] sm:$0xff]
    %v434 = vld [vmem:[#allocation5 + $0x5e0] sm:$0xff]
    %v435 = vld [vmem:[#allocation5 + $0x5e8] sm:$0xff]
    %v436 = vld [vmem:[#allocation5 + $0x5f0] sm:$0xff]
    %v437 = vld [vmem:[#allocation5 + $0x5f8] sm:$0xff]
    %v438 = vld [vmem:[#allocation5 + $0x600] sm:$0xff]
    %v439 = vld [vmem:[#allocation5 + $0x608] sm:$0xff]
    %v440 = vld [vmem:[#allocation5 + $0x610] sm:$0xff]
    %v441 = vld [vmem:[#allocation5 + $0x618] sm:$0xff]
    %v442 = vld [vmem:[#allocation5 + $0x620] sm:$0xff]
    %v443 = vld [vmem:[#allocation5 + $0x628] sm:$0xff]
    %v444 = vld [vmem:[#allocation5 + $0x630] sm:$0xff]
    %v445 = vld [vmem:[#allocation5 + $0x638] sm:$0xff]
    %v446 = vld [vmem:[#allocation5 + $0x640] sm:$0xff]
    %v447 = vld [vmem:[#allocation5 + $0x648] sm:$0xff]
    %v448 = vld [vmem:[#allocation5 + $0x650] sm:$0xff]
    %v449 = vld [vmem:[#allocation5 + $0x658] sm:$0xff]
    %v450 = vld [vmem:[#allocation5 + $0x660] sm:$0xff]
    %v451 = vld [vmem:[#allocation5 + $0x668] sm:$0xff]
    %v452 = vld [vmem:[#allocation5 + $0x670] sm:$0xff]
    %v453 = vld [vmem:[#allocation5 + $0x678] sm:$0xff]
    %v454 = vld [vmem:[#allocation5 + $0x680] sm:$0xff]
    %v455 = vld [vmem:[#allocation5 + $0x688] sm:$0xff]
    %v456 = vld [vmem:[#allocation5 + $0x690] sm:$0xff]
    %v457 = vld [vmem:[#allocation5 + $0x698] sm:$0xff]
    %v458 = vld [vmem:[#allocation5 + $0x6a0] sm:$0xff]
    %v459 = vld [vmem:[#allocation5 + $0x6a8] sm:$0xff]
    %v460 = vld [vmem:[#allocation5 + $0x6b0] sm:$0xff]
    %v461 = vld [vmem:[#allocation5 + $0x6b8] sm:$0xff]
    %v462 = vld [vmem:[#allocation5 + $0x6c0] sm:$0xff]
    %v463 = vld [vmem:[#allocation5 + $0x6c8] sm:$0xff]
    %v464 = vld [vmem:[#allocation5 + $0x6d0] sm:$0xff]
    %v465 = vld [vmem:[#allocation5 + $0x6d8] sm:$0xff]
    %v466 = vld [vmem:[#allocation5 + $0x6e0] sm:$0xff]
    %v467 = vld [vmem:[#allocation5 + $0x6e8] sm:$0xff]
    %v468 = vld [vmem:[#allocation5 + $0x6f0] sm:$0xff]
    %v469 = vld [vmem:[#allocation5 + $0x6f8] sm:$0xff]
    %v470 = vld [vmem:[#allocation5 + $0x700] sm:$0xff]
    %v471 = vld [vmem:[#allocation5 + $0x708] sm:$0xff]
    %v472 = vld [vmem:[#allocation5 + $0x710] sm:$0xff]
    %v473 = vld [vmem:[#allocation5 + $0x718] sm:$0xff]
    %v474 = vld [vmem:[#allocation5 + $0x720] sm:$0xff]
    %v475 = vld [vmem:[#allocation5 + $0x728] sm:$0xff]
    %v476 = vld [vmem:[#allocation5 + $0x730] sm:$0xff]
    %v477 = vld [vmem:[#allocation5 + $0x738] sm:$0xff]
    %v478 = vld [vmem:[#allocation5 + $0x740] sm:$0xff]
    %v479 = vld [vmem:[#allocation5 + $0x748] sm:$0xff]
    %v480 = vld [vmem:[#allocation5 + $0x750] sm:$0xff]
    %v481 = vld [vmem:[#allocation5 + $0x758] sm:$0xff]
    %v482 = vld [vmem:[#allocation5 + $0x760] sm:$0xff]
    %v483 = vld [vmem:[#allocation5 + $0x768] sm:$0xff]
    %v484 = vld [vmem:[#allocation5 + $0x770] sm:$0xff]
    %v485 = vld [vmem:[#allocation5 + $0x778] sm:$0xff]
    %v486 = vld [vmem:[#allocation5 + $0x780] sm:$0xff]
    %v487 = vld [vmem:[#allocation5 + $0x788] sm:$0xff]
    %v488 = vld [vmem:[#allocation5 + $0x790] sm:$0xff]
    %v489 = vld [vmem:[#allocation5 + $0x798] sm:$0xff]
    %v490 = vld [vmem:[#allocation5 + $0x7a0] sm:$0xff]
    %v491 = vld [vmem:[#allocation5 + $0x7a8] sm:$0xff]
    %v492 = vld [vmem:[#allocation5 + $0x7b0] sm:$0xff]
    %v493 = vld [vmem:[#allocation5 + $0x7b8] sm:$0xff]
    %v494 = vld [vmem:[#allocation5 + $0x7c0] sm:$0xff]
    %v495 = vld [vmem:[#allocation5 + $0x7c8] sm:$0xff]
    %v496 = vld [vmem:[#allocation5 + $0x7d0] sm:$0xff]
    %v497 = vld [vmem:[#allocation5 + $0x7d8] sm:$0xff]
    %v498 = vld [vmem:[#allocation5 + $0x7e0] sm:$0xff]
    %v499 = vld [vmem:[#allocation5 + $0x7e8] sm:$0xff]
    %v500 = vld [vmem:[#allocation5 + $0x7f0] sm:$0xff]
    %v501 = vld [vmem:[#allocation5 + $0x7f8] sm:$0xff]
    %v502 = vld [vmem:[#allocation5 + $0x800] sm:$0xff]
    %v503 = vld [vmem:[#allocation5 + $0x808] sm:$0xff]
    %v504 = vld [vmem:[#allocation5 + $0x810] sm:$0xff]
    %v505 = vld [vmem:[#allocation5 + $0x818] sm:$0xff]
    %v506 = vld [vmem:[#allocation5 + $0x820] sm:$0xff]
    %v507 = vld [vmem:[#allocation5 + $0x828] sm:$0xff]
    %v508 = vld [vmem:[#allocation5 + $0x830] sm:$0xff]
    %v509 = vld [vmem:[#allocation5 + $0x838] sm:$0xff]
    %v510 = vld [vmem:[#allocation5 + $0x840] sm:$0xff]
    %v511 = vld [vmem:[#allocation5 + $0x848] sm:$0xff]
    %v512 = vld [vmem:[#allocation5 + $0x850] sm:$0xff]
    %v513 = vld [vmem:[#allocation5 + $0x858] sm:$0xff]
    %v514 = vld [vmem:[#allocation5 + $0x860] sm:$0xff]
    %v515 = vld [vmem:[#allocation5 + $0x868] sm:$0xff]
    %v516 = vld [vmem:[#allocation5 + $0x870] sm:$0xff]
    %v517 = vld [vmem:[#allocation5 + $0x878] sm:$0xff]
    %v518 = vld [vmem:[#allocation5 + $0x880] sm:$0xff]
    %v519 = vld [vmem:[#allocation5 + $0x888] sm:$0xff]
    %v520 = vld [vmem:[#allocation5 + $0x890] sm:$0xff]
    %v521 = vld [vmem:[#allocation5 + $0x898] sm:$0xff]
    %v522 = vld [vmem:[#allocation5 + $0x8a0] sm:$0xff]
    %v523 = vld [vmem:[#allocation5 + $0x8a8] sm:$0xff]
    %v524 = vld [vmem:[#allocation5 + $0x8b0] sm:$0xff]
    %v525 = vld [vmem:[#allocation5 + $0x8b8] sm:$0xff]
    %v526 = vld [vmem:[#allocation5 + $0x8c0] sm:$0xff]
    %v527 = vld [vmem:[#allocation5 + $0x8c8] sm:$0xff]
    %v528 = vld [vmem:[#allocation5 + $0x8d0] sm:$0xff]
    %v529 = vld [vmem:[#allocation5 + $0x8d8] sm:$0xff]
    %v530 = vld [vmem:[#allocation5 + $0x8e0] sm:$0xff]
    %v531 = vld [vmem:[#allocation5 + $0x8e8] sm:$0xff]
    %v532 = vld [vmem:[#allocation5 + $0x8f0] sm:$0xff]
    %v533 = vld [vmem:[#allocation5 + $0x8f8] sm:$0xff]
    %v534 = vld [vmem:[#allocation5 + $0x900] sm:$0xff]
    %v535 = vld [vmem:[#allocation5 + $0x908] sm:$0xff]
    %v536 = vld [vmem:[#allocation5 + $0x910] sm:$0xff]
    %v537 = vld [vmem:[#allocation5 + $0x918] sm:$0xff]
    %v538 = vld [vmem:[#allocation5 + $0x920] sm:$0xff]
    %v539 = vld [vmem:[#allocation5 + $0x928] sm:$0xff]
    %v540 = vld [vmem:[#allocation5 + $0x930] sm:$0xff]
    %v541 = vld [vmem:[#allocation5 + $0x938] sm:$0xff]
    %v542 = vld [vmem:[#allocation5 + $0x940] sm:$0xff]
    %v543 = vld [vmem:[#allocation5 + $0x948] sm:$0xff]
    %v544 = vld [vmem:[#allocation5 + $0x950] sm:$0xff]
    %v545 = vld [vmem:[#allocation5 + $0x958] sm:$0xff]
    %v546 = vld [vmem:[#allocation5 + $0x960] sm:$0xff]
    %v547 = vld [vmem:[#allocation5 + $0x968] sm:$0xff]
    %v548 = vld [vmem:[#allocation5 + $0x970] sm:$0xff]
    %v549 = vld [vmem:[#allocation5 + $0x978] sm:$0xff]
    %v550 = vld [vmem:[#allocation5 + $0x980] sm:$0xff]
    %v551 = vld [vmem:[#allocation5 + $0x988] sm:$0xff]
    %v552 = vld [vmem:[#allocation5 + $0x990] sm:$0xff]
    %v553 = vld [vmem:[#allocation5 + $0x998] sm:$0xff]
    %v554 = vld [vmem:[#allocation5 + $0x9a0] sm:$0xff]
    %v555 = vld [vmem:[#allocation5 + $0x9a8] sm:$0xff]
    %v556 = vld [vmem:[#allocation5 + $0x9b0] sm:$0xff]
    %v557 = vld [vmem:[#allocation5 + $0x9b8] sm:$0xff]
    %v558 = vld [vmem:[#allocation5 + $0x9c0] sm:$0xff]
    %v559 = vld [vmem:[#allocation5 + $0x9c8] sm:$0xff]
    %v560 = vld [vmem:[#allocation5 + $0x9d0] sm:$0xff]
    %v561 = vld [vmem:[#allocation5 + $0x9d8] sm:$0xff]
    %v562 = vld [vmem:[#allocation5 + $0x9e0] sm:$0xff]
    %v563 = vld [vmem:[#allocation5 + $0x9e8] sm:$0xff]
    %v564 = vld [vmem:[#allocation5 + $0x9f0] sm:$0xff]
    %v565 = vld [vmem:[#allocation5 + $0x9f8] sm:$0xff]
    %v566 = vld [vmem:[#allocation5 + $0xa00] sm:$0xff]
    %v567 = vld [vmem:[#allocation5 + $0xa08] sm:$0xff]
    %v568 = vld [vmem:[#allocation5 + $0xa10] sm:$0xff]
    %v569 = vld [vmem:[#allocation5 + $0xa18] sm:$0xff]
    %v570 = vld [vmem:[#allocation5 + $0xa20] sm:$0xff]
    %v571 = vld [vmem:[#allocation5 + $0xa28] sm:$0xff]
    %v572 = vld [vmem:[#allocation5 + $0xa30] sm:$0xff]
    %v573 = vld [vmem:[#allocation5 + $0xa38] sm:$0xff]
    %v574 = vld [vmem:[#allocation5 + $0xa40] sm:$0xff]
    %v575 = vld [vmem:[#allocation5 + $0xa48] sm:$0xff]
    %v576 = vld [vmem:[#allocation5 + $0xa50] sm:$0xff]
    %v577 = vld [vmem:[#allocation5 + $0xa58] sm:$0xff]
    %v578 = vld [vmem:[#allocation5 + $0xa60] sm:$0xff]
    %v579 = vld [vmem:[#allocation5 + $0xa68] sm:$0xff]
    %v580 = vld [vmem:[#allocation5 + $0xa70] sm:$0xff]
    %v581 = vld [vmem:[#allocation5 + $0xa78] sm:$0xff]
    %v582 = vld [vmem:[#allocation5 + $0xa80] sm:$0xff]
    %v583 = vld [vmem:[#allocation5 + $0xa88] sm:$0xff]
    %v584 = vld [vmem:[#allocation5 + $0xa90] sm:$0xff]
    %v585 = vld [vmem:[#allocation5 + $0xa98] sm:$0xff]
    %v586 = vld [vmem:[#allocation5 + $0xaa0] sm:$0xff]
    %v587 = vld [vmem:[#allocation5 + $0xaa8] sm:$0xff]
    %v588 = vld [vmem:[#allocation5 + $0xab0] sm:$0xff]
    %v589 = vld [vmem:[#allocation5 + $0xab8] sm:$0xff]
    %v590 = vld [vmem:[#allocation5 + $0xac0] sm:$0xff]
    %v591 = vld [vmem:[#allocation5 + $0xac8] sm:$0xff]
    %v592 = vld [vmem:[#allocation5 + $0xad0] sm:$0xff]
    %v593 = vld [vmem:[#allocation5 + $0xad8] sm:$0xff]
    %v594 = vld [vmem:[#allocation5 + $0xae0] sm:$0xff]
    %v595 = vld [vmem:[#allocation5 + $0xae8] sm:$0xff]
    %v596 = vld [vmem:[#allocation5 + $0xaf0] sm:$0xff]
    %v597 = vld [vmem:[#allocation5 + $0xaf8] sm:$0xff]
    %v598 = vld [vmem:[#allocation5 + $0xb00] sm:$0xff]
    %v599 = vld [vmem:[#allocation5 + $0xb08] sm:$0xff]
    %v600 = vld [vmem:[#allocation5 + $0xb10] sm:$0xff]
    %v601 = vld [vmem:[#allocation5 + $0xb18] sm:$0xff]
    %v602 = vld [vmem:[#allocation5 + $0xb20] sm:$0xff]
    %v603 = vld [vmem:[#allocation5 + $0xb28] sm:$0xff]
    %v604 = vld [vmem:[#allocation5 + $0xb30] sm:$0xff]
    %v605 = vld [vmem:[#allocation5 + $0xb38] sm:$0xff]
    %v606 = vld [vmem:[#allocation5 + $0xb40] sm:$0xff]
    %v607 = vld [vmem:[#allocation5 + $0xb48] sm:$0xff]
    %v608 = vld [vmem:[#allocation5 + $0xb50] sm:$0xff]
    %v609 = vld [vmem:[#allocation5 + $0xb58] sm:$0xff]
    %v610 = vld [vmem:[#allocation5 + $0xb60] sm:$0xff]
    %v611 = vld [vmem:[#allocation5 + $0xb68] sm:$0xff]
    %v612 = vld [vmem:[#allocation5 + $0xb70] sm:$0xff]
    %v613 = vld [vmem:[#allocation5 + $0xb78] sm:$0xff]
    %v614 = vld [vmem:[#allocation5 + $0xb80] sm:$0xff]
    %v615 = vld [vmem:[#allocation5 + $0xb88] sm:$0xff]
    %v616 = vld [vmem:[#allocation5 + $0xb90] sm:$0xff]
    %v617 = vld [vmem:[#allocation5 + $0xb98] sm:$0xff]
    %v618 = vld [vmem:[#allocation5 + $0xba0] sm:$0xff]
    %v619 = vld [vmem:[#allocation5 + $0xba8] sm:$0xff]
    %v620 = vld [vmem:[#allocation5 + $0xbb0] sm:$0xff]
    %v621 = vld [vmem:[#allocation5 + $0xbb8] sm:$0xff]
    %v622 = vld [vmem:[#allocation5 + $0xbc0] sm:$0xff]
    %v623 = vld [vmem:[#allocation5 + $0xbc8] sm:$0xff]
    %v624 = vld [vmem:[#allocation5 + $0xbd0] sm:$0xff]
    %v625 = vld [vmem:[#allocation5 + $0xbd8] sm:$0xff]
    %v626 = vld [vmem:[#allocation5 + $0xbe0] sm:$0xff]
    %v627 = vld [vmem:[#allocation5 + $0xbe8] sm:$0xff]
    %v628 = vld [vmem:[#allocation5 + $0xbf0] sm:$0xff]
    %v629 = vld [vmem:[#allocation5 + $0xbf8] sm:$0xff]
    %v630 = vld [vmem:[#allocation7] sm:$0xff]
    %v631 = vld [vmem:[#allocation7 + $0x8] sm:$0xf]
    %v634 = vlaneseq
    %v635 = vshrl.u32 %v634, 7
    %v636 = vsub.s32 0, %v635
    %v637 = vrot.slane %v630, %v636
    %v638 = vlaneseq
    %v639 = vshrl.u32 %v638, 7
    %v640 = vsub.s32 1, %v639
    %v641 = vrot.slane %v630, %v640
    %v642 = vlaneseq
    %v643 = vshrl.u32 %v642, 7
    %v644 = vsub.s32 2, %v643
    %v645 = vrot.slane %v630, %v644
    %v646 = vlaneseq
    %v647 = vshrl.u32 %v646, 7
    %v648 = vsub.s32 3, %v647
    %v649 = vrot.slane %v630, %v648
    %v650 = vlaneseq
    %v651 = vshrl.u32 %v650, 7
    %v652 = vsub.s32 4, %v651
    %v653 = vrot.slane %v630, %v652
    %v654 = vlaneseq
    %v655 = vshrl.u32 %v654, 7
    %v656 = vsub.s32 5, %v655
    %v657 = vrot.slane %v630, %v656
    %v658 = vlaneseq
    %v659 = vshrl.u32 %v658, 7
    %v660 = vsub.s32 6, %v659
    %v661 = vrot.slane %v630, %v660
    %v662 = vlaneseq
    %v663 = vshrl.u32 %v662, 7
    %v664 = vsub.s32 7, %v663
    %v665 = vrot.slane %v630, %v664
    %v666 = vlaneseq
    %v667 = vshrl.u32 %v666, 7
    %v668 = vsub.s32 0, %v667
    %v669 = vrot.slane %v631, %v668
    %v670 = vlaneseq
    %v671 = vshrl.u32 %v670, 7
    %v672 = vsub.s32 1, %v671
    %v673 = vrot.slane %v631, %v672
    %v674 = vlaneseq
    %v675 = vshrl.u32 %v674, 7
    %v676 = vsub.s32 2, %v675
    %v677 = vrot.slane %v631, %v676
    %v678 = vlaneseq
    %v679 = vshrl.u32 %v678, 7
    %v680 = vsub.s32 3, %v679
    %v681 = vrot.slane %v631, %v680
    %v1078 = vunpack.c.l.b16 %v246
    %v1079 = vunpack.c.h.b16 %v246
    %v1080 = vunpack.c.l.b16 %v247
    %v1081 = vunpack.c.h.b16 %v247
    %v1082 = vunpack.c.l.b16 %v248
    %v1083 = vunpack.c.h.b16 %v248
    %v1084 = vunpack.c.l.b16 %v249
    %v1085 = vunpack.c.h.b16 %v249
    %v1086 = vunpack.c.l.b16 %v250
    %v1087 = vunpack.c.h.b16 %v250
    %v1088 = vunpack.c.l.b16 %v251
    %v1089 = vunpack.c.h.b16 %v251
    %v1090 = vunpack.c.l.b16 %v252
    %v1091 = vunpack.c.h.b16 %v252
    %v1092 = vunpack.c.l.b16 %v253
    %v1093 = vunpack.c.h.b16 %v253
    %v1094 = vunpack.c.l.b16 %v254
    %v1095 = vunpack.c.h.b16 %v254
    %v1096 = vunpack.c.l.b16 %v255
    %v1097 = vunpack.c.h.b16 %v255
    %v1098 = vunpack.c.l.b16 %v256
    %v1099 = vunpack.c.h.b16 %v256
    %v1100 = vunpack.c.l.b16 %v257
    %v1101 = vunpack.c.h.b16 %v257
    %v1102 = vunpack.c.l.b16 %v258
    %v1103 = vunpack.c.h.b16 %v258
    %v1104 = vunpack.c.l.b16 %v259
    %v1105 = vunpack.c.h.b16 %v259
    %v1106 = vunpack.c.l.b16 %v260
    %v1107 = vunpack.c.h.b16 %v260
    %v1108 = vunpack.c.l.b16 %v261
    %v1109 = vunpack.c.h.b16 %v261
    %v1110 = vunpack.c.l.b16 %v262
    %v1111 = vunpack.c.h.b16 %v262
    %v1112 = vunpack.c.l.b16 %v263
    %v1113 = vunpack.c.h.b16 %v263
    %v1114 = vunpack.c.l.b16 %v264
    %v1115 = vunpack.c.h.b16 %v264
    %v1116 = vunpack.c.l.b16 %v265
    %v1117 = vunpack.c.h.b16 %v265
    %v1118 = vunpack.c.l.b16 %v266
    %v1119 = vunpack.c.h.b16 %v266
    %v1120 = vunpack.c.l.b16 %v267
    %v1121 = vunpack.c.h.b16 %v267
    %v1122 = vunpack.c.l.b16 %v268
    %v1123 = vunpack.c.h.b16 %v268
    %v1124 = vunpack.c.l.b16 %v269
    %v1125 = vunpack.c.h.b16 %v269
    %v1126 = vunpack.c.l.b16 %v270
    %v1127 = vunpack.c.h.b16 %v270
    %v1128 = vunpack.c.l.b16 %v271
    %v1129 = vunpack.c.h.b16 %v271
    %v1130 = vunpack.c.l.b16 %v272
    %v1131 = vunpack.c.h.b16 %v272
    %v1132 = vunpack.c.l.b16 %v273
    %v1133 = vunpack.c.h.b16 %v273
    %v1134 = vunpack.c.l.b16 %v274
    %v1135 = vunpack.c.h.b16 %v274
    %v1136 = vunpack.c.l.b16 %v275
    %v1137 = vunpack.c.h.b16 %v275
    %v1138 = vunpack.c.l.b16 %v276
    %v1139 = vunpack.c.h.b16 %v276
    %v1140 = vunpack.c.l.b16 %v277
    %v1141 = vunpack.c.h.b16 %v277
    %v1142 = vunpack.c.l.b16 %v278
    %v1143 = vunpack.c.h.b16 %v278
    %v1144 = vunpack.c.l.b16 %v279
    %v1145 = vunpack.c.h.b16 %v279
    %v1146 = vunpack.c.l.b16 %v280
    %v1147 = vunpack.c.h.b16 %v280
    %v1148 = vunpack.c.l.b16 %v281
    %v1149 = vunpack.c.h.b16 %v281
    %v1150 = vunpack.c.l.b16 %v282
    %v1151 = vunpack.c.h.b16 %v282
    %v1152 = vunpack.c.l.b16 %v283
    %v1153 = vunpack.c.h.b16 %v283
    %v1154 = vunpack.c.l.b16 %v284
    %v1155 = vunpack.c.h.b16 %v284
    %v1156 = vunpack.c.l.b16 %v285
    %v1157 = vunpack.c.h.b16 %v285
    %v1158 = vunpack.c.l.b16 %v286
    %v1159 = vunpack.c.h.b16 %v286
    %v1160 = vunpack.c.l.b16 %v287
    %v1161 = vunpack.c.h.b16 %v287
    %v1162 = vunpack.c.l.b16 %v288
    %v1163 = vunpack.c.h.b16 %v288
    %v1164 = vunpack.c.l.b16 %v289
    %v1165 = vunpack.c.h.b16 %v289
    %v1166 = vunpack.c.l.b16 %v290
    %v1167 = vunpack.c.h.b16 %v290
    %v1168 = vunpack.c.l.b16 %v291
    %v1169 = vunpack.c.h.b16 %v291
    %v1170 = vunpack.c.l.b16 %v292
    %v1171 = vunpack.c.h.b16 %v292
    %v1172 = vunpack.c.l.b16 %v293
    %v1173 = vunpack.c.h.b16 %v293
    %v1174 = vunpack.c.l.b16 %v294
    %v1175 = vunpack.c.h.b16 %v294
    %v1176 = vunpack.c.l.b16 %v295
    %v1177 = vunpack.c.h.b16 %v295
    %v1178 = vunpack.c.l.b16 %v296
    %v1179 = vunpack.c.h.b16 %v296
    %v1180 = vunpack.c.l.b16 %v297
    %v1181 = vunpack.c.h.b16 %v297
    %v1182 = vunpack.c.l.b16 %v298
    %v1183 = vunpack.c.h.b16 %v298
    %v1184 = vunpack.c.l.b16 %v299
    %v1185 = vunpack.c.h.b16 %v299
    %v1186 = vunpack.c.l.b16 %v300
    %v1187 = vunpack.c.h.b16 %v300
    %v1188 = vunpack.c.l.b16 %v301
    %v1189 = vunpack.c.h.b16 %v301
    %v1190 = vunpack.c.l.b16 %v302
    %v1191 = vunpack.c.h.b16 %v302
    %v1192 = vunpack.c.l.b16 %v303
    %v1193 = vunpack.c.h.b16 %v303
    %v1194 = vunpack.c.l.b16 %v304
    %v1195 = vunpack.c.h.b16 %v304
    %v1196 = vunpack.c.l.b16 %v305
    %v1197 = vunpack.c.h.b16 %v305
    %v1198 = vunpack.c.l.b16 %v306
    %v1199 = vunpack.c.h.b16 %v306
    %v1200 = vunpack.c.l.b16 %v307
    %v1201 = vunpack.c.h.b16 %v307
    %v1202 = vunpack.c.l.b16 %v308
    %v1203 = vunpack.c.h.b16 %v308
    %v1204 = vunpack.c.l.b16 %v309
    %v1205 = vunpack.c.h.b16 %v309
    %v1206 = vunpack.c.l.b16 %v310
    %v1207 = vunpack.c.h.b16 %v310
    %v1208 = vunpack.c.l.b16 %v311
    %v1209 = vunpack.c.h.b16 %v311
    %v1210 = vunpack.c.l.b16 %v312
    %v1211 = vunpack.c.h.b16 %v312
    %v1212 = vunpack.c.l.b16 %v313
    %v1213 = vunpack.c.h.b16 %v313
    %v1214 = vunpack.c.l.b16 %v314
    %v1215 = vunpack.c.h.b16 %v314
    %v1216 = vunpack.c.l.b16 %v315
    %v1217 = vunpack.c.h.b16 %v315
    %v1218 = vunpack.c.l.b16 %v316
    %v1219 = vunpack.c.h.b16 %v316
    %v1220 = vunpack.c.l.b16 %v317
    %v1221 = vunpack.c.h.b16 %v317
    %v1222 = vunpack.c.l.b16 %v318
    %v1223 = vunpack.c.h.b16 %v318
    %v1224 = vunpack.c.l.b16 %v319
    %v1225 = vunpack.c.h.b16 %v319
    %v1226 = vunpack.c.l.b16 %v320
    %v1227 = vunpack.c.h.b16 %v320
    %v1228 = vunpack.c.l.b16 %v321
    %v1229 = vunpack.c.h.b16 %v321
    %v1230 = vunpack.c.l.b16 %v322
    %v1231 = vunpack.c.h.b16 %v322
    %v1232 = vunpack.c.l.b16 %v323
    %v1233 = vunpack.c.h.b16 %v323
    %v1234 = vunpack.c.l.b16 %v324
    %v1235 = vunpack.c.h.b16 %v324
    %v1236 = vunpack.c.l.b16 %v325
    %v1237 = vunpack.c.h.b16 %v325
    %v1238 = vunpack.c.l.b16 %v326
    %v1239 = vunpack.c.h.b16 %v326
    %v1240 = vunpack.c.l.b16 %v327
    %v1241 = vunpack.c.h.b16 %v327
    %v1242 = vunpack.c.l.b16 %v328
    %v1243 = vunpack.c.h.b16 %v328
    %v1244 = vunpack.c.l.b16 %v329
    %v1245 = vunpack.c.h.b16 %v329
    %v1246 = vunpack.c.l.b16 %v330
    %v1247 = vunpack.c.h.b16 %v330
    %v1248 = vunpack.c.l.b16 %v331
    %v1249 = vunpack.c.h.b16 %v331
    %v1250 = vunpack.c.l.b16 %v332
    %v1251 = vunpack.c.h.b16 %v332
    %v1252 = vunpack.c.l.b16 %v333
    %v1253 = vunpack.c.h.b16 %v333
    %v1254 = vunpack.c.l.b16 %v334
    %v1255 = vunpack.c.h.b16 %v334
    %v1256 = vunpack.c.l.b16 %v335
    %v1257 = vunpack.c.h.b16 %v335
    %v1258 = vunpack.c.l.b16 %v336
    %v1259 = vunpack.c.h.b16 %v336
    %v1260 = vunpack.c.l.b16 %v337
    %v1261 = vunpack.c.h.b16 %v337
    %v1262 = vunpack.c.l.b16 %v338
    %v1263 = vunpack.c.h.b16 %v338
    %v1264 = vunpack.c.l.b16 %v339
    %v1265 = vunpack.c.h.b16 %v339
    %v1266 = vunpack.c.l.b16 %v340
    %v1267 = vunpack.c.h.b16 %v340
    %v1268 = vunpack.c.l.b16 %v341
    %v1269 = vunpack.c.h.b16 %v341
    %v1270 = vunpack.c.l.b16 %v342
    %v1271 = vunpack.c.h.b16 %v342
    %v1272 = vunpack.c.l.b16 %v343
    %v1273 = vunpack.c.h.b16 %v343
    %v1274 = vunpack.c.l.b16 %v344
    %v1275 = vunpack.c.h.b16 %v344
    %v1276 = vunpack.c.l.b16 %v345
    %v1277 = vunpack.c.h.b16 %v345
    %v1278 = vunpack.c.l.b16 %v346
    %v1279 = vunpack.c.h.b16 %v346
    %v1280 = vunpack.c.l.b16 %v347
    %v1281 = vunpack.c.h.b16 %v347
    %v1282 = vunpack.c.l.b16 %v348
    %v1283 = vunpack.c.h.b16 %v348
    %v1284 = vunpack.c.l.b16 %v349
    %v1285 = vunpack.c.h.b16 %v349
    %v1286 = vunpack.c.l.b16 %v350
    %v1287 = vunpack.c.h.b16 %v350
    %v1288 = vunpack.c.l.b16 %v351
    %v1289 = vunpack.c.h.b16 %v351
    %v1290 = vunpack.c.l.b16 %v352
    %v1291 = vunpack.c.h.b16 %v352
    %v1292 = vunpack.c.l.b16 %v353
    %v1293 = vunpack.c.h.b16 %v353
    %v1294 = vunpack.c.l.b16 %v354
    %v1295 = vunpack.c.h.b16 %v354
    %v1296 = vunpack.c.l.b16 %v355
    %v1297 = vunpack.c.h.b16 %v355
    %v1298 = vunpack.c.l.b16 %v356
    %v1299 = vunpack.c.h.b16 %v356
    %v1300 = vunpack.c.l.b16 %v357
    %v1301 = vunpack.c.h.b16 %v357
    %v1302 = vunpack.c.l.b16 %v358
    %v1303 = vunpack.c.h.b16 %v358
    %v1304 = vunpack.c.l.b16 %v359
    %v1305 = vunpack.c.h.b16 %v359
    %v1306 = vunpack.c.l.b16 %v360
    %v1307 = vunpack.c.h.b16 %v360
    %v1308 = vunpack.c.l.b16 %v361
    %v1309 = vunpack.c.h.b16 %v361
    %v1310 = vunpack.c.l.b16 %v362
    %v1311 = vunpack.c.h.b16 %v362
    %v1312 = vunpack.c.l.b16 %v363
    %v1313 = vunpack.c.h.b16 %v363
    %v1314 = vunpack.c.l.b16 %v364
    %v1315 = vunpack.c.h.b16 %v364
    %v1316 = vunpack.c.l.b16 %v365
    %v1317 = vunpack.c.h.b16 %v365
    %v1318 = vunpack.c.l.b16 %v366
    %v1319 = vunpack.c.h.b16 %v366
    %v1320 = vunpack.c.l.b16 %v367
    %v1321 = vunpack.c.h.b16 %v367
    %v1322 = vunpack.c.l.b16 %v368
    %v1323 = vunpack.c.h.b16 %v368
    %v1324 = vunpack.c.l.b16 %v369
    %v1325 = vunpack.c.h.b16 %v369
    %v1326 = vunpack.c.l.b16 %v370
    %v1327 = vunpack.c.h.b16 %v370
    %v1328 = vunpack.c.l.b16 %v371
    %v1329 = vunpack.c.h.b16 %v371
    %v1330 = vunpack.c.l.b16 %v372
    %v1331 = vunpack.c.h.b16 %v372
    %v1332 = vunpack.c.l.b16 %v373
    %v1333 = vunpack.c.h.b16 %v373
    %v1334 = vunpack.c.l.b16 %v374
    %v1335 = vunpack.c.h.b16 %v374
    %v1336 = vunpack.c.l.b16 %v375
    %v1337 = vunpack.c.h.b16 %v375
    %v1338 = vunpack.c.l.b16 %v376
    %v1339 = vunpack.c.h.b16 %v376
    %v1340 = vunpack.c.l.b16 %v377
    %v1341 = vunpack.c.h.b16 %v377
    %v1342 = vunpack.c.l.b16 %v378
    %v1343 = vunpack.c.h.b16 %v378
    %v1344 = vunpack.c.l.b16 %v379
    %v1345 = vunpack.c.h.b16 %v379
    %v1346 = vunpack.c.l.b16 %v380
    %v1347 = vunpack.c.h.b16 %v380
    %v1348 = vunpack.c.l.b16 %v381
    %v1349 = vunpack.c.h.b16 %v381
    %v1350 = vunpack.c.l.b16 %v382
    %v1351 = vunpack.c.h.b16 %v382
    %v1352 = vunpack.c.l.b16 %v383
    %v1353 = vunpack.c.h.b16 %v383
    %v1354 = vunpack.c.l.b16 %v384
    %v1355 = vunpack.c.h.b16 %v384
    %v1356 = vunpack.c.l.b16 %v385
    %v1357 = vunpack.c.h.b16 %v385
    %v1358 = vunpack.c.l.b16 %v386
    %v1359 = vunpack.c.h.b16 %v386
    %v1360 = vunpack.c.l.b16 %v387
    %v1361 = vunpack.c.h.b16 %v387
    %v1362 = vunpack.c.l.b16 %v388
    %v1363 = vunpack.c.h.b16 %v388
    %v1364 = vunpack.c.l.b16 %v389
    %v1365 = vunpack.c.h.b16 %v389
    %v1366 = vunpack.c.l.b16 %v390
    %v1367 = vunpack.c.h.b16 %v390
    %v1368 = vunpack.c.l.b16 %v391
    %v1369 = vunpack.c.h.b16 %v391
    %v1370 = vunpack.c.l.b16 %v392
    %v1371 = vunpack.c.h.b16 %v392
    %v1372 = vunpack.c.l.b16 %v393
    %v1373 = vunpack.c.h.b16 %v393
    %v1374 = vunpack.c.l.b16 %v394
    %v1375 = vunpack.c.h.b16 %v394
    %v1376 = vunpack.c.l.b16 %v395
    %v1377 = vunpack.c.h.b16 %v395
    %v1378 = vunpack.c.l.b16 %v396
    %v1379 = vunpack.c.h.b16 %v396
    %v1380 = vunpack.c.l.b16 %v397
    %v1381 = vunpack.c.h.b16 %v397
    %v1382 = vunpack.c.l.b16 %v398
    %v1383 = vunpack.c.h.b16 %v398
    %v1384 = vunpack.c.l.b16 %v399
    %v1385 = vunpack.c.h.b16 %v399
    %v1386 = vunpack.c.l.b16 %v400
    %v1387 = vunpack.c.h.b16 %v400
    %v1388 = vunpack.c.l.b16 %v401
    %v1389 = vunpack.c.h.b16 %v401
    %v1390 = vunpack.c.l.b16 %v402
    %v1391 = vunpack.c.h.b16 %v402
    %v1392 = vunpack.c.l.b16 %v403
    %v1393 = vunpack.c.h.b16 %v403
    %v1394 = vunpack.c.l.b16 %v404
    %v1395 = vunpack.c.h.b16 %v404
    %v1396 = vunpack.c.l.b16 %v405
    %v1397 = vunpack.c.h.b16 %v405
    %v1398 = vunpack.c.l.b16 %v406
    %v1399 = vunpack.c.h.b16 %v406
    %v1400 = vunpack.c.l.b16 %v407
    %v1401 = vunpack.c.h.b16 %v407
    %v1402 = vunpack.c.l.b16 %v408
    %v1403 = vunpack.c.h.b16 %v408
    %v1404 = vunpack.c.l.b16 %v409
    %v1405 = vunpack.c.h.b16 %v409
    %v1406 = vunpack.c.l.b16 %v410
    %v1407 = vunpack.c.h.b16 %v410
    %v1408 = vunpack.c.l.b16 %v411
    %v1409 = vunpack.c.h.b16 %v411
    %v1410 = vunpack.c.l.b16 %v412
    %v1411 = vunpack.c.h.b16 %v412
    %v1412 = vunpack.c.l.b16 %v413
    %v1413 = vunpack.c.h.b16 %v413
    %v1414 = vunpack.c.l.b16 %v414
    %v1415 = vunpack.c.h.b16 %v414
    %v1416 = vunpack.c.l.b16 %v415
    %v1417 = vunpack.c.h.b16 %v415
    %v1418 = vunpack.c.l.b16 %v416
    %v1419 = vunpack.c.h.b16 %v416
    %v1420 = vunpack.c.l.b16 %v417
    %v1421 = vunpack.c.h.b16 %v417
    %v1422 = vunpack.c.l.b16 %v418
    %v1423 = vunpack.c.h.b16 %v418
    %v1424 = vunpack.c.l.b16 %v419
    %v1425 = vunpack.c.h.b16 %v419
    %v1426 = vunpack.c.l.b16 %v420
    %v1427 = vunpack.c.h.b16 %v420
    %v1428 = vunpack.c.l.b16 %v421
    %v1429 = vunpack.c.h.b16 %v421
    %v1430 = vunpack.c.l.b16 %v422
    %v1431 = vunpack.c.h.b16 %v422
    %v1432 = vunpack.c.l.b16 %v423
    %v1433 = vunpack.c.h.b16 %v423
    %v1434 = vunpack.c.l.b16 %v424
    %v1435 = vunpack.c.h.b16 %v424
    %v1436 = vunpack.c.l.b16 %v425
    %v1437 = vunpack.c.h.b16 %v425
    %v1438 = vunpack.c.l.b16 %v426
    %v1439 = vunpack.c.h.b16 %v426
    %v1440 = vunpack.c.l.b16 %v427
    %v1441 = vunpack.c.h.b16 %v427
    %v1442 = vunpack.c.l.b16 %v428
    %v1443 = vunpack.c.h.b16 %v428
    %v1444 = vunpack.c.l.b16 %v429
    %v1445 = vunpack.c.h.b16 %v429
    %v1446 = vunpack.c.l.b16 %v430
    %v1447 = vunpack.c.h.b16 %v430
    %v1448 = vunpack.c.l.b16 %v431
    %v1449 = vunpack.c.h.b16 %v431
    %v1450 = vunpack.c.l.b16 %v432
    %v1451 = vunpack.c.h.b16 %v432
    %v1452 = vunpack.c.l.b16 %v433
    %v1453 = vunpack.c.h.b16 %v433
    %v1454 = vunpack.c.l.b16 %v434
    %v1455 = vunpack.c.h.b16 %v434
    %v1456 = vunpack.c.l.b16 %v435
    %v1457 = vunpack.c.h.b16 %v435
    %v1458 = vunpack.c.l.b16 %v436
    %v1459 = vunpack.c.h.b16 %v436
    %v1460 = vunpack.c.l.b16 %v437
    %v1461 = vunpack.c.h.b16 %v437
    %v1462 = vunpack.c.l.b16 %v438
    %v1463 = vunpack.c.h.b16 %v438
    %v1464 = vunpack.c.l.b16 %v439
    %v1465 = vunpack.c.h.b16 %v439
    %v1466 = vunpack.c.l.b16 %v440
    %v1467 = vunpack.c.h.b16 %v440
    %v1468 = vunpack.c.l.b16 %v441
    %v1469 = vunpack.c.h.b16 %v441
    %v1470 = vunpack.c.l.b16 %v442
    %v1471 = vunpack.c.h.b16 %v442
    %v1472 = vunpack.c.l.b16 %v443
    %v1473 = vunpack.c.h.b16 %v443
    %v1474 = vunpack.c.l.b16 %v444
    %v1475 = vunpack.c.h.b16 %v444
    %v1476 = vunpack.c.l.b16 %v445
    %v1477 = vunpack.c.h.b16 %v445
    %v1478 = vunpack.c.l.b16 %v446
    %v1479 = vunpack.c.h.b16 %v446
    %v1480 = vunpack.c.l.b16 %v447
    %v1481 = vunpack.c.h.b16 %v447
    %v1482 = vunpack.c.l.b16 %v448
    %v1483 = vunpack.c.h.b16 %v448
    %v1484 = vunpack.c.l.b16 %v449
    %v1485 = vunpack.c.h.b16 %v449
    %v1486 = vunpack.c.l.b16 %v450
    %v1487 = vunpack.c.h.b16 %v450
    %v1488 = vunpack.c.l.b16 %v451
    %v1489 = vunpack.c.h.b16 %v451
    %v1490 = vunpack.c.l.b16 %v452
    %v1491 = vunpack.c.h.b16 %v452
    %v1492 = vunpack.c.l.b16 %v453
    %v1493 = vunpack.c.h.b16 %v453
    %v1494 = vunpack.c.l.b16 %v454
    %v1495 = vunpack.c.h.b16 %v454
    %v1496 = vunpack.c.l.b16 %v455
    %v1497 = vunpack.c.h.b16 %v455
    %v1498 = vunpack.c.l.b16 %v456
    %v1499 = vunpack.c.h.b16 %v456
    %v1500 = vunpack.c.l.b16 %v457
    %v1501 = vunpack.c.h.b16 %v457
    %v1502 = vunpack.c.l.b16 %v458
    %v1503 = vunpack.c.h.b16 %v458
    %v1504 = vunpack.c.l.b16 %v459
    %v1505 = vunpack.c.h.b16 %v459
    %v1506 = vunpack.c.l.b16 %v460
    %v1507 = vunpack.c.h.b16 %v460
    %v1508 = vunpack.c.l.b16 %v461
    %v1509 = vunpack.c.h.b16 %v461
    %v1510 = vunpack.c.l.b16 %v462
    %v1511 = vunpack.c.h.b16 %v462
    %v1512 = vunpack.c.l.b16 %v463
    %v1513 = vunpack.c.h.b16 %v463
    %v1514 = vunpack.c.l.b16 %v464
    %v1515 = vunpack.c.h.b16 %v464
    %v1516 = vunpack.c.l.b16 %v465
    %v1517 = vunpack.c.h.b16 %v465
    %v1518 = vunpack.c.l.b16 %v466
    %v1519 = vunpack.c.h.b16 %v466
    %v1520 = vunpack.c.l.b16 %v467
    %v1521 = vunpack.c.h.b16 %v467
    %v1522 = vunpack.c.l.b16 %v468
    %v1523 = vunpack.c.h.b16 %v468
    %v1524 = vunpack.c.l.b16 %v469
    %v1525 = vunpack.c.h.b16 %v469
    %v1526 = vunpack.c.l.b16 %v470
    %v1527 = vunpack.c.h.b16 %v470
    %v1528 = vunpack.c.l.b16 %v471
    %v1529 = vunpack.c.h.b16 %v471
    %v1530 = vunpack.c.l.b16 %v472
    %v1531 = vunpack.c.h.b16 %v472
    %v1532 = vunpack.c.l.b16 %v473
    %v1533 = vunpack.c.h.b16 %v473
    %v1534 = vunpack.c.l.b16 %v474
    %v1535 = vunpack.c.h.b16 %v474
    %v1536 = vunpack.c.l.b16 %v475
    %v1537 = vunpack.c.h.b16 %v475
    %v1538 = vunpack.c.l.b16 %v476
    %v1539 = vunpack.c.h.b16 %v476
    %v1540 = vunpack.c.l.b16 %v477
    %v1541 = vunpack.c.h.b16 %v477
    %v1542 = vunpack.c.l.b16 %v478
    %v1543 = vunpack.c.h.b16 %v478
    %v1544 = vunpack.c.l.b16 %v479
    %v1545 = vunpack.c.h.b16 %v479
    %v1546 = vunpack.c.l.b16 %v480
    %v1547 = vunpack.c.h.b16 %v480
    %v1548 = vunpack.c.l.b16 %v481
    %v1549 = vunpack.c.h.b16 %v481
    %v1550 = vunpack.c.l.b16 %v482
    %v1551 = vunpack.c.h.b16 %v482
    %v1552 = vunpack.c.l.b16 %v483
    %v1553 = vunpack.c.h.b16 %v483
    %v1554 = vunpack.c.l.b16 %v484
    %v1555 = vunpack.c.h.b16 %v484
    %v1556 = vunpack.c.l.b16 %v485
    %v1557 = vunpack.c.h.b16 %v485
    %v1558 = vunpack.c.l.b16 %v486
    %v1559 = vunpack.c.h.b16 %v486
    %v1560 = vunpack.c.l.b16 %v487
    %v1561 = vunpack.c.h.b16 %v487
    %v1562 = vunpack.c.l.b16 %v488
    %v1563 = vunpack.c.h.b16 %v488
    %v1564 = vunpack.c.l.b16 %v489
    %v1565 = vunpack.c.h.b16 %v489
    %v1566 = vunpack.c.l.b16 %v490
    %v1567 = vunpack.c.h.b16 %v490
    %v1568 = vunpack.c.l.b16 %v491
    %v1569 = vunpack.c.h.b16 %v491
    %v1570 = vunpack.c.l.b16 %v492
    %v1571 = vunpack.c.h.b16 %v492
    %v1572 = vunpack.c.l.b16 %v493
    %v1573 = vunpack.c.h.b16 %v493
    %v1574 = vunpack.c.l.b16 %v494
    %v1575 = vunpack.c.h.b16 %v494
    %v1576 = vunpack.c.l.b16 %v495
    %v1577 = vunpack.c.h.b16 %v495
    %v1578 = vunpack.c.l.b16 %v496
    %v1579 = vunpack.c.h.b16 %v496
    %v1580 = vunpack.c.l.b16 %v497
    %v1581 = vunpack.c.h.b16 %v497
    %v1582 = vunpack.c.l.b16 %v498
    %v1583 = vunpack.c.h.b16 %v498
    %v1584 = vunpack.c.l.b16 %v499
    %v1585 = vunpack.c.h.b16 %v499
    %v1586 = vunpack.c.l.b16 %v500
    %v1587 = vunpack.c.h.b16 %v500
    %v1588 = vunpack.c.l.b16 %v501
    %v1589 = vunpack.c.h.b16 %v501
    %v1590 = vunpack.c.l.b16 %v502
    %v1591 = vunpack.c.h.b16 %v502
    %v1592 = vunpack.c.l.b16 %v503
    %v1593 = vunpack.c.h.b16 %v503
    %v1594 = vunpack.c.l.b16 %v504
    %v1595 = vunpack.c.h.b16 %v504
    %v1596 = vunpack.c.l.b16 %v505
    %v1597 = vunpack.c.h.b16 %v505
    %v1598 = vunpack.c.l.b16 %v506
    %v1599 = vunpack.c.h.b16 %v506
    %v1600 = vunpack.c.l.b16 %v507
    %v1601 = vunpack.c.h.b16 %v507
    %v1602 = vunpack.c.l.b16 %v508
    %v1603 = vunpack.c.h.b16 %v508
    %v1604 = vunpack.c.l.b16 %v509
    %v1605 = vunpack.c.h.b16 %v509
    %v1606 = vunpack.c.l.b16 %v510
    %v1607 = vunpack.c.h.b16 %v510
    %v1608 = vunpack.c.l.b16 %v511
    %v1609 = vunpack.c.h.b16 %v511
    %v1610 = vunpack.c.l.b16 %v512
    %v1611 = vunpack.c.h.b16 %v512
    %v1612 = vunpack.c.l.b16 %v513
    %v1613 = vunpack.c.h.b16 %v513
    %v1614 = vunpack.c.l.b16 %v514
    %v1615 = vunpack.c.h.b16 %v514
    %v1616 = vunpack.c.l.b16 %v515
    %v1617 = vunpack.c.h.b16 %v515
    %v1618 = vunpack.c.l.b16 %v516
    %v1619 = vunpack.c.h.b16 %v516
    %v1620 = vunpack.c.l.b16 %v517
    %v1621 = vunpack.c.h.b16 %v517
    %v1622 = vunpack.c.l.b16 %v518
    %v1623 = vunpack.c.h.b16 %v518
    %v1624 = vunpack.c.l.b16 %v519
    %v1625 = vunpack.c.h.b16 %v519
    %v1626 = vunpack.c.l.b16 %v520
    %v1627 = vunpack.c.h.b16 %v520
    %v1628 = vunpack.c.l.b16 %v521
    %v1629 = vunpack.c.h.b16 %v521
    %v1630 = vunpack.c.l.b16 %v522
    %v1631 = vunpack.c.h.b16 %v522
    %v1632 = vunpack.c.l.b16 %v523
    %v1633 = vunpack.c.h.b16 %v523
    %v1634 = vunpack.c.l.b16 %v524
    %v1635 = vunpack.c.h.b16 %v524
    %v1636 = vunpack.c.l.b16 %v525
    %v1637 = vunpack.c.h.b16 %v525
    %v1638 = vunpack.c.l.b16 %v526
    %v1639 = vunpack.c.h.b16 %v526
    %v1640 = vunpack.c.l.b16 %v527
    %v1641 = vunpack.c.h.b16 %v527
    %v1642 = vunpack.c.l.b16 %v528
    %v1643 = vunpack.c.h.b16 %v528
    %v1644 = vunpack.c.l.b16 %v529
    %v1645 = vunpack.c.h.b16 %v529
    %v1646 = vunpack.c.l.b16 %v530
    %v1647 = vunpack.c.h.b16 %v530
    %v1648 = vunpack.c.l.b16 %v531
    %v1649 = vunpack.c.h.b16 %v531
    %v1650 = vunpack.c.l.b16 %v532
    %v1651 = vunpack.c.h.b16 %v532
    %v1652 = vunpack.c.l.b16 %v533
    %v1653 = vunpack.c.h.b16 %v533
    %v1654 = vunpack.c.l.b16 %v534
    %v1655 = vunpack.c.h.b16 %v534
    %v1656 = vunpack.c.l.b16 %v535
    %v1657 = vunpack.c.h.b16 %v535
    %v1658 = vunpack.c.l.b16 %v536
    %v1659 = vunpack.c.h.b16 %v536
    %v1660 = vunpack.c.l.b16 %v537
    %v1661 = vunpack.c.h.b16 %v537
    %v1662 = vunpack.c.l.b16 %v538
    %v1663 = vunpack.c.h.b16 %v538
    %v1664 = vunpack.c.l.b16 %v539
    %v1665 = vunpack.c.h.b16 %v539
    %v1666 = vunpack.c.l.b16 %v540
    %v1667 = vunpack.c.h.b16 %v540
    %v1668 = vunpack.c.l.b16 %v541
    %v1669 = vunpack.c.h.b16 %v541
    %v1670 = vunpack.c.l.b16 %v542
    %v1671 = vunpack.c.h.b16 %v542
    %v1672 = vunpack.c.l.b16 %v543
    %v1673 = vunpack.c.h.b16 %v543
    %v1674 = vunpack.c.l.b16 %v544
    %v1675 = vunpack.c.h.b16 %v544
    %v1676 = vunpack.c.l.b16 %v545
    %v1677 = vunpack.c.h.b16 %v545
    %v1678 = vunpack.c.l.b16 %v546
    %v1679 = vunpack.c.h.b16 %v546
    %v1680 = vunpack.c.l.b16 %v547
    %v1681 = vunpack.c.h.b16 %v547
    %v1682 = vunpack.c.l.b16 %v548
    %v1683 = vunpack.c.h.b16 %v548
    %v1684 = vunpack.c.l.b16 %v549
    %v1685 = vunpack.c.h.b16 %v549
    %v1686 = vunpack.c.l.b16 %v550
    %v1687 = vunpack.c.h.b16 %v550
    %v1688 = vunpack.c.l.b16 %v551
    %v1689 = vunpack.c.h.b16 %v551
    %v1690 = vunpack.c.l.b16 %v552
    %v1691 = vunpack.c.h.b16 %v552
    %v1692 = vunpack.c.l.b16 %v553
    %v1693 = vunpack.c.h.b16 %v553
    %v1694 = vunpack.c.l.b16 %v554
    %v1695 = vunpack.c.h.b16 %v554
    %v1696 = vunpack.c.l.b16 %v555
    %v1697 = vunpack.c.h.b16 %v555
    %v1698 = vunpack.c.l.b16 %v556
    %v1699 = vunpack.c.h.b16 %v556
    %v1700 = vunpack.c.l.b16 %v557
    %v1701 = vunpack.c.h.b16 %v557
    %v1702 = vunpack.c.l.b16 %v558
    %v1703 = vunpack.c.h.b16 %v558
    %v1704 = vunpack.c.l.b16 %v559
    %v1705 = vunpack.c.h.b16 %v559
    %v1706 = vunpack.c.l.b16 %v560
    %v1707 = vunpack.c.h.b16 %v560
    %v1708 = vunpack.c.l.b16 %v561
    %v1709 = vunpack.c.h.b16 %v561
    %v1710 = vunpack.c.l.b16 %v562
    %v1711 = vunpack.c.h.b16 %v562
    %v1712 = vunpack.c.l.b16 %v563
    %v1713 = vunpack.c.h.b16 %v563
    %v1714 = vunpack.c.l.b16 %v564
    %v1715 = vunpack.c.h.b16 %v564
    %v1716 = vunpack.c.l.b16 %v565
    %v1717 = vunpack.c.h.b16 %v565
    %v1718 = vunpack.c.l.b16 %v566
    %v1719 = vunpack.c.h.b16 %v566
    %v1720 = vunpack.c.l.b16 %v567
    %v1721 = vunpack.c.h.b16 %v567
    %v1722 = vunpack.c.l.b16 %v568
    %v1723 = vunpack.c.h.b16 %v568
    %v1724 = vunpack.c.l.b16 %v569
    %v1725 = vunpack.c.h.b16 %v569
    %v1726 = vunpack.c.l.b16 %v570
    %v1727 = vunpack.c.h.b16 %v570
    %v1728 = vunpack.c.l.b16 %v571
    %v1729 = vunpack.c.h.b16 %v571
    %v1730 = vunpack.c.l.b16 %v572
    %v1731 = vunpack.c.h.b16 %v572
    %v1732 = vunpack.c.l.b16 %v573
    %v1733 = vunpack.c.h.b16 %v573
    %v1734 = vunpack.c.l.b16 %v574
    %v1735 = vunpack.c.h.b16 %v574
    %v1736 = vunpack.c.l.b16 %v575
    %v1737 = vunpack.c.h.b16 %v575
    %v1738 = vunpack.c.l.b16 %v576
    %v1739 = vunpack.c.h.b16 %v576
    %v1740 = vunpack.c.l.b16 %v577
    %v1741 = vunpack.c.h.b16 %v577
    %v1742 = vunpack.c.l.b16 %v578
    %v1743 = vunpack.c.h.b16 %v578
    %v1744 = vunpack.c.l.b16 %v579
    %v1745 = vunpack.c.h.b16 %v579
    %v1746 = vunpack.c.l.b16 %v580
    %v1747 = vunpack.c.h.b16 %v580
    %v1748 = vunpack.c.l.b16 %v581
    %v1749 = vunpack.c.h.b16 %v581
    %v1750 = vunpack.c.l.b16 %v582
    %v1751 = vunpack.c.h.b16 %v582
    %v1752 = vunpack.c.l.b16 %v583
    %v1753 = vunpack.c.h.b16 %v583
    %v1754 = vunpack.c.l.b16 %v584
    %v1755 = vunpack.c.h.b16 %v584
    %v1756 = vunpack.c.l.b16 %v585
    %v1757 = vunpack.c.h.b16 %v585
    %v1758 = vunpack.c.l.b16 %v586
    %v1759 = vunpack.c.h.b16 %v586
    %v1760 = vunpack.c.l.b16 %v587
    %v1761 = vunpack.c.h.b16 %v587
    %v1762 = vunpack.c.l.b16 %v588
    %v1763 = vunpack.c.h.b16 %v588
    %v1764 = vunpack.c.l.b16 %v589
    %v1765 = vunpack.c.h.b16 %v589
    %v1766 = vunpack.c.l.b16 %v590
    %v1767 = vunpack.c.h.b16 %v590
    %v1768 = vunpack.c.l.b16 %v591
    %v1769 = vunpack.c.h.b16 %v591
    %v1770 = vunpack.c.l.b16 %v592
    %v1771 = vunpack.c.h.b16 %v592
    %v1772 = vunpack.c.l.b16 %v593
    %v1773 = vunpack.c.h.b16 %v593
    %v1774 = vunpack.c.l.b16 %v594
    %v1775 = vunpack.c.h.b16 %v594
    %v1776 = vunpack.c.l.b16 %v595
    %v1777 = vunpack.c.h.b16 %v595
    %v1778 = vunpack.c.l.b16 %v596
    %v1779 = vunpack.c.h.b16 %v596
    %v1780 = vunpack.c.l.b16 %v597
    %v1781 = vunpack.c.h.b16 %v597
    %v1782 = vunpack.c.l.b16 %v598
    %v1783 = vunpack.c.h.b16 %v598
    %v1784 = vunpack.c.l.b16 %v599
    %v1785 = vunpack.c.h.b16 %v599
    %v1786 = vunpack.c.l.b16 %v600
    %v1787 = vunpack.c.h.b16 %v600
    %v1788 = vunpack.c.l.b16 %v601
    %v1789 = vunpack.c.h.b16 %v601
    %v1790 = vunpack.c.l.b16 %v602
    %v1791 = vunpack.c.h.b16 %v602
    %v1792 = vunpack.c.l.b16 %v603
    %v1793 = vunpack.c.h.b16 %v603
    %v1794 = vunpack.c.l.b16 %v604
    %v1795 = vunpack.c.h.b16 %v604
    %v1796 = vunpack.c.l.b16 %v605
    %v1797 = vunpack.c.h.b16 %v605
    %v1798 = vunpack.c.l.b16 %v606
    %v1799 = vunpack.c.h.b16 %v606
    %v1800 = vunpack.c.l.b16 %v607
    %v1801 = vunpack.c.h.b16 %v607
    %v1802 = vunpack.c.l.b16 %v608
    %v1803 = vunpack.c.h.b16 %v608
    %v1804 = vunpack.c.l.b16 %v609
    %v1805 = vunpack.c.h.b16 %v609
    %v1806 = vunpack.c.l.b16 %v610
    %v1807 = vunpack.c.h.b16 %v610
    %v1808 = vunpack.c.l.b16 %v611
    %v1809 = vunpack.c.h.b16 %v611
    %v1810 = vunpack.c.l.b16 %v612
    %v1811 = vunpack.c.h.b16 %v612
    %v1812 = vunpack.c.l.b16 %v613
    %v1813 = vunpack.c.h.b16 %v613
    %v1814 = vunpack.c.l.b16 %v614
    %v1815 = vunpack.c.h.b16 %v614
    %v1816 = vunpack.c.l.b16 %v615
    %v1817 = vunpack.c.h.b16 %v615
    %v1818 = vunpack.c.l.b16 %v616
    %v1819 = vunpack.c.h.b16 %v616
    %v1820 = vunpack.c.l.b16 %v617
    %v1821 = vunpack.c.h.b16 %v617
    %v1822 = vunpack.c.l.b16 %v618
    %v1823 = vunpack.c.h.b16 %v618
    %v1824 = vunpack.c.l.b16 %v619
    %v1825 = vunpack.c.h.b16 %v619
    %v1826 = vunpack.c.l.b16 %v620
    %v1827 = vunpack.c.h.b16 %v620
    %v1828 = vunpack.c.l.b16 %v621
    %v1829 = vunpack.c.h.b16 %v621
    %v1830 = vunpack.c.l.b16 %v622
    %v1831 = vunpack.c.h.b16 %v622
    %v1832 = vunpack.c.l.b16 %v623
    %v1833 = vunpack.c.h.b16 %v623
    %v1834 = vunpack.c.l.b16 %v624
    %v1835 = vunpack.c.h.b16 %v624
    %v1836 = vunpack.c.l.b16 %v625
    %v1837 = vunpack.c.h.b16 %v625
    %v1838 = vunpack.c.l.b16 %v626
    %v1839 = vunpack.c.h.b16 %v626
    %v1840 = vunpack.c.l.b16 %v627
    %v1841 = vunpack.c.h.b16 %v627
    %v1842 = vunpack.c.l.b16 %v628
    %v1843 = vunpack.c.h.b16 %v628
    %v1844 = vunpack.c.l.b16 %v629
    %v1845 = vunpack.c.h.b16 %v629
    %v1846 = vpack.c.b16 %v1090, %v1078
    %v1847 = vpack.c.b16 %v1091, %v1079
    %v1848 = vpack.c.b16 %v1092, %v1080
    %v1849 = vpack.c.b16 %v1093, %v1081
    %v1850 = vpack.c.b16 %v1094, %v1082
    %v1851 = vpack.c.b16 %v1095, %v1083
    %v1852 = vpack.c.b16 %v1096, %v1084
    %v1853 = vpack.c.b16 %v1097, %v1085
    %v1854 = vpack.c.b16 %v1098, %v1086
    %v1855 = vpack.c.b16 %v1099, %v1087
    %v1856 = vpack.c.b16 %v1100, %v1088
    %v1857 = vpack.c.b16 %v1101, %v1089
    %v1858 = vpack.c.b16 %v1114, %v1102
    %v1859 = vpack.c.b16 %v1115, %v1103
    %v1860 = vpack.c.b16 %v1116, %v1104
    %v1861 = vpack.c.b16 %v1117, %v1105
    %v1862 = vpack.c.b16 %v1118, %v1106
    %v1863 = vpack.c.b16 %v1119, %v1107
    %v1864 = vpack.c.b16 %v1120, %v1108
    %v1865 = vpack.c.b16 %v1121, %v1109
    %v1866 = vpack.c.b16 %v1122, %v1110
    %v1867 = vpack.c.b16 %v1123, %v1111
    %v1868 = vpack.c.b16 %v1124, %v1112
    %v1869 = vpack.c.b16 %v1125, %v1113
    %v1870 = vpack.c.b16 %v1138, %v1126
    %v1871 = vpack.c.b16 %v1139, %v1127
    %v1872 = vpack.c.b16 %v1140, %v1128
    %v1873 = vpack.c.b16 %v1141, %v1129
    %v1874 = vpack.c.b16 %v1142, %v1130
    %v1875 = vpack.c.b16 %v1143, %v1131
    %v1876 = vpack.c.b16 %v1144, %v1132
    %v1877 = vpack.c.b16 %v1145, %v1133
    %v1878 = vpack.c.b16 %v1146, %v1134
    %v1879 = vpack.c.b16 %v1147, %v1135
    %v1880 = vpack.c.b16 %v1148, %v1136
    %v1881 = vpack.c.b16 %v1149, %v1137
    %v1882 = vpack.c.b16 %v1162, %v1150
    %v1883 = vpack.c.b16 %v1163, %v1151
    %v1884 = vpack.c.b16 %v1164, %v1152
    %v1885 = vpack.c.b16 %v1165, %v1153
    %v1886 = vpack.c.b16 %v1166, %v1154
    %v1887 = vpack.c.b16 %v1167, %v1155
    %v1888 = vpack.c.b16 %v1168, %v1156
    %v1889 = vpack.c.b16 %v1169, %v1157
    %v1890 = vpack.c.b16 %v1170, %v1158
    %v1891 = vpack.c.b16 %v1171, %v1159
    %v1892 = vpack.c.b16 %v1172, %v1160
    %v1893 = vpack.c.b16 %v1173, %v1161
    %v1894 = vpack.c.b16 %v1186, %v1174
    %v1895 = vpack.c.b16 %v1187, %v1175
    %v1896 = vpack.c.b16 %v1188, %v1176
    %v1897 = vpack.c.b16 %v1189, %v1177
    %v1898 = vpack.c.b16 %v1190, %v1178
    %v1899 = vpack.c.b16 %v1191, %v1179
    %v1900 = vpack.c.b16 %v1192, %v1180
    %v1901 = vpack.c.b16 %v1193, %v1181
    %v1902 = vpack.c.b16 %v1194, %v1182
    %v1903 = vpack.c.b16 %v1195, %v1183
    %v1904 = vpack.c.b16 %v1196, %v1184
    %v1905 = vpack.c.b16 %v1197, %v1185
    %v1906 = vpack.c.b16 %v1210, %v1198
    %v1907 = vpack.c.b16 %v1211, %v1199
    %v1908 = vpack.c.b16 %v1212, %v1200
    %v1909 = vpack.c.b16 %v1213, %v1201
    %v1910 = vpack.c.b16 %v1214, %v1202
    %v1911 = vpack.c.b16 %v1215, %v1203
    %v1912 = vpack.c.b16 %v1216, %v1204
    %v1913 = vpack.c.b16 %v1217, %v1205
    %v1914 = vpack.c.b16 %v1218, %v1206
    %v1915 = vpack.c.b16 %v1219, %v1207
    %v1916 = vpack.c.b16 %v1220, %v1208
    %v1917 = vpack.c.b16 %v1221, %v1209
    %v1918 = vpack.c.b16 %v1234, %v1222
    %v1919 = vpack.c.b16 %v1235, %v1223
    %v1920 = vpack.c.b16 %v1236, %v1224
    %v1921 = vpack.c.b16 %v1237, %v1225
    %v1922 = vpack.c.b16 %v1238, %v1226
    %v1923 = vpack.c.b16 %v1239, %v1227
    %v1924 = vpack.c.b16 %v1240, %v1228
    %v1925 = vpack.c.b16 %v1241, %v1229
    %v1926 = vpack.c.b16 %v1242, %v1230
    %v1927 = vpack.c.b16 %v1243, %v1231
    %v1928 = vpack.c.b16 %v1244, %v1232
    %v1929 = vpack.c.b16 %v1245, %v1233
    %v1930 = vpack.c.b16 %v1258, %v1246
    %v1931 = vpack.c.b16 %v1259, %v1247
    %v1932 = vpack.c.b16 %v1260, %v1248
    %v1933 = vpack.c.b16 %v1261, %v1249
    %v1934 = vpack.c.b16 %v1262, %v1250
    %v1935 = vpack.c.b16 %v1263, %v1251
    %v1936 = vpack.c.b16 %v1264, %v1252
    %v1937 = vpack.c.b16 %v1265, %v1253
    %v1938 = vpack.c.b16 %v1266, %v1254
    %v1939 = vpack.c.b16 %v1267, %v1255
    %v1940 = vpack.c.b16 %v1268, %v1256
    %v1941 = vpack.c.b16 %v1269, %v1257
    %v1942 = vpack.c.b16 %v1282, %v1270
    %v1943 = vpack.c.b16 %v1283, %v1271
    %v1944 = vpack.c.b16 %v1284, %v1272
    %v1945 = vpack.c.b16 %v1285, %v1273
    %v1946 = vpack.c.b16 %v1286, %v1274
    %v1947 = vpack.c.b16 %v1287, %v1275
    %v1948 = vpack.c.b16 %v1288, %v1276
    %v1949 = vpack.c.b16 %v1289, %v1277
    %v1950 = vpack.c.b16 %v1290, %v1278
    %v1951 = vpack.c.b16 %v1291, %v1279
    %v1952 = vpack.c.b16 %v1292, %v1280
    %v1953 = vpack.c.b16 %v1293, %v1281
    %v1954 = vpack.c.b16 %v1306, %v1294
    %v1955 = vpack.c.b16 %v1307, %v1295
    %v1956 = vpack.c.b16 %v1308, %v1296
    %v1957 = vpack.c.b16 %v1309, %v1297
    %v1958 = vpack.c.b16 %v1310, %v1298
    %v1959 = vpack.c.b16 %v1311, %v1299
    %v1960 = vpack.c.b16 %v1312, %v1300
    %v1961 = vpack.c.b16 %v1313, %v1301
    %v1962 = vpack.c.b16 %v1314, %v1302
    %v1963 = vpack.c.b16 %v1315, %v1303
    %v1964 = vpack.c.b16 %v1316, %v1304
    %v1965 = vpack.c.b16 %v1317, %v1305
    %v1966 = vpack.c.b16 %v1330, %v1318
    %v1967 = vpack.c.b16 %v1331, %v1319
    %v1968 = vpack.c.b16 %v1332, %v1320
    %v1969 = vpack.c.b16 %v1333, %v1321
    %v1970 = vpack.c.b16 %v1334, %v1322
    %v1971 = vpack.c.b16 %v1335, %v1323
    %v1972 = vpack.c.b16 %v1336, %v1324
    %v1973 = vpack.c.b16 %v1337, %v1325
    %v1974 = vpack.c.b16 %v1338, %v1326
    %v1975 = vpack.c.b16 %v1339, %v1327
    %v1976 = vpack.c.b16 %v1340, %v1328
    %v1977 = vpack.c.b16 %v1341, %v1329
    %v1978 = vpack.c.b16 %v1354, %v1342
    %v1979 = vpack.c.b16 %v1355, %v1343
    %v1980 = vpack.c.b16 %v1356, %v1344
    %v1981 = vpack.c.b16 %v1357, %v1345
    %v1982 = vpack.c.b16 %v1358, %v1346
    %v1983 = vpack.c.b16 %v1359, %v1347
    %v1984 = vpack.c.b16 %v1360, %v1348
    %v1985 = vpack.c.b16 %v1361, %v1349
    %v1986 = vpack.c.b16 %v1362, %v1350
    %v1987 = vpack.c.b16 %v1363, %v1351
    %v1988 = vpack.c.b16 %v1364, %v1352
    %v1989 = vpack.c.b16 %v1365, %v1353
    %v1990 = vpack.c.b16 %v1378, %v1366
    %v1991 = vpack.c.b16 %v1379, %v1367
    %v1992 = vpack.c.b16 %v1380, %v1368
    %v1993 = vpack.c.b16 %v1381, %v1369
    %v1994 = vpack.c.b16 %v1382, %v1370
    %v1995 = vpack.c.b16 %v1383, %v1371
    %v1996 = vpack.c.b16 %v1384, %v1372
    %v1997 = vpack.c.b16 %v1385, %v1373
    %v1998 = vpack.c.b16 %v1386, %v1374
    %v1999 = vpack.c.b16 %v1387, %v1375
    %v2000 = vpack.c.b16 %v1388, %v1376
    %v2001 = vpack.c.b16 %v1389, %v1377
    %v2002 = vpack.c.b16 %v1402, %v1390
    %v2003 = vpack.c.b16 %v1403, %v1391
    %v2004 = vpack.c.b16 %v1404, %v1392
    %v2005 = vpack.c.b16 %v1405, %v1393
    %v2006 = vpack.c.b16 %v1406, %v1394
    %v2007 = vpack.c.b16 %v1407, %v1395
    %v2008 = vpack.c.b16 %v1408, %v1396
    %v2009 = vpack.c.b16 %v1409, %v1397
    %v2010 = vpack.c.b16 %v1410, %v1398
    %v2011 = vpack.c.b16 %v1411, %v1399
    %v2012 = vpack.c.b16 %v1412, %v1400
    %v2013 = vpack.c.b16 %v1413, %v1401
    %v2014 = vpack.c.b16 %v1426, %v1414
    %v2015 = vpack.c.b16 %v1427, %v1415
    %v2016 = vpack.c.b16 %v1428, %v1416
    %v2017 = vpack.c.b16 %v1429, %v1417
    %v2018 = vpack.c.b16 %v1430, %v1418
    %v2019 = vpack.c.b16 %v1431, %v1419
    %v2020 = vpack.c.b16 %v1432, %v1420
    %v2021 = vpack.c.b16 %v1433, %v1421
    %v2022 = vpack.c.b16 %v1434, %v1422
    %v2023 = vpack.c.b16 %v1435, %v1423
    %v2024 = vpack.c.b16 %v1436, %v1424
    %v2025 = vpack.c.b16 %v1437, %v1425
    %v2026 = vpack.c.b16 %v1450, %v1438
    %v2027 = vpack.c.b16 %v1451, %v1439
    %v2028 = vpack.c.b16 %v1452, %v1440
    %v2029 = vpack.c.b16 %v1453, %v1441
    %v2030 = vpack.c.b16 %v1454, %v1442
    %v2031 = vpack.c.b16 %v1455, %v1443
    %v2032 = vpack.c.b16 %v1456, %v1444
    %v2033 = vpack.c.b16 %v1457, %v1445
    %v2034 = vpack.c.b16 %v1458, %v1446
    %v2035 = vpack.c.b16 %v1459, %v1447
    %v2036 = vpack.c.b16 %v1460, %v1448
    %v2037 = vpack.c.b16 %v1461, %v1449
    %v2038 = vpack.c.b16 %v1474, %v1462
    %v2039 = vpack.c.b16 %v1475, %v1463
    %v2040 = vpack.c.b16 %v1476, %v1464
    %v2041 = vpack.c.b16 %v1477, %v1465
    %v2042 = vpack.c.b16 %v1478, %v1466
    %v2043 = vpack.c.b16 %v1479, %v1467
    %v2044 = vpack.c.b16 %v1480, %v1468
    %v2045 = vpack.c.b16 %v1481, %v1469
    %v2046 = vpack.c.b16 %v1482, %v1470
    %v2047 = vpack.c.b16 %v1483, %v1471
    %v2048 = vpack.c.b16 %v1484, %v1472
    %v2049 = vpack.c.b16 %v1485, %v1473
    %v2050 = vpack.c.b16 %v1498, %v1486
    %v2051 = vpack.c.b16 %v1499, %v1487
    %v2052 = vpack.c.b16 %v1500, %v1488
    %v2053 = vpack.c.b16 %v1501, %v1489
    %v2054 = vpack.c.b16 %v1502, %v1490
    %v2055 = vpack.c.b16 %v1503, %v1491
    %v2056 = vpack.c.b16 %v1504, %v1492
    %v2057 = vpack.c.b16 %v1505, %v1493
    %v2058 = vpack.c.b16 %v1506, %v1494
    %v2059 = vpack.c.b16 %v1507, %v1495
    %v2060 = vpack.c.b16 %v1508, %v1496
    %v2061 = vpack.c.b16 %v1509, %v1497
    %v2062 = vpack.c.b16 %v1522, %v1510
    %v2063 = vpack.c.b16 %v1523, %v1511
    %v2064 = vpack.c.b16 %v1524, %v1512
    %v2065 = vpack.c.b16 %v1525, %v1513
    %v2066 = vpack.c.b16 %v1526, %v1514
    %v2067 = vpack.c.b16 %v1527, %v1515
    %v2068 = vpack.c.b16 %v1528, %v1516
    %v2069 = vpack.c.b16 %v1529, %v1517
    %v2070 = vpack.c.b16 %v1530, %v1518
    %v2071 = vpack.c.b16 %v1531, %v1519
    %v2072 = vpack.c.b16 %v1532, %v1520
    %v2073 = vpack.c.b16 %v1533, %v1521
    %v2074 = vpack.c.b16 %v1546, %v1534
    %v2075 = vpack.c.b16 %v1547, %v1535
    %v2076 = vpack.c.b16 %v1548, %v1536
    %v2077 = vpack.c.b16 %v1549, %v1537
    %v2078 = vpack.c.b16 %v1550, %v1538
    %v2079 = vpack.c.b16 %v1551, %v1539
    %v2080 = vpack.c.b16 %v1552, %v1540
    %v2081 = vpack.c.b16 %v1553, %v1541
    %v2082 = vpack.c.b16 %v1554, %v1542
    %v2083 = vpack.c.b16 %v1555, %v1543
    %v2084 = vpack.c.b16 %v1556, %v1544
    %v2085 = vpack.c.b16 %v1557, %v1545
    %v2086 = vpack.c.b16 %v1570, %v1558
    %v2087 = vpack.c.b16 %v1571, %v1559
    %v2088 = vpack.c.b16 %v1572, %v1560
    %v2089 = vpack.c.b16 %v1573, %v1561
    %v2090 = vpack.c.b16 %v1574, %v1562
    %v2091 = vpack.c.b16 %v1575, %v1563
    %v2092 = vpack.c.b16 %v1576, %v1564
    %v2093 = vpack.c.b16 %v1577, %v1565
    %v2094 = vpack.c.b16 %v1578, %v1566
    %v2095 = vpack.c.b16 %v1579, %v1567
    %v2096 = vpack.c.b16 %v1580, %v1568
    %v2097 = vpack.c.b16 %v1581, %v1569
    %v2098 = vpack.c.b16 %v1594, %v1582
    %v2099 = vpack.c.b16 %v1595, %v1583
    %v2100 = vpack.c.b16 %v1596, %v1584
    %v2101 = vpack.c.b16 %v1597, %v1585
    %v2102 = vpack.c.b16 %v1598, %v1586
    %v2103 = vpack.c.b16 %v1599, %v1587
    %v2104 = vpack.c.b16 %v1600, %v1588
    %v2105 = vpack.c.b16 %v1601, %v1589
    %v2106 = vpack.c.b16 %v1602, %v1590
    %v2107 = vpack.c.b16 %v1603, %v1591
    %v2108 = vpack.c.b16 %v1604, %v1592
    %v2109 = vpack.c.b16 %v1605, %v1593
    %v2110 = vpack.c.b16 %v1618, %v1606
    %v2111 = vpack.c.b16 %v1619, %v1607
    %v2112 = vpack.c.b16 %v1620, %v1608
    %v2113 = vpack.c.b16 %v1621, %v1609
    %v2114 = vpack.c.b16 %v1622, %v1610
    %v2115 = vpack.c.b16 %v1623, %v1611
    %v2116 = vpack.c.b16 %v1624, %v1612
    %v2117 = vpack.c.b16 %v1625, %v1613
    %v2118 = vpack.c.b16 %v1626, %v1614
    %v2119 = vpack.c.b16 %v1627, %v1615
    %v2120 = vpack.c.b16 %v1628, %v1616
    %v2121 = vpack.c.b16 %v1629, %v1617
    %v2122 = vpack.c.b16 %v1642, %v1630
    %v2123 = vpack.c.b16 %v1643, %v1631
    %v2124 = vpack.c.b16 %v1644, %v1632
    %v2125 = vpack.c.b16 %v1645, %v1633
    %v2126 = vpack.c.b16 %v1646, %v1634
    %v2127 = vpack.c.b16 %v1647, %v1635
    %v2128 = vpack.c.b16 %v1648, %v1636
    %v2129 = vpack.c.b16 %v1649, %v1637
    %v2130 = vpack.c.b16 %v1650, %v1638
    %v2131 = vpack.c.b16 %v1651, %v1639
    %v2132 = vpack.c.b16 %v1652, %v1640
    %v2133 = vpack.c.b16 %v1653, %v1641
    %v2134 = vpack.c.b16 %v1666, %v1654
    %v2135 = vpack.c.b16 %v1667, %v1655
    %v2136 = vpack.c.b16 %v1668, %v1656
    %v2137 = vpack.c.b16 %v1669, %v1657
    %v2138 = vpack.c.b16 %v1670, %v1658
    %v2139 = vpack.c.b16 %v1671, %v1659
    %v2140 = vpack.c.b16 %v1672, %v1660
    %v2141 = vpack.c.b16 %v1673, %v1661
    %v2142 = vpack.c.b16 %v1674, %v1662
    %v2143 = vpack.c.b16 %v1675, %v1663
    %v2144 = vpack.c.b16 %v1676, %v1664
    %v2145 = vpack.c.b16 %v1677, %v1665
    %v2146 = vpack.c.b16 %v1690, %v1678
    %v2147 = vpack.c.b16 %v1691, %v1679
    %v2148 = vpack.c.b16 %v1692, %v1680
    %v2149 = vpack.c.b16 %v1693, %v1681
    %v2150 = vpack.c.b16 %v1694, %v1682
    %v2151 = vpack.c.b16 %v1695, %v1683
    %v2152 = vpack.c.b16 %v1696, %v1684
    %v2153 = vpack.c.b16 %v1697, %v1685
    %v2154 = vpack.c.b16 %v1698, %v1686
    %v2155 = vpack.c.b16 %v1699, %v1687
    %v2156 = vpack.c.b16 %v1700, %v1688
    %v2157 = vpack.c.b16 %v1701, %v1689
    %v2158 = vpack.c.b16 %v1714, %v1702
    %v2159 = vpack.c.b16 %v1715, %v1703
    %v2160 = vpack.c.b16 %v1716, %v1704
    %v2161 = vpack.c.b16 %v1717, %v1705
    %v2162 = vpack.c.b16 %v1718, %v1706
    %v2163 = vpack.c.b16 %v1719, %v1707
    %v2164 = vpack.c.b16 %v1720, %v1708
    %v2165 = vpack.c.b16 %v1721, %v1709
    %v2166 = vpack.c.b16 %v1722, %v1710
    %v2167 = vpack.c.b16 %v1723, %v1711
    %v2168 = vpack.c.b16 %v1724, %v1712
    %v2169 = vpack.c.b16 %v1725, %v1713
    %v2170 = vpack.c.b16 %v1738, %v1726
    %v2171 = vpack.c.b16 %v1739, %v1727
    %v2172 = vpack.c.b16 %v1740, %v1728
    %v2173 = vpack.c.b16 %v1741, %v1729
    %v2174 = vpack.c.b16 %v1742, %v1730
    %v2175 = vpack.c.b16 %v1743, %v1731
    %v2176 = vpack.c.b16 %v1744, %v1732
    %v2177 = vpack.c.b16 %v1745, %v1733
    %v2178 = vpack.c.b16 %v1746, %v1734
    %v2179 = vpack.c.b16 %v1747, %v1735
    %v2180 = vpack.c.b16 %v1748, %v1736
    %v2181 = vpack.c.b16 %v1749, %v1737
    %v2182 = vpack.c.b16 %v1762, %v1750
    %v2183 = vpack.c.b16 %v1763, %v1751
    %v2184 = vpack.c.b16 %v1764, %v1752
    %v2185 = vpack.c.b16 %v1765, %v1753
    %v2186 = vpack.c.b16 %v1766, %v1754
    %v2187 = vpack.c.b16 %v1767, %v1755
    %v2188 = vpack.c.b16 %v1768, %v1756
    %v2189 = vpack.c.b16 %v1769, %v1757
    %v2190 = vpack.c.b16 %v1770, %v1758
    %v2191 = vpack.c.b16 %v1771, %v1759
    %v2192 = vpack.c.b16 %v1772, %v1760
    %v2193 = vpack.c.b16 %v1773, %v1761
    %v2194 = vpack.c.b16 %v1786, %v1774
    %v2195 = vpack.c.b16 %v1787, %v1775
    %v2196 = vpack.c.b16 %v1788, %v1776
    %v2197 = vpack.c.b16 %v1789, %v1777
    %v2198 = vpack.c.b16 %v1790, %v1778
    %v2199 = vpack.c.b16 %v1791, %v1779
    %v2200 = vpack.c.b16 %v1792, %v1780
    %v2201 = vpack.c.b16 %v1793, %v1781
    %v2202 = vpack.c.b16 %v1794, %v1782
    %v2203 = vpack.c.b16 %v1795, %v1783
    %v2204 = vpack.c.b16 %v1796, %v1784
    %v2205 = vpack.c.b16 %v1797, %v1785
    %v2206 = vpack.c.b16 %v1810, %v1798
    %v2207 = vpack.c.b16 %v1811, %v1799
    %v2208 = vpack.c.b16 %v1812, %v1800
    %v2209 = vpack.c.b16 %v1813, %v1801
    %v2210 = vpack.c.b16 %v1814, %v1802
    %v2211 = vpack.c.b16 %v1815, %v1803
    %v2212 = vpack.c.b16 %v1816, %v1804
    %v2213 = vpack.c.b16 %v1817, %v1805
    %v2214 = vpack.c.b16 %v1818, %v1806
    %v2215 = vpack.c.b16 %v1819, %v1807
    %v2216 = vpack.c.b16 %v1820, %v1808
    %v2217 = vpack.c.b16 %v1821, %v1809
    %v2218 = vpack.c.b16 %v1834, %v1822
    %v2219 = vpack.c.b16 %v1835, %v1823
    %v2220 = vpack.c.b16 %v1836, %v1824
    %v2221 = vpack.c.b16 %v1837, %v1825
    %v2222 = vpack.c.b16 %v1838, %v1826
    %v2223 = vpack.c.b16 %v1839, %v1827
    %v2224 = vpack.c.b16 %v1840, %v1828
    %v2225 = vpack.c.b16 %v1841, %v1829
    %v2226 = vpack.c.b16 %v1842, %v1830
    %v2227 = vpack.c.b16 %v1843, %v1831
    %v2228 = vpack.c.b16 %v1844, %v1832
    %v2229 = vpack.c.b16 %v1845, %v1833
    %2614 = vmatprep.subr.bf16.mxu0 %v1847
    %2615 = vmatpush1.bf16.msra.mxu0 %v1846
    %2616 = vmatprep.subr.bf16.mxu0 %v1859
    %2617 = vmatpush1.bf16.msra.mxu0 %v1858
    %2618 = vmatprep.subr.bf16.mxu0 %v1871
    %2619 = vmatpush1.bf16.msra.mxu0 %v1870
    %2620 = vmatprep.subr.bf16.mxu0 %v1883
    %2621 = vmatpush1.bf16.msra.mxu0 %v1882
    %2622 = vmatprep.subr.bf16.mxu0 %v1895
    %2623 = vmatpush1.bf16.msra.mxu0 %v1894
    %2624 = vmatprep.subr.bf16.mxu0 %v1907
    %2625 = vmatpush1.bf16.msra.mxu0 %v1906
    %2626 = vmatprep.subr.bf16.mxu0 %v1919
    %2627 = vmatpush1.bf16.msra.mxu0 %v1918
    %2628 = vmatprep.subr.bf16.mxu0 %v1931
    %2629 = vmatpush1.bf16.msra.mxu0 %v1930
    %2630 = vmatprep.subr.bf16.mxu0 %v1943
    %2631 = vmatpush1.bf16.msra.mxu0 %v1942
    %2632 = vmatprep.subr.bf16.mxu0 %v1955
    %2633 = vmatpush1.bf16.msra.mxu0 %v1954
    %2634 = vmatprep.subr.bf16.mxu0 %v1967
    %2635 = vmatpush1.bf16.msra.mxu0 %v1966
    %2636 = vmatprep.subr.bf16.mxu0 %v1979
    %2637 = vmatpush1.bf16.msra.mxu0 %v1978
    %2638 = vmatprep.subr.bf16.mxu0 %v1991
    %2639 = vmatpush1.bf16.msra.mxu0 %v1990
    %2640 = vmatprep.subr.bf16.mxu0 %v2003
    %2641 = vmatpush1.bf16.msra.mxu0 %v2002
    %2642 = vmatprep.subr.bf16.mxu0 %v2015
    %2643 = vmatpush1.bf16.msra.mxu0 %v2014
    %2644 = vmatprep.subr.bf16.mxu0 %v2027
    %2645 = vmatpush1.bf16.msra.mxu0 %v2026
    %2646 = vmatprep.mubr.bf16.mxu0 %v183
    %2647 = vmatmul.mubr.bf16.gmra.mrb[0].mxu0 %v182
    %v2648 = vpop.f32.mrb[0].mxu0
    %v2649 = vadd.f32 %v637, %v2648
    %v2650 = vpop.f32.mrb[0].mxu0
    %v2651 = vadd.f32 %v641, %v2650
    %v2652 = vpop.f32.mrb[0].mxu0
    %v2653 = vadd.f32 %v637, %v2652
    %v2654 = vpop.f32.mrb[0].mxu0
    %v2655 = vadd.f32 %v641, %v2654
    %2656 = vmatprep.mubr.bf16.mxu0 %v187
    %2657 = vmatmul.mubr.bf16.gmra.mrb[0].mxu0 %v186
    %v2658 = vpop.f32.mrb[0].mxu0
    %v2659 = vadd.f32 %v637, %v2658
    %v2660 = vpop.f32.mrb[0].mxu0
    %v2661 = vadd.f32 %v641, %v2660
    %v2662 = vpop.f32.mrb[0].mxu0
    %v2663 = vadd.f32 %v637, %v2662
    %v2664 = vpop.f32.mrb[0].mxu0
    %v2665 = vadd.f32 %v641, %v2664
    %2666 = vmatprep.mubr.bf16.mxu0 %v191
    %2667 = vmatmul.mubr.bf16.gmra.mrb[0].mxu0 %v190
    %v2668 = vpop.f32.mrb[0].mxu0
    %v2669 = vadd.f32 %v637, %v2668
    %v2670 = vpop.f32.mrb[0].mxu0
    %v2671 = vadd.f32 %v641, %v2670
    %v2672 = vpop.f32.mrb[0].mxu0
    %v2673 = vadd.f32 %v637, %v2672
    %v2674 = vpop.f32.mrb[0].mxu0
    %v2675 = vadd.f32 %v641, %v2674
    %2676 = vmatprep.mubr.bf16.mxu0 %v195
    %2677 = vmatmul.mubr.bf16.gmra.mrb[0].mxu0 %v194
    %v2678 = vpop.f32.mrb[0].mxu0
    %v2679 = vadd.f32 %v637, %v2678
    %v2680 = vpop.f32.mrb[0].mxu0
    %v2681 = vadd.f32 %v641, %v2680
    %v2682 = vpop.f32.mrb[0].mxu0
    %v2683 = vadd.f32 %v637, %v2682
    %v2684 = vpop.f32.mrb[0].mxu0
    %v2685 = vadd.f32 %v641, %v2684
    %2686 = vmatprep.mubr.bf16.mxu0 %v199
    %2687 = vmatmul.mubr.bf16.gmra.mrb[0].mxu0 %v198
    %v2688 = vpop.f32.mrb[0].mxu0
    %v2689 = vadd.f32 %v637, %v2688
    %v2690 = vpop.f32.mrb[0].mxu0
    %v2691 = vadd.f32 %v641, %v2690
    %v2692 = vpop.f32.mrb[0].mxu0
    %v2693 = vadd.f32 %v637, %v2692
    %v2694 = vpop.f32.mrb[0].mxu0
    %v2695 = vadd.f32 %v641, %v2694
    %2696 = vmatprep.mubr.bf16.mxu0 %v203
    %2697 = vmatmul.mubr.bf16.gmra.mrb[0].mxu0 %v202
    %v2698 = vpop.f32.mrb[0].mxu0
    %v2699 = vadd.f32 %v637, %v2698
    %v2700 = vpop.f32.mrb[0].mxu0
    %v2701 = vadd.f32 %v641, %v2700
    %v2702 = vpop.f32.mrb[0].mxu0
    %v2703 = vadd.f32 %v637, %v2702
    %v2704 = vpop.f32.mrb[0].mxu0
    %v2705 = vadd.f32 %v641, %v2704
    %2706 = vmatprep.mubr.bf16.mxu0 %v207
    %2707 = vmatmul.mubr.bf16.gmra.mrb[0].mxu0 %v206
    %v2708 = vpop.f32.mrb[0].mxu0
    %v2709 = vadd.f32 %v637, %v2708
    %v2710 = vpop.f32.mrb[0].mxu0
    %v2711 = vadd.f32 %v641, %v2710
    %v2712 = vpop.f32.mrb[0].mxu0
    %v2713 = vadd.f32 %v637, %v2712
    %v2714 = vpop.f32.mrb[0].mxu0
    %v2715 = vadd.f32 %v641, %v2714
    %2716 = vmatprep.mubr.bf16.mxu0 %v211
    %2717 = vmatmul.mubr.bf16.gmra.mrb[0].mxu0 %v210
    %v2718 = vpop.f32.mrb[0].mxu0
    %v2719 = vadd.f32 %v637, %v2718
    %v2720 = vpop.f32.mrb[0].mxu0
    %v2721 = vadd.f32 %v641, %v2720
    %v2722 = vpop.f32.mrb[0].mxu0
    %v2723 = vadd.f32 %v637, %v2722
    %v2724 = vpop.f32.mrb[0].mxu0
    %v2725 = vadd.f32 %v641, %v2724
    %2726 = vmatprep.mubr.bf16.mxu0 %v215
    %2727 = vmatmul.mubr.bf16.gmra.mrb[0].mxu0 %v214
    %v2728 = vpop.f32.mrb[0].mxu0
    %v2729 = vadd.f32 %v637, %v2728
    %v2730 = vpop.f32.mrb[0].mxu0
    %v2731 = vadd.f32 %v641, %v2730
    %v2732 = vpop.f32.mrb[0].mxu0
    %v2733 = vadd.f32 %v637, %v2732
    %v2734 = vpop.f32.mrb[0].mxu0
    %v2735 = vadd.f32 %v641, %v2734
    %2736 = vmatprep.mubr.bf16.mxu0 %v219
    %2737 = vmatmul.mubr.bf16.gmra.mrb[0].mxu0 %v218
    %v2738 = vpop.f32.mrb[0].mxu0
    %v2739 = vadd.f32 %v637, %v2738
    %v2740 = vpop.f32.mrb[0].mxu0
    %v2741 = vadd.f32 %v641, %v2740
    %v2742 = vpop.f32.mrb[0].mxu0
    %v2743 = vadd.f32 %v637, %v2742
    %v2744 = vpop.f32.mrb[0].mxu0
    %v2745 = vadd.f32 %v641, %v2744
    %2746 = vmatprep.mubr.bf16.mxu0 %v223
    %2747 = vmatmul.mubr.bf16.gmra.mrb[0].mxu0 %v222
    %v2748 = vpop.f32.mrb[0].mxu0
    %v2749 = vadd.f32 %v637, %v2748
    %v2750 = vpop.f32.mrb[0].mxu0
    %v2751 = vadd.f32 %v641, %v2750
    %v2752 = vpop.f32.mrb[0].mxu0
    %v2753 = vadd.f32 %v637, %v2752
    %v2754 = vpop.f32.mrb[0].mxu0
    %v2755 = vadd.f32 %v641, %v2754
    %2756 = vmatprep.mubr.bf16.mxu0 %v227
    %2757 = vmatmul.mubr.bf16.gmra.mrb[0].mxu0 %v226
    %v2758 = vpop.f32.mrb[0].mxu0
    %v2759 = vadd.f32 %v637, %v2758
    %v2760 = vpop.f32.mrb[0].mxu0
    %v2761 = vadd.f32 %v641, %v2760
    %v2762 = vpop.f32.mrb[0].mxu0
    %v2763 = vadd.f32 %v637, %v2762
    %v2764 = vpop.f32.mrb[0].mxu0
    %v2765 = vadd.f32 %v641, %v2764
    %2766 = vmatprep.mubr.bf16.mxu0 %v231
    %2767 = vmatmul.mubr.bf16.gmra.mrb[0].mxu0 %v230
    %v2768 = vpop.f32.mrb[0].mxu0
    %v2769 = vadd.f32 %v637, %v2768
    %v2770 = vpop.f32.mrb[0].mxu0
    %v2771 = vadd.f32 %v641, %v2770
    %v2772 = vpop.f32.mrb[0].mxu0
    %v2773 = vadd.f32 %v637, %v2772
    %v2774 = vpop.f32.mrb[0].mxu0
    %v2775 = vadd.f32 %v641, %v2774
    %2776 = vmatprep.mubr.bf16.mxu0 %v235
    %2777 = vmatmul.mubr.bf16.gmra.mrb[0].mxu0 %v234
    %v2778 = vpop.f32.mrb[0].mxu0
    %v2779 = vadd.f32 %v637, %v2778
    %v2780 = vpop.f32.mrb[0].mxu0
    %v2781 = vadd.f32 %v641, %v2780
    %v2782 = vpop.f32.mrb[0].mxu0
    %v2783 = vadd.f32 %v637, %v2782
    %v2784 = vpop.f32.mrb[0].mxu0
    %v2785 = vadd.f32 %v641, %v2784
    %2786 = vmatprep.mubr.bf16.mxu0 %v239
    %2787 = vmatmul.mubr.bf16.gmra.mrb[0].mxu0 %v238
    %v2788 = vpop.f32.mrb[0].mxu0
    %v2789 = vadd.f32 %v637, %v2788
    %v2790 = vpop.f32.mrb[0].mxu0
    %v2791 = vadd.f32 %v641, %v2790
    %v2792 = vpop.f32.mrb[0].mxu0
    %v2793 = vadd.f32 %v637, %v2792
    %v2794 = vpop.f32.mrb[0].mxu0
    %v2795 = vadd.f32 %v641, %v2794
    %2796 = vmatprep.mubr.bf16.mxu0 %v243
    %2797 = vmatmul.mubr.bf16.gmra.mrb[0].mxu0 %v242
    %v2798 = vpop.f32.mrb[0].mxu0
    %v2799 = vadd.f32 %v637, %v2798
    %v2800 = vpop.f32.mrb[0].mxu0
    %v2801 = vadd.f32 %v641, %v2800
    %v2802 = vpop.f32.mrb[0].mxu0
    %v2803 = vadd.f32 %v637, %v2802
    %v2804 = vpop.f32.mrb[0].mxu0
    %v2805 = vadd.f32 %v641, %v2804
    %2806 = vdwg.mxu0
    %2807 = vmatprep.subr.bf16.mxu0 %v2039
    %2808 = vmatpush1.bf16.msra.mxu0 %v2038
    %2809 = vmatprep.subr.bf16.mxu0 %v2051
    %2810 = vmatpush1.bf16.msra.mxu0 %v2050
    %2811 = vmatprep.subr.bf16.mxu0 %v2063
    %2812 = vmatpush1.bf16.msra.mxu0 %v2062
    %2813 = vmatprep.subr.bf16.mxu0 %v2075
    %2814 = vmatpush1.bf16.msra.mxu0 %v2074
    %2815 = vmatprep.subr.bf16.mxu0 %v2087
    %2816 = vmatpush1.bf16.msra.mxu0 %v2086
    %2817 = vmatprep.subr.bf16.mxu0 %v2099
    %2818 = vmatpush1.bf16.msra.mxu0 %v2098
    %2819 = vmatprep.subr.bf16.mxu0 %v2111
    %2820 = vmatpush1.bf16.msra.mxu0 %v2110
    %2821 = vmatprep.subr.bf16.mxu0 %v2123
    %2822 = vmatpush1.bf16.msra.mxu0 %v2122
    %2823 = vmatprep.subr.bf16.mxu0 %v2135
    %2824 = vmatpush1.bf16.msra.mxu0 %v2134
    %2825 = vmatprep.subr.bf16.mxu0 %v2147
    %2826 = vmatpush1.bf16.msra.mxu0 %v2146
    %2827 = vmatprep.subr.bf16.mxu0 %v2159
    %2828 = vmatpush1.bf16.msra.mxu0 %v2158
    %2829 = vmatprep.subr.bf16.mxu0 %v2171
    %2830 = vmatpush1.bf16.msra.mxu0 %v2170
    %2831 = vmatprep.subr.bf16.mxu0 %v2183
    %2832 = vmatpush1.bf16.msra.mxu0 %v2182
    %2833 = vmatprep.subr.bf16.mxu0 %v2195
    %2834 = vmatpush1.bf16.msra.mxu0 %v2194
    %2835 = vmatprep.subr.bf16.mxu0 %v2207
    %2836 = vmatpush1.bf16.msra.mxu0 %v2206
    %2837 = vmatprep.subr.bf16.mxu0 %v2219
    %2838 = vmatpush1.bf16.msra.mxu0 %v2218
    %2839 = vmatprep.mubr.bf16.mxu0 %v185
    %2840 = vmatmul.mubr.bf16.gmra.mrb[0].mxu0 %v184
    %v2841 = vpop.f32.mrb[0].mxu0
    %v2842 = vadd.f32 %v2649, %v2841
    %v2843 = vpop.f32.mrb[0].mxu0
    %v2844 = vadd.f32 %v2651, %v2843
    %v2845 = vpop.f32.mrb[0].mxu0
    %v2846 = vadd.f32 %v2653, %v2845
    %v2847 = vpop.f32.mrb[0].mxu0
    %v2848 = vadd.f32 %v2655, %v2847
    %2849 = vmatprep.mubr.bf16.mxu0 %v189
    %2850 = vmatmul.mubr.bf16.gmra.mrb[0].mxu0 %v188
    %v2851 = vpop.f32.mrb[0].mxu0
    %v2852 = vadd.f32 %v2659, %v2851
    %v2853 = vpop.f32.mrb[0].mxu0
    %v2854 = vadd.f32 %v2661, %v2853
    %v2855 = vpop.f32.mrb[0].mxu0
    %v2856 = vadd.f32 %v2663, %v2855
    %v2857 = vpop.f32.mrb[0].mxu0
    %v2858 = vadd.f32 %v2665, %v2857
    %2859 = vmatprep.mubr.bf16.mxu0 %v193
    %2860 = vmatmul.mubr.bf16.gmra.mrb[0].mxu0 %v192
    %v2861 = vpop.f32.mrb[0].mxu0
    %v2862 = vadd.f32 %v2669, %v2861
    %v2863 = vpop.f32.mrb[0].mxu0
    %v2864 = vadd.f32 %v2671, %v2863
    %v2865 = vpop.f32.mrb[0].mxu0
    %v2866 = vadd.f32 %v2673, %v2865
    %v2867 = vpop.f32.mrb[0].mxu0
    %v2868 = vadd.f32 %v2675, %v2867
    %2869 = vmatprep.mubr.bf16.mxu0 %v197
    %2870 = vmatmul.mubr.bf16.gmra.mrb[0].mxu0 %v196
    %v2871 = vpop.f32.mrb[0].mxu0
    %v2872 = vadd.f32 %v2679, %v2871
    %v2873 = vpop.f32.mrb[0].mxu0
    %v2874 = vadd.f32 %v2681, %v2873
    %v2875 = vpop.f32.mrb[0].mxu0
    %v2876 = vadd.f32 %v2683, %v2875
    %v2877 = vpop.f32.mrb[0].mxu0
    %v2878 = vadd.f32 %v2685, %v2877
    %2879 = vmatprep.mubr.bf16.mxu0 %v201
    %2880 = vmatmul.mubr.bf16.gmra.mrb[0].mxu0 %v200
    %v2881 = vpop.f32.mrb[0].mxu0
    %v2882 = vadd.f32 %v2689, %v2881
    %v2883 = vpop.f32.mrb[0].mxu0
    %v2884 = vadd.f32 %v2691, %v2883
    %v2885 = vpop.f32.mrb[0].mxu0
    %v2886 = vadd.f32 %v2693, %v2885
    %v2887 = vpop.f32.mrb[0].mxu0
    %v2888 = vadd.f32 %v2695, %v2887
    %2889 = vmatprep.mubr.bf16.mxu0 %v205
    %2890 = vmatmul.mubr.bf16.gmra.mrb[0].mxu0 %v204
    %v2891 = vpop.f32.mrb[0].mxu0
    %v2892 = vadd.f32 %v2699, %v2891
    %v2893 = vpop.f32.mrb[0].mxu0
    %v2894 = vadd.f32 %v2701, %v2893
    %v2895 = vpop.f32.mrb[0].mxu0
    %v2896 = vadd.f32 %v2703, %v2895
    %v2897 = vpop.f32.mrb[0].mxu0
    %v2898 = vadd.f32 %v2705, %v2897
    %2899 = vmatprep.mubr.bf16.mxu0 %v209
    %2900 = vmatmul.mubr.bf16.gmra.mrb[0].mxu0 %v208
    %v2901 = vpop.f32.mrb[0].mxu0
    %v2902 = vadd.f32 %v2709, %v2901
    %v2903 = vpop.f32.mrb[0].mxu0
    %v2904 = vadd.f32 %v2711, %v2903
    %v2905 = vpop.f32.mrb[0].mxu0
    %v2906 = vadd.f32 %v2713, %v2905
    %v2907 = vpop.f32.mrb[0].mxu0
    %v2908 = vadd.f32 %v2715, %v2907
    %2909 = vmatprep.mubr.bf16.mxu0 %v213
    %2910 = vmatmul.mubr.bf16.gmra.mrb[0].mxu0 %v212
    %v2911 = vpop.f32.mrb[0].mxu0
    %v2912 = vadd.f32 %v2719, %v2911
    %v2913 = vpop.f32.mrb[0].mxu0
    %v2914 = vadd.f32 %v2721, %v2913
    %v2915 = vpop.f32.mrb[0].mxu0
    %v2916 = vadd.f32 %v2723, %v2915
    %v2917 = vpop.f32.mrb[0].mxu0
    %v2918 = vadd.f32 %v2725, %v2917
    %2919 = vmatprep.mubr.bf16.mxu0 %v217
    %2920 = vmatmul.mubr.bf16.gmra.mrb[0].mxu0 %v216
    %v2921 = vpop.f32.mrb[0].mxu0
    %v2922 = vadd.f32 %v2729, %v2921
    %v2923 = vpop.f32.mrb[0].mxu0
    %v2924 = vadd.f32 %v2731, %v2923
    %v2925 = vpop.f32.mrb[0].mxu0
    %v2926 = vadd.f32 %v2733, %v2925
    %v2927 = vpop.f32.mrb[0].mxu0
    %v2928 = vadd.f32 %v2735, %v2927
    %2929 = vmatprep.mubr.bf16.mxu0 %v221
    %2930 = vmatmul.mubr.bf16.gmra.mrb[0].mxu0 %v220
    %v2931 = vpop.f32.mrb[0].mxu0
    %v2932 = vadd.f32 %v2739, %v2931
    %v2933 = vpop.f32.mrb[0].mxu0
    %v2934 = vadd.f32 %v2741, %v2933
    %v2935 = vpop.f32.mrb[0].mxu0
    %v2936 = vadd.f32 %v2743, %v2935
    %v2937 = vpop.f32.mrb[0].mxu0
    %v2938 = vadd.f32 %v2745, %v2937
    %2939 = vmatprep.mubr.bf16.mxu0 %v225
    %2940 = vmatmul.mubr.bf16.gmra.mrb[0].mxu0 %v224
    %v2941 = vpop.f32.mrb[0].mxu0
    %v2942 = vadd.f32 %v2749, %v2941
    %v2943 = vpop.f32.mrb[0].mxu0
    %v2944 = vadd.f32 %v2751, %v2943
    %v2945 = vpop.f32.mrb[0].mxu0
    %v2946 = vadd.f32 %v2753, %v2945
    %v2947 = vpop.f32.mrb[0].mxu0
    %v2948 = vadd.f32 %v2755, %v2947
    %2949 = vmatprep.mubr.bf16.mxu0 %v229
    %2950 = vmatmul.mubr.bf16.gmra.mrb[0].mxu0 %v228
    %v2951 = vpop.f32.mrb[0].mxu0
    %v2952 = vadd.f32 %v2759, %v2951
    %v2953 = vpop.f32.mrb[0].mxu0
    %v2954 = vadd.f32 %v2761, %v2953
    %v2955 = vpop.f32.mrb[0].mxu0
    %v2956 = vadd.f32 %v2763, %v2955
    %v2957 = vpop.f32.mrb[0].mxu0
    %v2958 = vadd.f32 %v2765, %v2957
    %2959 = vmatprep.mubr.bf16.mxu0 %v233
    %2960 = vmatmul.mubr.bf16.gmra.mrb[0].mxu0 %v232
    %v2961 = vpop.f32.mrb[0].mxu0
    %v2962 = vadd.f32 %v2769, %v2961
    %v2963 = vpop.f32.mrb[0].mxu0
    %v2964 = vadd.f32 %v2771, %v2963
    %v2965 = vpop.f32.mrb[0].mxu0
    %v2966 = vadd.f32 %v2773, %v2965
    %v2967 = vpop.f32.mrb[0].mxu0
    %v2968 = vadd.f32 %v2775, %v2967
    %2969 = vmatprep.mubr.bf16.mxu0 %v237
    %2970 = vmatmul.mubr.bf16.gmra.mrb[0].mxu0 %v236
    %v2971 = vpop.f32.mrb[0].mxu0
    %v2972 = vadd.f32 %v2779, %v2971
    %v2973 = vpop.f32.mrb[0].mxu0
    %v2974 = vadd.f32 %v2781, %v2973
    %v2975 = vpop.f32.mrb[0].mxu0
    %v2976 = vadd.f32 %v2783, %v2975
    %v2977 = vpop.f32.mrb[0].mxu0
    %v2978 = vadd.f32 %v2785, %v2977
    %2979 = vmatprep.mubr.bf16.mxu0 %v241
    %2980 = vmatmul.mubr.bf16.gmra.mrb[0].mxu0 %v240
    %v2981 = vpop.f32.mrb[0].mxu0
    %v2982 = vadd.f32 %v2789, %v2981
    %v2983 = vpop.f32.mrb[0].mxu0
    %v2984 = vadd.f32 %v2791, %v2983
    %v2985 = vpop.f32.mrb[0].mxu0
    %v2986 = vadd.f32 %v2793, %v2985
    %v2987 = vpop.f32.mrb[0].mxu0
    %v2988 = vadd.f32 %v2795, %v2987
    %2989 = vmatprep.mubr.bf16.mxu0 %v245
    %2990 = vmatmul.mubr.bf16.gmra.mrb[0].mxu0 %v244
    %v2991 = vpop.f32.mrb[0].mxu0
    %v2992 = vadd.f32 %v2799, %v2991
    %v2993 = vpop.f32.mrb[0].mxu0
    %v2994 = vadd.f32 %v2801, %v2993
    %v2995 = vpop.f32.mrb[0].mxu0
    %v2996 = vadd.f32 %v2803, %v2995
    %v2997 = vpop.f32.mrb[0].mxu0
    %v2998 = vadd.f32 %v2805, %v2997
    %2999 = vdwg.mxu0
    %3000 = vmatprep.subr.bf16.mxu0 %v1849
    %3001 = vmatpush1.bf16.msra.mxu0 %v1848
    %3002 = vmatprep.subr.bf16.mxu0 %v1861
    %3003 = vmatpush1.bf16.msra.mxu0 %v1860
    %3004 = vmatprep.subr.bf16.mxu0 %v1873
    %3005 = vmatpush1.bf16.msra.mxu0 %v1872
    %3006 = vmatprep.subr.bf16.mxu0 %v1885
    %3007 = vmatpush1.bf16.msra.mxu0 %v1884
    %3008 = vmatprep.subr.bf16.mxu0 %v1897
    %3009 = vmatpush1.bf16.msra.mxu0 %v1896
    %3010 = vmatprep.subr.bf16.mxu0 %v1909
    %3011 = vmatpush1.bf16.msra.mxu0 %v1908
    %3012 = vmatprep.subr.bf16.mxu0 %v1921
    %3013 = vmatpush1.bf16.msra.mxu0 %v1920
    %3014 = vmatprep.subr.bf16.mxu0 %v1933
    %3015 = vmatpush1.bf16.msra.mxu0 %v1932
    %3016 = vmatprep.subr.bf16.mxu0 %v1945
    %3017 = vmatpush1.bf16.msra.mxu0 %v1944
    %3018 = vmatprep.subr.bf16.mxu0 %v1957
    %3019 = vmatpush1.bf16.msra.mxu0 %v1956
    %3020 = vmatprep.subr.bf16.mxu0 %v1969
    %3021 = vmatpush1.bf16.msra.mxu0 %v1968
    %3022 = vmatprep.subr.bf16.mxu0 %v1981
    %3023 = vmatpush1.bf16.msra.mxu0 %v1980
    %3024 = vmatprep.subr.bf16.mxu0 %v1993
    %3025 = vmatpush1.bf16.msra.mxu0 %v1992
    %3026 = vmatprep.subr.bf16.mxu0 %v2005
    %3027 = vmatpush1.bf16.msra.mxu0 %v2004
    %3028 = vmatprep.subr.bf16.mxu0 %v2017
    %3029 = vmatpush1.bf16.msra.mxu0 %v2016
    %3030 = vmatprep.subr.bf16.mxu0 %v2029
    %3031 = vmatpush1.bf16.msra.mxu0 %v2028
    %3032 = vmatprep.mubr.bf16.mxu0 %v183
    %3033 = vmatmul.mubr.bf16.gmra.mrb[0].mxu0 %v182
    %v3034 = vpop.f32.mrb[0].mxu0
    %v3035 = vadd.f32 %v645, %v3034
    %v3036 = vpop.f32.mrb[0].mxu0
    %v3037 = vadd.f32 %v649, %v3036
    %v3038 = vpop.f32.mrb[0].mxu0
    %v3039 = vadd.f32 %v645, %v3038
    %v3040 = vpop.f32.mrb[0].mxu0
    %v3041 = vadd.f32 %v649, %v3040
    %3042 = vmatprep.mubr.bf16.mxu0 %v187
    %3043 = vmatmul.mubr.bf16.gmra.mrb[0].mxu0 %v186
    %v3044 = vpop.f32.mrb[0].mxu0
    %v3045 = vadd.f32 %v645, %v3044
    %v3046 = vpop.f32.mrb[0].mxu0
    %v3047 = vadd.f32 %v649, %v3046
    %v3048 = vpop.f32.mrb[0].mxu0
    %v3049 = vadd.f32 %v645, %v3048
    %v3050 = vpop.f32.mrb[0].mxu0
    %v3051 = vadd.f32 %v649, %v3050
    %3052 = vmatprep.mubr.bf16.mxu0 %v191
    %3053 = vmatmul.mubr.bf16.gmra.mrb[0].mxu0 %v190
    %v3054 = vpop.f32.mrb[0].mxu0
    %v3055 = vadd.f32 %v645, %v3054
    %v3056 = vpop.f32.mrb[0].mxu0
    %v3057 = vadd.f32 %v649, %v3056
    %v3058 = vpop.f32.mrb[0].mxu0
    %v3059 = vadd.f32 %v645, %v3058
    %v3060 = vpop.f32.mrb[0].mxu0
    %v3061 = vadd.f32 %v649, %v3060
    %3062 = vmatprep.mubr.bf16.mxu0 %v195
    %3063 = vmatmul.mubr.bf16.gmra.mrb[0].mxu0 %v194
    %v3064 = vpop.f32.mrb[0].mxu0
    %v3065 = vadd.f32 %v645, %v3064
    %v3066 = vpop.f32.mrb[0].mxu0
    %v3067 = vadd.f32 %v649, %v3066
    %v3068 = vpop.f32.mrb[0].mxu0
    %v3069 = vadd.f32 %v645, %v3068
    %v3070 = vpop.f32.mrb[0].mxu0
    %v3071 = vadd.f32 %v649, %v3070
    %3072 = vmatprep.mubr.bf16.mxu0 %v199
    %3073 = vmatmul.mubr.bf16.gmra.mrb[0].mxu0 %v198
    %v3074 = vpop.f32.mrb[0].mxu0
    %v3075 = vadd.f32 %v645, %v3074
    %v3076 = vpop.f32.mrb[0].mxu0
    %v3077 = vadd.f32 %v649, %v3076
    %v3078 = vpop.f32.mrb[0].mxu0
    %v3079 = vadd.f32 %v645, %v3078
    %v3080 = vpop.f32.mrb[0].mxu0
    %v3081 = vadd.f32 %v649, %v3080
    %3082 = vmatprep.mubr.bf16.mxu0 %v203
    %3083 = vmatmul.mubr.bf16.gmra.mrb[0].mxu0 %v202
    %v3084 = vpop.f32.mrb[0].mxu0
    %v3085 = vadd.f32 %v645, %v3084
    %v3086 = vpop.f32.mrb[0].mxu0
    %v3087 = vadd.f32 %v649, %v3086
    %v3088 = vpop.f32.mrb[0].mxu0
    %v3089 = vadd.f32 %v645, %v3088
    %v3090 = vpop.f32.mrb[0].mxu0
    %v3091 = vadd.f32 %v649, %v3090
    %3092 = vmatprep.mubr.bf16.mxu0 %v207
    %3093 = vmatmul.mubr.bf16.gmra.mrb[0].mxu0 %v206
    %v3094 = vpop.f32.mrb[0].mxu0
    %v3095 = vadd.f32 %v645, %v3094
    %v3096 = vpop.f32.mrb[0].mxu0
    %v3097 = vadd.f32 %v649, %v3096
    %v3098 = vpop.f32.mrb[0].mxu0
    %v3099 = vadd.f32 %v645, %v3098
    %v3100 = vpop.f32.mrb[0].mxu0
    %v3101 = vadd.f32 %v649, %v3100
    %3102 = vmatprep.mubr.bf16.mxu0 %v211
    %3103 = vmatmul.mubr.bf16.gmra.mrb[0].mxu0 %v210
    %v3104 = vpop.f32.mrb[0].mxu0
    %v3105 = vadd.f32 %v645, %v3104
    %v3106 = vpop.f32.mrb[0].mxu0
    %v3107 = vadd.f32 %v649, %v3106
    %v3108 = vpop.f32.mrb[0].mxu0
    %v3109 = vadd.f32 %v645, %v3108
    %v3110 = vpop.f32.mrb[0].mxu0
    %v3111 = vadd.f32 %v649, %v3110
    %3112 = vmatprep.mubr.bf16.mxu0 %v215
    %3113 = vmatmul.mubr.bf16.gmra.mrb[0].mxu0 %v214
    %v3114 = vpop.f32.mrb[0].mxu0
    %v3115 = vadd.f32 %v645, %v3114
    %v3116 = vpop.f32.mrb[0].mxu0
    %v3117 = vadd.f32 %v649, %v3116
    %v3118 = vpop.f32.mrb[0].mxu0
    %v3119 = vadd.f32 %v645, %v3118
    %v3120 = vpop.f32.mrb[0].mxu0
    %v3121 = vadd.f32 %v649, %v3120
    %3122 = vmatprep.mubr.bf16.mxu0 %v219
    %3123 = vmatmul.mubr.bf16.gmra.mrb[0].mxu0 %v218
    %v3124 = vpop.f32.mrb[0].mxu0
    %v3125 = vadd.f32 %v645, %v3124
    %v3126 = vpop.f32.mrb[0].mxu0
    %v3127 = vadd.f32 %v649, %v3126
    %v3128 = vpop.f32.mrb[0].mxu0
    %v3129 = vadd.f32 %v645, %v3128
    %v3130 = vpop.f32.mrb[0].mxu0
    %v3131 = vadd.f32 %v649, %v3130
    %3132 = vmatprep.mubr.bf16.mxu0 %v223
    %3133 = vmatmul.mubr.bf16.gmra.mrb[0].mxu0 %v222
    %v3134 = vpop.f32.mrb[0].mxu0
    %v3135 = vadd.f32 %v645, %v3134
    %v3136 = vpop.f32.mrb[0].mxu0
    %v3137 = vadd.f32 %v649, %v3136
    %v3138 = vpop.f32.mrb[0].mxu0
    %v3139 = vadd.f32 %v645, %v3138
    %v3140 = vpop.f32.mrb[0].mxu0
    %v3141 = vadd.f32 %v649, %v3140
    %3142 = vmatprep.mubr.bf16.mxu0 %v227
    %3143 = vmatmul.mubr.bf16.gmra.mrb[0].mxu0 %v226
    %v3144 = vpop.f32.mrb[0].mxu0
    %v3145 = vadd.f32 %v645, %v3144
    %v3146 = vpop.f32.mrb[0].mxu0
    %v3147 = vadd.f32 %v649, %v3146
    %v3148 = vpop.f32.mrb[0].mxu0
    %v3149 = vadd.f32 %v645, %v3148
    %v3150 = vpop.f32.mrb[0].mxu0
    %v3151 = vadd.f32 %v649, %v3150
    %3152 = vmatprep.mubr.bf16.mxu0 %v231
    %3153 = vmatmul.mubr.bf16.gmra.mrb[0].mxu0 %v230
    %v3154 = vpop.f32.mrb[0].mxu0
    %v3155 = vadd.f32 %v645, %v3154
    %v3156 = vpop.f32.mrb[0].mxu0
    %v3157 = vadd.f32 %v649, %v3156
    %v3158 = vpop.f32.mrb[0].mxu0
    %v3159 = vadd.f32 %v645, %v3158
    %v3160 = vpop.f32.mrb[0].mxu0
    %v3161 = vadd.f32 %v649, %v3160
    %3162 = vmatprep.mubr.bf16.mxu0 %v235
    %3163 = vmatmul.mubr.bf16.gmra.mrb[0].mxu0 %v234
    %v3164 = vpop.f32.mrb[0].mxu0
    %v3165 = vadd.f32 %v645, %v3164
    %v3166 = vpop.f32.mrb[0].mxu0
    %v3167 = vadd.f32 %v649, %v3166
    %v3168 = vpop.f32.mrb[0].mxu0
    %v3169 = vadd.f32 %v645, %v3168
    %v3170 = vpop.f32.mrb[0].mxu0
    %v3171 = vadd.f32 %v649, %v3170
    %3172 = vmatprep.mubr.bf16.mxu0 %v239
    %3173 = vmatmul.mubr.bf16.gmra.mrb[0].mxu0 %v238
    %v3174 = vpop.f32.mrb[0].mxu0
    %v3175 = vadd.f32 %v645, %v3174
    %v3176 = vpop.f32.mrb[0].mxu0
    %v3177 = vadd.f32 %v649, %v3176
    %v3178 = vpop.f32.mrb[0].mxu0
    %v3179 = vadd.f32 %v645, %v3178
    %v3180 = vpop.f32.mrb[0].mxu0
    %v3181 = vadd.f32 %v649, %v3180
    %3182 = vmatprep.mubr.bf16.mxu0 %v243
    %3183 = vmatmul.mubr.bf16.gmra.mrb[0].mxu0 %v242
    %v3184 = vpop.f32.mrb[0].mxu0
    %v3185 = vadd.f32 %v645, %v3184
    %v3186 = vpop.f32.mrb[0].mxu0
    %v3187 = vadd.f32 %v649, %v3186
    %v3188 = vpop.f32.mrb[0].mxu0
    %v3189 = vadd.f32 %v645, %v3188
    %v3190 = vpop.f32.mrb[0].mxu0
    %v3191 = vadd.f32 %v649, %v3190
    %3192 = vdwg.mxu0
    %3193 = vmatprep.subr.bf16.mxu0 %v2041
    %3194 = vmatpush1.bf16.msra.mxu0 %v2040
    %3195 = vmatprep.subr.bf16.mxu0 %v2053
    %3196 = vmatpush1.bf16.msra.mxu0 %v2052
    %3197 = vmatprep.subr.bf16.mxu0 %v2065
    %3198 = vmatpush1.bf16.msra.mxu0 %v2064
    %3199 = vmatprep.subr.bf16.mxu0 %v2077
    %3200 = vmatpush1.bf16.msra.mxu0 %v2076
    %3201 = vmatprep.subr.bf16.mxu0 %v2089
    %3202 = vmatpush1.bf16.msra.mxu0 %v2088
    %3203 = vmatprep.subr.bf16.mxu0 %v2101
    %3204 = vmatpush1.bf16.msra.mxu0 %v2100
    %3205 = vmatprep.subr.bf16.mxu0 %v2113
    %3206 = vmatpush1.bf16.msra.mxu0 %v2112
    %3207 = vmatprep.subr.bf16.mxu0 %v2125
    %3208 = vmatpush1.bf16.msra.mxu0 %v2124
    %3209 = vmatprep.subr.bf16.mxu0 %v2137
    %3210 = vmatpush1.bf16.msra.mxu0 %v2136
    %3211 = vmatprep.subr.bf16.mxu0 %v2149
    %3212 = vmatpush1.bf16.msra.mxu0 %v2148
    %3213 = vmatprep.subr.bf16.mxu0 %v2161
    %3214 = vmatpush1.bf16.msra.mxu0 %v2160
    %3215 = vmatprep.subr.bf16.mxu0 %v2173
    %3216 = vmatpush1.bf16.msra.mxu0 %v2172
    %3217 = vmatprep.subr.bf16.mxu0 %v2185
    %3218 = vmatpush1.bf16.msra.mxu0 %v2184
    %3219 = vmatprep.subr.bf16.mxu0 %v2197
    %3220 = vmatpush1.bf16.msra.mxu0 %v2196
    %3221 = vmatprep.subr.bf16.mxu0 %v2209
    %3222 = vmatpush1.bf16.msra.mxu0 %v2208
    %3223 = vmatprep.subr.bf16.mxu0 %v2221
    %3224 = vmatpush1.bf16.msra.mxu0 %v2220
    %3225 = vmatprep.mubr.bf16.mxu0 %v185
    %3226 = vmatmul.mubr.bf16.gmra.mrb[0].mxu0 %v184
    %v3227 = vpop.f32.mrb[0].mxu0
    %v3228 = vadd.f32 %v3035, %v3227
    %v3229 = vpop.f32.mrb[0].mxu0
    %v3230 = vadd.f32 %v3037, %v3229
    %v3231 = vpop.f32.mrb[0].mxu0
    %v3232 = vadd.f32 %v3039, %v3231
    %v3233 = vpop.f32.mrb[0].mxu0
    %v3234 = vadd.f32 %v3041, %v3233
    %3235 = vmatprep.mubr.bf16.mxu0 %v189
    %3236 = vmatmul.mubr.bf16.gmra.mrb[0].mxu0 %v188
    %v3237 = vpop.f32.mrb[0].mxu0
    %v3238 = vadd.f32 %v3045, %v3237
    %v3239 = vpop.f32.mrb[0].mxu0
    %v3240 = vadd.f32 %v3047, %v3239
    %v3241 = vpop.f32.mrb[0].mxu0
    %v3242 = vadd.f32 %v3049, %v3241
    %v3243 = vpop.f32.mrb[0].mxu0
    %v3244 = vadd.f32 %v3051, %v3243
    %3245 = vmatprep.mubr.bf16.mxu0 %v193
    %3246 = vmatmul.mubr.bf16.gmra.mrb[0].mxu0 %v192
    %v3247 = vpop.f32.mrb[0].mxu0
    %v3248 = vadd.f32 %v3055, %v3247
    %v3249 = vpop.f32.mrb[0].mxu0
    %v3250 = vadd.f32 %v3057, %v3249
    %v3251 = vpop.f32.mrb[0].mxu0
    %v3252 = vadd.f32 %v3059, %v3251
    %v3253 = vpop.f32.mrb[0].mxu0
    %v3254 = vadd.f32 %v3061, %v3253
    %3255 = vmatprep.mubr.bf16.mxu0 %v197
    %3256 = vmatmul.mubr.bf16.gmra.mrb[0].mxu0 %v196
    %v3257 = vpop.f32.mrb[0].mxu0
    %v3258 = vadd.f32 %v3065, %v3257
    %v3259 = vpop.f32.mrb[0].mxu0
    %v3260 = vadd.f32 %v3067, %v3259
    %v3261 = vpop.f32.mrb[0].mxu0
    %v3262 = vadd.f32 %v3069, %v3261
    %v3263 = vpop.f32.mrb[0].mxu0
    %v3264 = vadd.f32 %v3071, %v3263
    %3265 = vmatprep.mubr.bf16.mxu0 %v201
    %3266 = vmatmul.mubr.bf16.gmra.mrb[0].mxu0 %v200
    %v3267 = vpop.f32.mrb[0].mxu0
    %v3268 = vadd.f32 %v3075, %v3267
    %v3269 = vpop.f32.mrb[0].mxu0
    %v3270 = vadd.f32 %v3077, %v3269
    %v3271 = vpop.f32.mrb[0].mxu0
    %v3272 = vadd.f32 %v3079, %v3271
    %v3273 = vpop.f32.mrb[0].mxu0
    %v3274 = vadd.f32 %v3081, %v3273
    %3275 = vmatprep.mubr.bf16.mxu0 %v205
    %3276 = vmatmul.mubr.bf16.gmra.mrb[0].mxu0 %v204
    %v3277 = vpop.f32.mrb[0].mxu0
    %v3278 = vadd.f32 %v3085, %v3277
    %v3279 = vpop.f32.mrb[0].mxu0
    %v3280 = vadd.f32 %v3087, %v3279
    %v3281 = vpop.f32.mrb[0].mxu0
    %v3282 = vadd.f32 %v3089, %v3281
    %v3283 = vpop.f32.mrb[0].mxu0
    %v3284 = vadd.f32 %v3091, %v3283
    %3285 = vmatprep.mubr.bf16.mxu0 %v209
    %3286 = vmatmul.mubr.bf16.gmra.mrb[0].mxu0 %v208
    %v3287 = vpop.f32.mrb[0].mxu0
    %v3288 = vadd.f32 %v3095, %v3287
    %v3289 = vpop.f32.mrb[0].mxu0
    %v3290 = vadd.f32 %v3097, %v3289
    %v3291 = vpop.f32.mrb[0].mxu0
    %v3292 = vadd.f32 %v3099, %v3291
    %v3293 = vpop.f32.mrb[0].mxu0
    %v3294 = vadd.f32 %v3101, %v3293
    %3295 = vmatprep.mubr.bf16.mxu0 %v213
    %3296 = vmatmul.mubr.bf16.gmra.mrb[0].mxu0 %v212
    %v3297 = vpop.f32.mrb[0].mxu0
    %v3298 = vadd.f32 %v3105, %v3297
    %v3299 = vpop.f32.mrb[0].mxu0
    %v3300 = vadd.f32 %v3107, %v3299
    %v3301 = vpop.f32.mrb[0].mxu0
    %v3302 = vadd.f32 %v3109, %v3301
    %v3303 = vpop.f32.mrb[0].mxu0
    %v3304 = vadd.f32 %v3111, %v3303
    %3305 = vmatprep.mubr.bf16.mxu0 %v217
    %3306 = vmatmul.mubr.bf16.gmra.mrb[0].mxu0 %v216
    %v3307 = vpop.f32.mrb[0].mxu0
    %v3308 = vadd.f32 %v3115, %v3307
    %v3309 = vpop.f32.mrb[0].mxu0
    %v3310 = vadd.f32 %v3117, %v3309
    %v3311 = vpop.f32.mrb[0].mxu0
    %v3312 = vadd.f32 %v3119, %v3311
    %v3313 = vpop.f32.mrb[0].mxu0
    %v3314 = vadd.f32 %v3121, %v3313
    %3315 = vmatprep.mubr.bf16.mxu0 %v221
    %3316 = vmatmul.mubr.bf16.gmra.mrb[0].mxu0 %v220
    %v3317 = vpop.f32.mrb[0].mxu0
    %v3318 = vadd.f32 %v3125, %v3317
    %v3319 = vpop.f32.mrb[0].mxu0
    %v3320 = vadd.f32 %v3127, %v3319
    %v3321 = vpop.f32.mrb[0].mxu0
    %v3322 = vadd.f32 %v3129, %v3321
    %v3323 = vpop.f32.mrb[0].mxu0
    %v3324 = vadd.f32 %v3131, %v3323
    %3325 = vmatprep.mubr.bf16.mxu0 %v225
    %3326 = vmatmul.mubr.bf16.gmra.mrb[0].mxu0 %v224
    %v3327 = vpop.f32.mrb[0].mxu0
    %v3328 = vadd.f32 %v3135, %v3327
    %v3329 = vpop.f32.mrb[0].mxu0
    %v3330 = vadd.f32 %v3137, %v3329
    %v3331 = vpop.f32.mrb[0].mxu0
    %v3332 = vadd.f32 %v3139, %v3331
    %v3333 = vpop.f32.mrb[0].mxu0
    %v3334 = vadd.f32 %v3141, %v3333
    %3335 = vmatprep.mubr.bf16.mxu0 %v229
    %3336 = vmatmul.mubr.bf16.gmra.mrb[0].mxu0 %v228
    %v3337 = vpop.f32.mrb[0].mxu0
    %v3338 = vadd.f32 %v3145, %v3337
    %v3339 = vpop.f32.mrb[0].mxu0
    %v3340 = vadd.f32 %v3147, %v3339
    %v3341 = vpop.f32.mrb[0].mxu0
    %v3342 = vadd.f32 %v3149, %v3341
    %v3343 = vpop.f32.mrb[0].mxu0
    %v3344 = vadd.f32 %v3151, %v3343
    %3345 = vmatprep.mubr.bf16.mxu0 %v233
    %3346 = vmatmul.mubr.bf16.gmra.mrb[0].mxu0 %v232
    %v3347 = vpop.f32.mrb[0].mxu0
    %v3348 = vadd.f32 %v3155, %v3347
    %v3349 = vpop.f32.mrb[0].mxu0
    %v3350 = vadd.f32 %v3157, %v3349
    %v3351 = vpop.f32.mrb[0].mxu0
    %v3352 = vadd.f32 %v3159, %v3351
    %v3353 = vpop.f32.mrb[0].mxu0
    %v3354 = vadd.f32 %v3161, %v3353
    %3355 = vmatprep.mubr.bf16.mxu0 %v237
    %3356 = vmatmul.mubr.bf16.gmra.mrb[0].mxu0 %v236
    %v3357 = vpop.f32.mrb[0].mxu0
    %v3358 = vadd.f32 %v3165, %v3357
    %v3359 = vpop.f32.mrb[0].mxu0
    %v3360 = vadd.f32 %v3167, %v3359
    %v3361 = vpop.f32.mrb[0].mxu0
    %v3362 = vadd.f32 %v3169, %v3361
    %v3363 = vpop.f32.mrb[0].mxu0
    %v3364 = vadd.f32 %v3171, %v3363
    %3365 = vmatprep.mubr.bf16.mxu0 %v241
    %3366 = vmatmul.mubr.bf16.gmra.mrb[0].mxu0 %v240
    %v3367 = vpop.f32.mrb[0].mxu0
    %v3368 = vadd.f32 %v3175, %v3367
    %v3369 = vpop.f32.mrb[0].mxu0
    %v3370 = vadd.f32 %v3177, %v3369
    %v3371 = vpop.f32.mrb[0].mxu0
    %v3372 = vadd.f32 %v3179, %v3371
    %v3373 = vpop.f32.mrb[0].mxu0
    %v3374 = vadd.f32 %v3181, %v3373
    %3375 = vmatprep.mubr.bf16.mxu0 %v245
    %3376 = vmatmul.mubr.bf16.gmra.mrb[0].mxu0 %v244
    %v3377 = vpop.f32.mrb[0].mxu0
    %v3378 = vadd.f32 %v3185, %v3377
    %v3379 = vpop.f32.mrb[0].mxu0
    %v3380 = vadd.f32 %v3187, %v3379
    %v3381 = vpop.f32.mrb[0].mxu0
    %v3382 = vadd.f32 %v3189, %v3381
    %v3383 = vpop.f32.mrb[0].mxu0
    %v3384 = vadd.f32 %v3191, %v3383
    %3385 = vdwg.mxu0
    %3386 = vmatprep.subr.bf16.mxu0 %v1851
    %3387 = vmatpush1.bf16.msra.mxu0 %v1850
    %3388 = vmatprep.subr.bf16.mxu0 %v1863
    %3389 = vmatpush1.bf16.msra.mxu0 %v1862
    %3390 = vmatprep.subr.bf16.mxu0 %v1875
    %3391 = vmatpush1.bf16.msra.mxu0 %v1874
    %3392 = vmatprep.subr.bf16.mxu0 %v1887
    %3393 = vmatpush1.bf16.msra.mxu0 %v1886
    %3394 = vmatprep.subr.bf16.mxu0 %v1899
    %3395 = vmatpush1.bf16.msra.mxu0 %v1898
    %3396 = vmatprep.subr.bf16.mxu0 %v1911
    %3397 = vmatpush1.bf16.msra.mxu0 %v1910
    %3398 = vmatprep.subr.bf16.mxu0 %v1923
    %3399 = vmatpush1.bf16.msra.mxu0 %v1922
    %3400 = vmatprep.subr.bf16.mxu0 %v1935
    %3401 = vmatpush1.bf16.msra.mxu0 %v1934
    %3402 = vmatprep.subr.bf16.mxu0 %v1947
    %3403 = vmatpush1.bf16.msra.mxu0 %v1946
    %3404 = vmatprep.subr.bf16.mxu0 %v1959
    %3405 = vmatpush1.bf16.msra.mxu0 %v1958
    %3406 = vmatprep.subr.bf16.mxu0 %v1971
    %3407 = vmatpush1.bf16.msra.mxu0 %v1970
    %3408 = vmatprep.subr.bf16.mxu0 %v1983
    %3409 = vmatpush1.bf16.msra.mxu0 %v1982
    %3410 = vmatprep.subr.bf16.mxu0 %v1995
    %3411 = vmatpush1.bf16.msra.mxu0 %v1994
    %3412 = vmatprep.subr.bf16.mxu0 %v2007
    %3413 = vmatpush1.bf16.msra.mxu0 %v2006
    %3414 = vmatprep.subr.bf16.mxu0 %v2019
    %3415 = vmatpush1.bf16.msra.mxu0 %v2018
    %3416 = vmatprep.subr.bf16.mxu0 %v2031
    %3417 = vmatpush1.bf16.msra.mxu0 %v2030
    %3418 = vmatprep.mubr.bf16.mxu0 %v183
    %3419 = vmatmul.mubr.bf16.gmra.mrb[0].mxu0 %v182
    %v3420 = vpop.f32.mrb[0].mxu0
    %v3421 = vadd.f32 %v653, %v3420
    %v3422 = vpop.f32.mrb[0].mxu0
    %v3423 = vadd.f32 %v657, %v3422
    %v3424 = vpop.f32.mrb[0].mxu0
    %v3425 = vadd.f32 %v653, %v3424
    %v3426 = vpop.f32.mrb[0].mxu0
    %v3427 = vadd.f32 %v657, %v3426
    %3428 = vmatprep.mubr.bf16.mxu0 %v187
    %3429 = vmatmul.mubr.bf16.gmra.mrb[0].mxu0 %v186
    %v3430 = vpop.f32.mrb[0].mxu0
    %v3431 = vadd.f32 %v653, %v3430
    %v3432 = vpop.f32.mrb[0].mxu0
    %v3433 = vadd.f32 %v657, %v3432
    %v3434 = vpop.f32.mrb[0].mxu0
    %v3435 = vadd.f32 %v653, %v3434
    %v3436 = vpop.f32.mrb[0].mxu0
    %v3437 = vadd.f32 %v657, %v3436
    %3438 = vmatprep.mubr.bf16.mxu0 %v191
    %3439 = vmatmul.mubr.bf16.gmra.mrb[0].mxu0 %v190
    %v3440 = vpop.f32.mrb[0].mxu0
    %v3441 = vadd.f32 %v653, %v3440
    %v3442 = vpop.f32.mrb[0].mxu0
    %v3443 = vadd.f32 %v657, %v3442
    %v3444 = vpop.f32.mrb[0].mxu0
    %v3445 = vadd.f32 %v653, %v3444
    %v3446 = vpop.f32.mrb[0].mxu0
    %v3447 = vadd.f32 %v657, %v3446
    %3448 = vmatprep.mubr.bf16.mxu0 %v195
    %3449 = vmatmul.mubr.bf16.gmra.mrb[0].mxu0 %v194
    %v3450 = vpop.f32.mrb[0].mxu0
    %v3451 = vadd.f32 %v653, %v3450
    %v3452 = vpop.f32.mrb[0].mxu0
    %v3453 = vadd.f32 %v657, %v3452
    %v3454 = vpop.f32.mrb[0].mxu0
    %v3455 = vadd.f32 %v653, %v3454
    %v3456 = vpop.f32.mrb[0].mxu0
    %v3457 = vadd.f32 %v657, %v3456
    %3458 = vmatprep.mubr.bf16.mxu0 %v199
    %3459 = vmatmul.mubr.bf16.gmra.mrb[0].mxu0 %v198
    %v3460 = vpop.f32.mrb[0].mxu0
    %v3461 = vadd.f32 %v653, %v3460
    %v3462 = vpop.f32.mrb[0].mxu0
    %v3463 = vadd.f32 %v657, %v3462
    %v3464 = vpop.f32.mrb[0].mxu0
    %v3465 = vadd.f32 %v653, %v3464
    %v3466 = vpop.f32.mrb[0].mxu0
    %v3467 = vadd.f32 %v657, %v3466
    %3468 = vmatprep.mubr.bf16.mxu0 %v203
    %3469 = vmatmul.mubr.bf16.gmra.mrb[0].mxu0 %v202
    %v3470 = vpop.f32.mrb[0].mxu0
    %v3471 = vadd.f32 %v653, %v3470
    %v3472 = vpop.f32.mrb[0].mxu0
    %v3473 = vadd.f32 %v657, %v3472
    %v3474 = vpop.f32.mrb[0].mxu0
    %v3475 = vadd.f32 %v653, %v3474
    %v3476 = vpop.f32.mrb[0].mxu0
    %v3477 = vadd.f32 %v657, %v3476
    %3478 = vmatprep.mubr.bf16.mxu0 %v207
    %3479 = vmatmul.mubr.bf16.gmra.mrb[0].mxu0 %v206
    %v3480 = vpop.f32.mrb[0].mxu0
    %v3481 = vadd.f32 %v653, %v3480
    %v3482 = vpop.f32.mrb[0].mxu0
    %v3483 = vadd.f32 %v657, %v3482
    %v3484 = vpop.f32.mrb[0].mxu0
    %v3485 = vadd.f32 %v653, %v3484
    %v3486 = vpop.f32.mrb[0].mxu0
    %v3487 = vadd.f32 %v657, %v3486
    %3488 = vmatprep.mubr.bf16.mxu0 %v211
    %3489 = vmatmul.mubr.bf16.gmra.mrb[0].mxu0 %v210
    %v3490 = vpop.f32.mrb[0].mxu0
    %v3491 = vadd.f32 %v653, %v3490
    %v3492 = vpop.f32.mrb[0].mxu0
    %v3493 = vadd.f32 %v657, %v3492
    %v3494 = vpop.f32.mrb[0].mxu0
    %v3495 = vadd.f32 %v653, %v3494
    %v3496 = vpop.f32.mrb[0].mxu0
    %v3497 = vadd.f32 %v657, %v3496
    %3498 = vmatprep.mubr.bf16.mxu0 %v215
    %3499 = vmatmul.mubr.bf16.gmra.mrb[0].mxu0 %v214
    %v3500 = vpop.f32.mrb[0].mxu0
    %v3501 = vadd.f32 %v653, %v3500
    %v3502 = vpop.f32.mrb[0].mxu0
    %v3503 = vadd.f32 %v657, %v3502
    %v3504 = vpop.f32.mrb[0].mxu0
    %v3505 = vadd.f32 %v653, %v3504
    %v3506 = vpop.f32.mrb[0].mxu0
    %v3507 = vadd.f32 %v657, %v3506
    %3508 = vmatprep.mubr.bf16.mxu0 %v219
    %3509 = vmatmul.mubr.bf16.gmra.mrb[0].mxu0 %v218
    %v3510 = vpop.f32.mrb[0].mxu0
    %v3511 = vadd.f32 %v653, %v3510
    %v3512 = vpop.f32.mrb[0].mxu0
    %v3513 = vadd.f32 %v657, %v3512
    %v3514 = vpop.f32.mrb[0].mxu0
    %v3515 = vadd.f32 %v653, %v3514
    %v3516 = vpop.f32.mrb[0].mxu0
    %v3517 = vadd.f32 %v657, %v3516
    %3518 = vmatprep.mubr.bf16.mxu0 %v223
    %3519 = vmatmul.mubr.bf16.gmra.mrb[0].mxu0 %v222
    %v3520 = vpop.f32.mrb[0].mxu0
    %v3521 = vadd.f32 %v653, %v3520
    %v3522 = vpop.f32.mrb[0].mxu0
    %v3523 = vadd.f32 %v657, %v3522
    %v3524 = vpop.f32.mrb[0].mxu0
    %v3525 = vadd.f32 %v653, %v3524
    %v3526 = vpop.f32.mrb[0].mxu0
    %v3527 = vadd.f32 %v657, %v3526
    %3528 = vmatprep.mubr.bf16.mxu0 %v227
    %3529 = vmatmul.mubr.bf16.gmra.mrb[0].mxu0 %v226
    %v3530 = vpop.f32.mrb[0].mxu0
    %v3531 = vadd.f32 %v653, %v3530
    %v3532 = vpop.f32.mrb[0].mxu0
    %v3533 = vadd.f32 %v657, %v3532
    %v3534 = vpop.f32.mrb[0].mxu0
    %v3535 = vadd.f32 %v653, %v3534
    %v3536 = vpop.f32.mrb[0].mxu0
    %v3537 = vadd.f32 %v657, %v3536
    %3538 = vmatprep.mubr.bf16.mxu0 %v231
    %3539 = vmatmul.mubr.bf16.gmra.mrb[0].mxu0 %v230
    %v3540 = vpop.f32.mrb[0].mxu0
    %v3541 = vadd.f32 %v653, %v3540
    %v3542 = vpop.f32.mrb[0].mxu0
    %v3543 = vadd.f32 %v657, %v3542
    %v3544 = vpop.f32.mrb[0].mxu0
    %v3545 = vadd.f32 %v653, %v3544
    %v3546 = vpop.f32.mrb[0].mxu0
    %v3547 = vadd.f32 %v657, %v3546
    %3548 = vmatprep.mubr.bf16.mxu0 %v235
    %3549 = vmatmul.mubr.bf16.gmra.mrb[0].mxu0 %v234
    %v3550 = vpop.f32.mrb[0].mxu0
    %v3551 = vadd.f32 %v653, %v3550
    %v3552 = vpop.f32.mrb[0].mxu0
    %v3553 = vadd.f32 %v657, %v3552
    %v3554 = vpop.f32.mrb[0].mxu0
    %v3555 = vadd.f32 %v653, %v3554
    %v3556 = vpop.f32.mrb[0].mxu0
    %v3557 = vadd.f32 %v657, %v3556
    %3558 = vmatprep.mubr.bf16.mxu0 %v239
    %3559 = vmatmul.mubr.bf16.gmra.mrb[0].mxu0 %v238
    %v3560 = vpop.f32.mrb[0].mxu0
    %v3561 = vadd.f32 %v653, %v3560
    %v3562 = vpop.f32.mrb[0].mxu0
    %v3563 = vadd.f32 %v657, %v3562
    %v3564 = vpop.f32.mrb[0].mxu0
    %v3565 = vadd.f32 %v653, %v3564
    %v3566 = vpop.f32.mrb[0].mxu0
    %v3567 = vadd.f32 %v657, %v3566
    %3568 = vmatprep.mubr.bf16.mxu0 %v243
    %3569 = vmatmul.mubr.bf16.gmra.mrb[0].mxu0 %v242
    %v3570 = vpop.f32.mrb[0].mxu0
    %v3571 = vadd.f32 %v653, %v3570
    %v3572 = vpop.f32.mrb[0].mxu0
    %v3573 = vadd.f32 %v657, %v3572
    %v3574 = vpop.f32.mrb[0].mxu0
    %v3575 = vadd.f32 %v653, %v3574
    %v3576 = vpop.f32.mrb[0].mxu0
    %v3577 = vadd.f32 %v657, %v3576
    %3578 = vdwg.mxu0
    %3579 = vmatprep.subr.bf16.mxu0 %v2043
    %3580 = vmatpush1.bf16.msra.mxu0 %v2042
    %3581 = vmatprep.subr.bf16.mxu0 %v2055
    %3582 = vmatpush1.bf16.msra.mxu0 %v2054
    %3583 = vmatprep.subr.bf16.mxu0 %v2067
    %3584 = vmatpush1.bf16.msra.mxu0 %v2066
    %3585 = vmatprep.subr.bf16.mxu0 %v2079
    %3586 = vmatpush1.bf16.msra.mxu0 %v2078
    %3587 = vmatprep.subr.bf16.mxu0 %v2091
    %3588 = vmatpush1.bf16.msra.mxu0 %v2090
    %3589 = vmatprep.subr.bf16.mxu0 %v2103
    %3590 = vmatpush1.bf16.msra.mxu0 %v2102
    %3591 = vmatprep.subr.bf16.mxu0 %v2115
    %3592 = vmatpush1.bf16.msra.mxu0 %v2114
    %3593 = vmatprep.subr.bf16.mxu0 %v2127
    %3594 = vmatpush1.bf16.msra.mxu0 %v2126
    %3595 = vmatprep.subr.bf16.mxu0 %v2139
    %3596 = vmatpush1.bf16.msra.mxu0 %v2138
    %3597 = vmatprep.subr.bf16.mxu0 %v2151
    %3598 = vmatpush1.bf16.msra.mxu0 %v2150
    %3599 = vmatprep.subr.bf16.mxu0 %v2163
    %3600 = vmatpush1.bf16.msra.mxu0 %v2162
    %3601 = vmatprep.subr.bf16.mxu0 %v2175
    %3602 = vmatpush1.bf16.msra.mxu0 %v2174
    %3603 = vmatprep.subr.bf16.mxu0 %v2187
    %3604 = vmatpush1.bf16.msra.mxu0 %v2186
    %3605 = vmatprep.subr.bf16.mxu0 %v2199
    %3606 = vmatpush1.bf16.msra.mxu0 %v2198
    %3607 = vmatprep.subr.bf16.mxu0 %v2211
    %3608 = vmatpush1.bf16.msra.mxu0 %v2210
    %3609 = vmatprep.subr.bf16.mxu0 %v2223
    %3610 = vmatpush1.bf16.msra.mxu0 %v2222
    %3611 = vmatprep.mubr.bf16.mxu0 %v185
    %3612 = vmatmul.mubr.bf16.gmra.mrb[0].mxu0 %v184
    %v3613 = vpop.f32.mrb[0].mxu0
    %v3614 = vadd.f32 %v3421, %v3613
    %v3615 = vpop.f32.mrb[0].mxu0
    %v3616 = vadd.f32 %v3423, %v3615
    %v3617 = vpop.f32.mrb[0].mxu0
    %v3618 = vadd.f32 %v3425, %v3617
    %v3619 = vpop.f32.mrb[0].mxu0
    %v3620 = vadd.f32 %v3427, %v3619
    %3621 = vmatprep.mubr.bf16.mxu0 %v189
    %3622 = vmatmul.mubr.bf16.gmra.mrb[0].mxu0 %v188
    %v3623 = vpop.f32.mrb[0].mxu0
    %v3624 = vadd.f32 %v3431, %v3623
    %v3625 = vpop.f32.mrb[0].mxu0
    %v3626 = vadd.f32 %v3433, %v3625
    %v3627 = vpop.f32.mrb[0].mxu0
    %v3628 = vadd.f32 %v3435, %v3627
    %v3629 = vpop.f32.mrb[0].mxu0
    %v3630 = vadd.f32 %v3437, %v3629
    %3631 = vmatprep.mubr.bf16.mxu0 %v193
    %3632 = vmatmul.mubr.bf16.gmra.mrb[0].mxu0 %v192
    %v3633 = vpop.f32.mrb[0].mxu0
    %v3634 = vadd.f32 %v3441, %v3633
    %v3635 = vpop.f32.mrb[0].mxu0
    %v3636 = vadd.f32 %v3443, %v3635
    %v3637 = vpop.f32.mrb[0].mxu0
    %v3638 = vadd.f32 %v3445, %v3637
    %v3639 = vpop.f32.mrb[0].mxu0
    %v3640 = vadd.f32 %v3447, %v3639
    %3641 = vmatprep.mubr.bf16.mxu0 %v197
    %3642 = vmatmul.mubr.bf16.gmra.mrb[0].mxu0 %v196
    %v3643 = vpop.f32.mrb[0].mxu0
    %v3644 = vadd.f32 %v3451, %v3643
    %v3645 = vpop.f32.mrb[0].mxu0
    %v3646 = vadd.f32 %v3453, %v3645
    %v3647 = vpop.f32.mrb[0].mxu0
    %v3648 = vadd.f32 %v3455, %v3647
    %v3649 = vpop.f32.mrb[0].mxu0
    %v3650 = vadd.f32 %v3457, %v3649
    %3651 = vmatprep.mubr.bf16.mxu0 %v201
    %3652 = vmatmul.mubr.bf16.gmra.mrb[0].mxu0 %v200
    %v3653 = vpop.f32.mrb[0].mxu0
    %v3654 = vadd.f32 %v3461, %v3653
    %v3655 = vpop.f32.mrb[0].mxu0
    %v3656 = vadd.f32 %v3463, %v3655
    %v3657 = vpop.f32.mrb[0].mxu0
    %v3658 = vadd.f32 %v3465, %v3657
    %v3659 = vpop.f32.mrb[0].mxu0
    %v3660 = vadd.f32 %v3467, %v3659
    %3661 = vmatprep.mubr.bf16.mxu0 %v205
    %3662 = vmatmul.mubr.bf16.gmra.mrb[0].mxu0 %v204
    %v3663 = vpop.f32.mrb[0].mxu0
    %v3664 = vadd.f32 %v3471, %v3663
    %v3665 = vpop.f32.mrb[0].mxu0
    %v3666 = vadd.f32 %v3473, %v3665
    %v3667 = vpop.f32.mrb[0].mxu0
    %v3668 = vadd.f32 %v3475, %v3667
    %v3669 = vpop.f32.mrb[0].mxu0
    %v3670 = vadd.f32 %v3477, %v3669
    %3671 = vmatprep.mubr.bf16.mxu0 %v209
    %3672 = vmatmul.mubr.bf16.gmra.mrb[0].mxu0 %v208
    %v3673 = vpop.f32.mrb[0].mxu0
    %v3674 = vadd.f32 %v3481, %v3673
    %v3675 = vpop.f32.mrb[0].mxu0
    %v3676 = vadd.f32 %v3483, %v3675
    %v3677 = vpop.f32.mrb[0].mxu0
    %v3678 = vadd.f32 %v3485, %v3677
    %v3679 = vpop.f32.mrb[0].mxu0
    %v3680 = vadd.f32 %v3487, %v3679
    %3681 = vmatprep.mubr.bf16.mxu0 %v213
    %3682 = vmatmul.mubr.bf16.gmra.mrb[0].mxu0 %v212
    %v3683 = vpop.f32.mrb[0].mxu0
    %v3684 = vadd.f32 %v3491, %v3683
    %v3685 = vpop.f32.mrb[0].mxu0
    %v3686 = vadd.f32 %v3493, %v3685
    %v3687 = vpop.f32.mrb[0].mxu0
    %v3688 = vadd.f32 %v3495, %v3687
    %v3689 = vpop.f32.mrb[0].mxu0
    %v3690 = vadd.f32 %v3497, %v3689
    %3691 = vmatprep.mubr.bf16.mxu0 %v217
    %3692 = vmatmul.mubr.bf16.gmra.mrb[0].mxu0 %v216
    %v3693 = vpop.f32.mrb[0].mxu0
    %v3694 = vadd.f32 %v3501, %v3693
    %v3695 = vpop.f32.mrb[0].mxu0
    %v3696 = vadd.f32 %v3503, %v3695
    %v3697 = vpop.f32.mrb[0].mxu0
    %v3698 = vadd.f32 %v3505, %v3697
    %v3699 = vpop.f32.mrb[0].mxu0
    %v3700 = vadd.f32 %v3507, %v3699
    %3701 = vmatprep.mubr.bf16.mxu0 %v221
    %3702 = vmatmul.mubr.bf16.gmra.mrb[0].mxu0 %v220
    %v3703 = vpop.f32.mrb[0].mxu0
    %v3704 = vadd.f32 %v3511, %v3703
    %v3705 = vpop.f32.mrb[0].mxu0
    %v3706 = vadd.f32 %v3513, %v3705
    %v3707 = vpop.f32.mrb[0].mxu0
    %v3708 = vadd.f32 %v3515, %v3707
    %v3709 = vpop.f32.mrb[0].mxu0
    %v3710 = vadd.f32 %v3517, %v3709
    %3711 = vmatprep.mubr.bf16.mxu0 %v225
    %3712 = vmatmul.mubr.bf16.gmra.mrb[0].mxu0 %v224
    %v3713 = vpop.f32.mrb[0].mxu0
    %v3714 = vadd.f32 %v3521, %v3713
    %v3715 = vpop.f32.mrb[0].mxu0
    %v3716 = vadd.f32 %v3523, %v3715
    %v3717 = vpop.f32.mrb[0].mxu0
    %v3718 = vadd.f32 %v3525, %v3717
    %v3719 = vpop.f32.mrb[0].mxu0
    %v3720 = vadd.f32 %v3527, %v3719
    %3721 = vmatprep.mubr.bf16.mxu0 %v229
    %3722 = vmatmul.mubr.bf16.gmra.mrb[0].mxu0 %v228
    %v3723 = vpop.f32.mrb[0].mxu0
    %v3724 = vadd.f32 %v3531, %v3723
    %v3725 = vpop.f32.mrb[0].mxu0
    %v3726 = vadd.f32 %v3533, %v3725
    %v3727 = vpop.f32.mrb[0].mxu0
    %v3728 = vadd.f32 %v3535, %v3727
    %v3729 = vpop.f32.mrb[0].mxu0
    %v3730 = vadd.f32 %v3537, %v3729
    %3731 = vmatprep.mubr.bf16.mxu0 %v233
    %3732 = vmatmul.mubr.bf16.gmra.mrb[0].mxu0 %v232
    %v3733 = vpop.f32.mrb[0].mxu0
    %v3734 = vadd.f32 %v3541, %v3733
    %v3735 = vpop.f32.mrb[0].mxu0
    %v3736 = vadd.f32 %v3543, %v3735
    %v3737 = vpop.f32.mrb[0].mxu0
    %v3738 = vadd.f32 %v3545, %v3737
    %v3739 = vpop.f32.mrb[0].mxu0
    %v3740 = vadd.f32 %v3547, %v3739
    %3741 = vmatprep.mubr.bf16.mxu0 %v237
    %3742 = vmatmul.mubr.bf16.gmra.mrb[0].mxu0 %v236
    %v3743 = vpop.f32.mrb[0].mxu0
    %v3744 = vadd.f32 %v3551, %v3743
    %v3745 = vpop.f32.mrb[0].mxu0
    %v3746 = vadd.f32 %v3553, %v3745
    %v3747 = vpop.f32.mrb[0].mxu0
    %v3748 = vadd.f32 %v3555, %v3747
    %v3749 = vpop.f32.mrb[0].mxu0
    %v3750 = vadd.f32 %v3557, %v3749
    %3751 = vmatprep.mubr.bf16.mxu0 %v241
    %3752 = vmatmul.mubr.bf16.gmra.mrb[0].mxu0 %v240
    %v3753 = vpop.f32.mrb[0].mxu0
    %v3754 = vadd.f32 %v3561, %v3753
    %v3755 = vpop.f32.mrb[0].mxu0
    %v3756 = vadd.f32 %v3563, %v3755
    %v3757 = vpop.f32.mrb[0].mxu0
    %v3758 = vadd.f32 %v3565, %v3757
    %v3759 = vpop.f32.mrb[0].mxu0
    %v3760 = vadd.f32 %v3567, %v3759
    %3761 = vmatprep.mubr.bf16.mxu0 %v245
    %3762 = vmatmul.mubr.bf16.gmra.mrb[0].mxu0 %v244
    %v3763 = vpop.f32.mrb[0].mxu0
    %v3764 = vadd.f32 %v3571, %v3763
    %v3765 = vpop.f32.mrb[0].mxu0
    %v3766 = vadd.f32 %v3573, %v3765
    %v3767 = vpop.f32.mrb[0].mxu0
    %v3768 = vadd.f32 %v3575, %v3767
    %v3769 = vpop.f32.mrb[0].mxu0
    %v3770 = vadd.f32 %v3577, %v3769
    %3771 = vdwg.mxu0
    %3772 = vmatprep.subr.bf16.mxu0 %v1853
    %3773 = vmatpush1.bf16.msra.mxu0 %v1852
    %3774 = vmatprep.subr.bf16.mxu0 %v1865
    %3775 = vmatpush1.bf16.msra.mxu0 %v1864
    %3776 = vmatprep.subr.bf16.mxu0 %v1877
    %3777 = vmatpush1.bf16.msra.mxu0 %v1876
    %3778 = vmatprep.subr.bf16.mxu0 %v1889
    %3779 = vmatpush1.bf16.msra.mxu0 %v1888
    %3780 = vmatprep.subr.bf16.mxu0 %v1901
    %3781 = vmatpush1.bf16.msra.mxu0 %v1900
    %3782 = vmatprep.subr.bf16.mxu0 %v1913
    %3783 = vmatpush1.bf16.msra.mxu0 %v1912
    %3784 = vmatprep.subr.bf16.mxu0 %v1925
    %3785 = vmatpush1.bf16.msra.mxu0 %v1924
    %3786 = vmatprep.subr.bf16.mxu0 %v1937
    %3787 = vmatpush1.bf16.msra.mxu0 %v1936
    %3788 = vmatprep.subr.bf16.mxu0 %v1949
    %3789 = vmatpush1.bf16.msra.mxu0 %v1948
    %3790 = vmatprep.subr.bf16.mxu0 %v1961
    %3791 = vmatpush1.bf16.msra.mxu0 %v1960
    %3792 = vmatprep.subr.bf16.mxu0 %v1973
    %3793 = vmatpush1.bf16.msra.mxu0 %v1972
    %3794 = vmatprep.subr.bf16.mxu0 %v1985
    %3795 = vmatpush1.bf16.msra.mxu0 %v1984
    %3796 = vmatprep.subr.bf16.mxu0 %v1997
    %3797 = vmatpush1.bf16.msra.mxu0 %v1996
    %3798 = vmatprep.subr.bf16.mxu0 %v2009
    %3799 = vmatpush1.bf16.msra.mxu0 %v2008
    %3800 = vmatprep.subr.bf16.mxu0 %v2021
    %3801 = vmatpush1.bf16.msra.mxu0 %v2020
    %3802 = vmatprep.subr.bf16.mxu0 %v2033
    %3803 = vmatpush1.bf16.msra.mxu0 %v2032
    %3804 = vmatprep.mubr.bf16.mxu0 %v183
    %3805 = vmatmul.mubr.bf16.gmra.mrb[0].mxu0 %v182
    %v3806 = vpop.f32.mrb[0].mxu0
    %v3807 = vadd.f32 %v661, %v3806
    %v3808 = vpop.f32.mrb[0].mxu0
    %v3809 = vadd.f32 %v665, %v3808
    %v3810 = vpop.f32.mrb[0].mxu0
    %v3811 = vadd.f32 %v661, %v3810
    %v3812 = vpop.f32.mrb[0].mxu0
    %v3813 = vadd.f32 %v665, %v3812
    %3814 = vmatprep.mubr.bf16.mxu0 %v187
    %3815 = vmatmul.mubr.bf16.gmra.mrb[0].mxu0 %v186
    %v3816 = vpop.f32.mrb[0].mxu0
    %v3817 = vadd.f32 %v661, %v3816
    %v3818 = vpop.f32.mrb[0].mxu0
    %v3819 = vadd.f32 %v665, %v3818
    %v3820 = vpop.f32.mrb[0].mxu0
    %v3821 = vadd.f32 %v661, %v3820
    %v3822 = vpop.f32.mrb[0].mxu0
    %v3823 = vadd.f32 %v665, %v3822
    %3824 = vmatprep.mubr.bf16.mxu0 %v191
    %3825 = vmatmul.mubr.bf16.gmra.mrb[0].mxu0 %v190
    %v3826 = vpop.f32.mrb[0].mxu0
    %v3827 = vadd.f32 %v661, %v3826
    %v3828 = vpop.f32.mrb[0].mxu0
    %v3829 = vadd.f32 %v665, %v3828
    %v3830 = vpop.f32.mrb[0].mxu0
    %v3831 = vadd.f32 %v661, %v3830
    %v3832 = vpop.f32.mrb[0].mxu0
    %v3833 = vadd.f32 %v665, %v3832
    %3834 = vmatprep.mubr.bf16.mxu0 %v195
    %3835 = vmatmul.mubr.bf16.gmra.mrb[0].mxu0 %v194
    %v3836 = vpop.f32.mrb[0].mxu0
    %v3837 = vadd.f32 %v661, %v3836
    %v3838 = vpop.f32.mrb[0].mxu0
    %v3839 = vadd.f32 %v665, %v3838
    %v3840 = vpop.f32.mrb[0].mxu0
    %v3841 = vadd.f32 %v661, %v3840
    %v3842 = vpop.f32.mrb[0].mxu0
    %v3843 = vadd.f32 %v665, %v3842
    %3844 = vmatprep.mubr.bf16.mxu0 %v199
    %3845 = vmatmul.mubr.bf16.gmra.mrb[0].mxu0 %v198
    %v3846 = vpop.f32.mrb[0].mxu0
    %v3847 = vadd.f32 %v661, %v3846
    %v3848 = vpop.f32.mrb[0].mxu0
    %v3849 = vadd.f32 %v665, %v3848
    %v3850 = vpop.f32.mrb[0].mxu0
    %v3851 = vadd.f32 %v661, %v3850
    %v3852 = vpop.f32.mrb[0].mxu0
    %v3853 = vadd.f32 %v665, %v3852
    %3854 = vmatprep.mubr.bf16.mxu0 %v203
    %3855 = vmatmul.mubr.bf16.gmra.mrb[0].mxu0 %v202
    %v3856 = vpop.f32.mrb[0].mxu0
    %v3857 = vadd.f32 %v661, %v3856
    %v3858 = vpop.f32.mrb[0].mxu0
    %v3859 = vadd.f32 %v665, %v3858
    %v3860 = vpop.f32.mrb[0].mxu0
    %v3861 = vadd.f32 %v661, %v3860
    %v3862 = vpop.f32.mrb[0].mxu0
    %v3863 = vadd.f32 %v665, %v3862
    %3864 = vmatprep.mubr.bf16.mxu0 %v207
    %3865 = vmatmul.mubr.bf16.gmra.mrb[0].mxu0 %v206
    %v3866 = vpop.f32.mrb[0].mxu0
    %v3867 = vadd.f32 %v661, %v3866
    %v3868 = vpop.f32.mrb[0].mxu0
    %v3869 = vadd.f32 %v665, %v3868
    %v3870 = vpop.f32.mrb[0].mxu0
    %v3871 = vadd.f32 %v661, %v3870
    %v3872 = vpop.f32.mrb[0].mxu0
    %v3873 = vadd.f32 %v665, %v3872
    %3874 = vmatprep.mubr.bf16.mxu0 %v211
    %3875 = vmatmul.mubr.bf16.gmra.mrb[0].mxu0 %v210
    %v3876 = vpop.f32.mrb[0].mxu0
    %v3877 = vadd.f32 %v661, %v3876
    %v3878 = vpop.f32.mrb[0].mxu0
    %v3879 = vadd.f32 %v665, %v3878
    %v3880 = vpop.f32.mrb[0].mxu0
    %v3881 = vadd.f32 %v661, %v3880
    %v3882 = vpop.f32.mrb[0].mxu0
    %v3883 = vadd.f32 %v665, %v3882
    %3884 = vmatprep.mubr.bf16.mxu0 %v215
    %3885 = vmatmul.mubr.bf16.gmra.mrb[0].mxu0 %v214
    %v3886 = vpop.f32.mrb[0].mxu0
    %v3887 = vadd.f32 %v661, %v3886
    %v3888 = vpop.f32.mrb[0].mxu0
    %v3889 = vadd.f32 %v665, %v3888
    %v3890 = vpop.f32.mrb[0].mxu0
    %v3891 = vadd.f32 %v661, %v3890
    %v3892 = vpop.f32.mrb[0].mxu0
    %v3893 = vadd.f32 %v665, %v3892
    %3894 = vmatprep.mubr.bf16.mxu0 %v219
    %3895 = vmatmul.mubr.bf16.gmra.mrb[0].mxu0 %v218
    %v3896 = vpop.f32.mrb[0].mxu0
    %v3897 = vadd.f32 %v661, %v3896
    %v3898 = vpop.f32.mrb[0].mxu0
    %v3899 = vadd.f32 %v665, %v3898
    %v3900 = vpop.f32.mrb[0].mxu0
    %v3901 = vadd.f32 %v661, %v3900
    %v3902 = vpop.f32.mrb[0].mxu0
    %v3903 = vadd.f32 %v665, %v3902
    %3904 = vmatprep.mubr.bf16.mxu0 %v223
    %3905 = vmatmul.mubr.bf16.gmra.mrb[0].mxu0 %v222
    %v3906 = vpop.f32.mrb[0].mxu0
    %v3907 = vadd.f32 %v661, %v3906
    %v3908 = vpop.f32.mrb[0].mxu0
    %v3909 = vadd.f32 %v665, %v3908
    %v3910 = vpop.f32.mrb[0].mxu0
    %v3911 = vadd.f32 %v661, %v3910
    %v3912 = vpop.f32.mrb[0].mxu0
    %v3913 = vadd.f32 %v665, %v3912
    %3914 = vmatprep.mubr.bf16.mxu0 %v227
    %3915 = vmatmul.mubr.bf16.gmra.mrb[0].mxu0 %v226
    %v3916 = vpop.f32.mrb[0].mxu0
    %v3917 = vadd.f32 %v661, %v3916
    %v3918 = vpop.f32.mrb[0].mxu0
    %v3919 = vadd.f32 %v665, %v3918
    %v3920 = vpop.f32.mrb[0].mxu0
    %v3921 = vadd.f32 %v661, %v3920
    %v3922 = vpop.f32.mrb[0].mxu0
    %v3923 = vadd.f32 %v665, %v3922
    %3924 = vmatprep.mubr.bf16.mxu0 %v231
    %3925 = vmatmul.mubr.bf16.gmra.mrb[0].mxu0 %v230
    %v3926 = vpop.f32.mrb[0].mxu0
    %v3927 = vadd.f32 %v661, %v3926
    %v3928 = vpop.f32.mrb[0].mxu0
    %v3929 = vadd.f32 %v665, %v3928
    %v3930 = vpop.f32.mrb[0].mxu0
    %v3931 = vadd.f32 %v661, %v3930
    %v3932 = vpop.f32.mrb[0].mxu0
    %v3933 = vadd.f32 %v665, %v3932
    %3934 = vmatprep.mubr.bf16.mxu0 %v235
    %3935 = vmatmul.mubr.bf16.gmra.mrb[0].mxu0 %v234
    %v3936 = vpop.f32.mrb[0].mxu0
    %v3937 = vadd.f32 %v661, %v3936
    %v3938 = vpop.f32.mrb[0].mxu0
    %v3939 = vadd.f32 %v665, %v3938
    %v3940 = vpop.f32.mrb[0].mxu0
    %v3941 = vadd.f32 %v661, %v3940
    %v3942 = vpop.f32.mrb[0].mxu0
    %v3943 = vadd.f32 %v665, %v3942
    %3944 = vmatprep.mubr.bf16.mxu0 %v239
    %3945 = vmatmul.mubr.bf16.gmra.mrb[0].mxu0 %v238
    %v3946 = vpop.f32.mrb[0].mxu0
    %v3947 = vadd.f32 %v661, %v3946
    %v3948 = vpop.f32.mrb[0].mxu0
    %v3949 = vadd.f32 %v665, %v3948
    %v3950 = vpop.f32.mrb[0].mxu0
    %v3951 = vadd.f32 %v661, %v3950
    %v3952 = vpop.f32.mrb[0].mxu0
    %v3953 = vadd.f32 %v665, %v3952
    %3954 = vmatprep.mubr.bf16.mxu0 %v243
    %3955 = vmatmul.mubr.bf16.gmra.mrb[0].mxu0 %v242
    %v3956 = vpop.f32.mrb[0].mxu0
    %v3957 = vadd.f32 %v661, %v3956
    %v3958 = vpop.f32.mrb[0].mxu0
    %v3959 = vadd.f32 %v665, %v3958
    %v3960 = vpop.f32.mrb[0].mxu0
    %v3961 = vadd.f32 %v661, %v3960
    %v3962 = vpop.f32.mrb[0].mxu0
    %v3963 = vadd.f32 %v665, %v3962
    %3964 = vdwg.mxu0
    %3965 = vmatprep.subr.bf16.mxu0 %v2045
    %3966 = vmatpush1.bf16.msra.mxu0 %v2044
    %3967 = vmatprep.subr.bf16.mxu0 %v2057
    %3968 = vmatpush1.bf16.msra.mxu0 %v2056
    %3969 = vmatprep.subr.bf16.mxu0 %v2069
    %3970 = vmatpush1.bf16.msra.mxu0 %v2068
    %3971 = vmatprep.subr.bf16.mxu0 %v2081
    %3972 = vmatpush1.bf16.msra.mxu0 %v2080
    %3973 = vmatprep.subr.bf16.mxu0 %v2093
    %3974 = vmatpush1.bf16.msra.mxu0 %v2092
    %3975 = vmatprep.subr.bf16.mxu0 %v2105
    %3976 = vmatpush1.bf16.msra.mxu0 %v2104
    %3977 = vmatprep.subr.bf16.mxu0 %v2117
    %3978 = vmatpush1.bf16.msra.mxu0 %v2116
    %3979 = vmatprep.subr.bf16.mxu0 %v2129
    %3980 = vmatpush1.bf16.msra.mxu0 %v2128
    %3981 = vmatprep.subr.bf16.mxu0 %v2141
    %3982 = vmatpush1.bf16.msra.mxu0 %v2140
    %3983 = vmatprep.subr.bf16.mxu0 %v2153
    %3984 = vmatpush1.bf16.msra.mxu0 %v2152
    %3985 = vmatprep.subr.bf16.mxu0 %v2165
    %3986 = vmatpush1.bf16.msra.mxu0 %v2164
    %3987 = vmatprep.subr.bf16.mxu0 %v2177
    %3988 = vmatpush1.bf16.msra.mxu0 %v2176
    %3989 = vmatprep.subr.bf16.mxu0 %v2189
    %3990 = vmatpush1.bf16.msra.mxu0 %v2188
    %3991 = vmatprep.subr.bf16.mxu0 %v2201
    %3992 = vmatpush1.bf16.msra.mxu0 %v2200
    %3993 = vmatprep.subr.bf16.mxu0 %v2213
    %3994 = vmatpush1.bf16.msra.mxu0 %v2212
    %3995 = vmatprep.subr.bf16.mxu0 %v2225
    %3996 = vmatpush1.bf16.msra.mxu0 %v2224
    %3997 = vmatprep.mubr.bf16.mxu0 %v185
    %3998 = vmatmul.mubr.bf16.gmra.mrb[0].mxu0 %v184
    %v3999 = vpop.f32.mrb[0].mxu0
    %v4000 = vadd.f32 %v3807, %v3999
    %v4001 = vpop.f32.mrb[0].mxu0
    %v4002 = vadd.f32 %v3809, %v4001
    %v4003 = vpop.f32.mrb[0].mxu0
    %v4004 = vadd.f32 %v3811, %v4003
    %v4005 = vpop.f32.mrb[0].mxu0
    %v4006 = vadd.f32 %v3813, %v4005
    %4007 = vmatprep.mubr.bf16.mxu0 %v189
    %4008 = vmatmul.mubr.bf16.gmra.mrb[0].mxu0 %v188
    %v4009 = vpop.f32.mrb[0].mxu0
    %v4010 = vadd.f32 %v3817, %v4009
    %v4011 = vpop.f32.mrb[0].mxu0
    %v4012 = vadd.f32 %v3819, %v4011
    %v4013 = vpop.f32.mrb[0].mxu0
    %v4014 = vadd.f32 %v3821, %v4013
    %v4015 = vpop.f32.mrb[0].mxu0
    %v4016 = vadd.f32 %v3823, %v4015
    %4017 = vmatprep.mubr.bf16.mxu0 %v193
    %4018 = vmatmul.mubr.bf16.gmra.mrb[0].mxu0 %v192
    %v4019 = vpop.f32.mrb[0].mxu0
    %v4020 = vadd.f32 %v3827, %v4019
    %v4021 = vpop.f32.mrb[0].mxu0
    %v4022 = vadd.f32 %v3829, %v4021
    %v4023 = vpop.f32.mrb[0].mxu0
    %v4024 = vadd.f32 %v3831, %v4023
    %v4025 = vpop.f32.mrb[0].mxu0
    %v4026 = vadd.f32 %v3833, %v4025
    %4027 = vmatprep.mubr.bf16.mxu0 %v197
    %4028 = vmatmul.mubr.bf16.gmra.mrb[0].mxu0 %v196
    %v4029 = vpop.f32.mrb[0].mxu0
    %v4030 = vadd.f32 %v3837, %v4029
    %v4031 = vpop.f32.mrb[0].mxu0
    %v4032 = vadd.f32 %v3839, %v4031
    %v4033 = vpop.f32.mrb[0].mxu0
    %v4034 = vadd.f32 %v3841, %v4033
    %v4035 = vpop.f32.mrb[0].mxu0
    %v4036 = vadd.f32 %v3843, %v4035
    %4037 = vmatprep.mubr.bf16.mxu0 %v201
    %4038 = vmatmul.mubr.bf16.gmra.mrb[0].mxu0 %v200
    %v4039 = vpop.f32.mrb[0].mxu0
    %v4040 = vadd.f32 %v3847, %v4039
    %v4041 = vpop.f32.mrb[0].mxu0
    %v4042 = vadd.f32 %v3849, %v4041
    %v4043 = vpop.f32.mrb[0].mxu0
    %v4044 = vadd.f32 %v3851, %v4043
    %v4045 = vpop.f32.mrb[0].mxu0
    %v4046 = vadd.f32 %v3853, %v4045
    %4047 = vmatprep.mubr.bf16.mxu0 %v205
    %4048 = vmatmul.mubr.bf16.gmra.mrb[0].mxu0 %v204
    %v4049 = vpop.f32.mrb[0].mxu0
    %v4050 = vadd.f32 %v3857, %v4049
    %v4051 = vpop.f32.mrb[0].mxu0
    %v4052 = vadd.f32 %v3859, %v4051
    %v4053 = vpop.f32.mrb[0].mxu0
    %v4054 = vadd.f32 %v3861, %v4053
    %v4055 = vpop.f32.mrb[0].mxu0
    %v4056 = vadd.f32 %v3863, %v4055
    %4057 = vmatprep.mubr.bf16.mxu0 %v209
    %4058 = vmatmul.mubr.bf16.gmra.mrb[0].mxu0 %v208
    %v4059 = vpop.f32.mrb[0].mxu0
    %v4060 = vadd.f32 %v3867, %v4059
    %v4061 = vpop.f32.mrb[0].mxu0
    %v4062 = vadd.f32 %v3869, %v4061
    %v4063 = vpop.f32.mrb[0].mxu0
    %v4064 = vadd.f32 %v3871, %v4063
    %v4065 = vpop.f32.mrb[0].mxu0
    %v4066 = vadd.f32 %v3873, %v4065
    %4067 = vmatprep.mubr.bf16.mxu0 %v213
    %4068 = vmatmul.mubr.bf16.gmra.mrb[0].mxu0 %v212
    %v4069 = vpop.f32.mrb[0].mxu0
    %v4070 = vadd.f32 %v3877, %v4069
    %v4071 = vpop.f32.mrb[0].mxu0
    %v4072 = vadd.f32 %v3879, %v4071
    %v4073 = vpop.f32.mrb[0].mxu0
    %v4074 = vadd.f32 %v3881, %v4073
    %v4075 = vpop.f32.mrb[0].mxu0
    %v4076 = vadd.f32 %v3883, %v4075
    %4077 = vmatprep.mubr.bf16.mxu0 %v217
    %4078 = vmatmul.mubr.bf16.gmra.mrb[0].mxu0 %v216
    %v4079 = vpop.f32.mrb[0].mxu0
    %v4080 = vadd.f32 %v3887, %v4079
    %v4081 = vpop.f32.mrb[0].mxu0
    %v4082 = vadd.f32 %v3889, %v4081
    %v4083 = vpop.f32.mrb[0].mxu0
    %v4084 = vadd.f32 %v3891, %v4083
    %v4085 = vpop.f32.mrb[0].mxu0
    %v4086 = vadd.f32 %v3893, %v4085
    %4087 = vmatprep.mubr.bf16.mxu0 %v221
    %4088 = vmatmul.mubr.bf16.gmra.mrb[0].mxu0 %v220
    %v4089 = vpop.f32.mrb[0].mxu0
    %v4090 = vadd.f32 %v3897, %v4089
    %v4091 = vpop.f32.mrb[0].mxu0
    %v4092 = vadd.f32 %v3899, %v4091
    %v4093 = vpop.f32.mrb[0].mxu0
    %v4094 = vadd.f32 %v3901, %v4093
    %v4095 = vpop.f32.mrb[0].mxu0
    %v4096 = vadd.f32 %v3903, %v4095
    %4097 = vmatprep.mubr.bf16.mxu0 %v225
    %4098 = vmatmul.mubr.bf16.gmra.mrb[0].mxu0 %v224
    %v4099 = vpop.f32.mrb[0].mxu0
    %v4100 = vadd.f32 %v3907, %v4099
    %v4101 = vpop.f32.mrb[0].mxu0
    %v4102 = vadd.f32 %v3909, %v4101
    %v4103 = vpop.f32.mrb[0].mxu0
    %v4104 = vadd.f32 %v3911, %v4103
    %v4105 = vpop.f32.mrb[0].mxu0
    %v4106 = vadd.f32 %v3913, %v4105
    %4107 = vmatprep.mubr.bf16.mxu0 %v229
    %4108 = vmatmul.mubr.bf16.gmra.mrb[0].mxu0 %v228
    %v4109 = vpop.f32.mrb[0].mxu0
    %v4110 = vadd.f32 %v3917, %v4109
    %v4111 = vpop.f32.mrb[0].mxu0
    %v4112 = vadd.f32 %v3919, %v4111
    %v4113 = vpop.f32.mrb[0].mxu0
    %v4114 = vadd.f32 %v3921, %v4113
    %v4115 = vpop.f32.mrb[0].mxu0
    %v4116 = vadd.f32 %v3923, %v4115
    %4117 = vmatprep.mubr.bf16.mxu0 %v233
    %4118 = vmatmul.mubr.bf16.gmra.mrb[0].mxu0 %v232
    %v4119 = vpop.f32.mrb[0].mxu0
    %v4120 = vadd.f32 %v3927, %v4119
    %v4121 = vpop.f32.mrb[0].mxu0
    %v4122 = vadd.f32 %v3929, %v4121
    %v4123 = vpop.f32.mrb[0].mxu0
    %v4124 = vadd.f32 %v3931, %v4123
    %v4125 = vpop.f32.mrb[0].mxu0
    %v4126 = vadd.f32 %v3933, %v4125
    %4127 = vmatprep.mubr.bf16.mxu0 %v237
    %4128 = vmatmul.mubr.bf16.gmra.mrb[0].mxu0 %v236
    %v4129 = vpop.f32.mrb[0].mxu0
    %v4130 = vadd.f32 %v3937, %v4129
    %v4131 = vpop.f32.mrb[0].mxu0
    %v4132 = vadd.f32 %v3939, %v4131
    %v4133 = vpop.f32.mrb[0].mxu0
    %v4134 = vadd.f32 %v3941, %v4133
    %v4135 = vpop.f32.mrb[0].mxu0
    %v4136 = vadd.f32 %v3943, %v4135
    %4137 = vmatprep.mubr.bf16.mxu0 %v241
    %4138 = vmatmul.mubr.bf16.gmra.mrb[0].mxu0 %v240
    %v4139 = vpop.f32.mrb[0].mxu0
    %v4140 = vadd.f32 %v3947, %v4139
    %v4141 = vpop.f32.mrb[0].mxu0
    %v4142 = vadd.f32 %v3949, %v4141
    %v4143 = vpop.f32.mrb[0].mxu0
    %v4144 = vadd.f32 %v3951, %v4143
    %v4145 = vpop.f32.mrb[0].mxu0
    %v4146 = vadd.f32 %v3953, %v4145
    %4147 = vmatprep.mubr.bf16.mxu0 %v245
    %4148 = vmatmul.mubr.bf16.gmra.mrb[0].mxu0 %v244
    %v4149 = vpop.f32.mrb[0].mxu0
    %v4150 = vadd.f32 %v3957, %v4149
    %v4151 = vpop.f32.mrb[0].mxu0
    %v4152 = vadd.f32 %v3959, %v4151
    %v4153 = vpop.f32.mrb[0].mxu0
    %v4154 = vadd.f32 %v3961, %v4153
    %v4155 = vpop.f32.mrb[0].mxu0
    %v4156 = vadd.f32 %v3963, %v4155
    %4157 = vdwg.mxu0
    %4158 = vmatprep.subr.bf16.mxu0 %v1855
    %4159 = vmatpush1.bf16.msra.mxu0 %v1854
    %4160 = vmatprep.subr.bf16.mxu0 %v1867
    %4161 = vmatpush1.bf16.msra.mxu0 %v1866
    %4162 = vmatprep.subr.bf16.mxu0 %v1879
    %4163 = vmatpush1.bf16.msra.mxu0 %v1878
    %4164 = vmatprep.subr.bf16.mxu0 %v1891
    %4165 = vmatpush1.bf16.msra.mxu0 %v1890
    %4166 = vmatprep.subr.bf16.mxu0 %v1903
    %4167 = vmatpush1.bf16.msra.mxu0 %v1902
    %4168 = vmatprep.subr.bf16.mxu0 %v1915
    %4169 = vmatpush1.bf16.msra.mxu0 %v1914
    %4170 = vmatprep.subr.bf16.mxu0 %v1927
    %4171 = vmatpush1.bf16.msra.mxu0 %v1926
    %4172 = vmatprep.subr.bf16.mxu0 %v1939
    %4173 = vmatpush1.bf16.msra.mxu0 %v1938
    %4174 = vmatprep.subr.bf16.mxu0 %v1951
    %4175 = vmatpush1.bf16.msra.mxu0 %v1950
    %4176 = vmatprep.subr.bf16.mxu0 %v1963
    %4177 = vmatpush1.bf16.msra.mxu0 %v1962
    %4178 = vmatprep.subr.bf16.mxu0 %v1975
    %4179 = vmatpush1.bf16.msra.mxu0 %v1974
    %4180 = vmatprep.subr.bf16.mxu0 %v1987
    %4181 = vmatpush1.bf16.msra.mxu0 %v1986
    %4182 = vmatprep.subr.bf16.mxu0 %v1999
    %4183 = vmatpush1.bf16.msra.mxu0 %v1998
    %4184 = vmatprep.subr.bf16.mxu0 %v2011
    %4185 = vmatpush1.bf16.msra.mxu0 %v2010
    %4186 = vmatprep.subr.bf16.mxu0 %v2023
    %4187 = vmatpush1.bf16.msra.mxu0 %v2022
    %4188 = vmatprep.subr.bf16.mxu0 %v2035
    %4189 = vmatpush1.bf16.msra.mxu0 %v2034
    %4190 = vmatprep.mubr.bf16.mxu0 %v183
    %4191 = vmatmul.mubr.bf16.gmra.mrb[0].mxu0 %v182
    %v4192 = vpop.f32.mrb[0].mxu0
    %v4193 = vadd.f32 %v669, %v4192
    %v4194 = vpop.f32.mrb[0].mxu0
    %v4195 = vadd.f32 %v673, %v4194
    %v4196 = vpop.f32.mrb[0].mxu0
    %v4197 = vadd.f32 %v669, %v4196
    %v4198 = vpop.f32.mrb[0].mxu0
    %v4199 = vadd.f32 %v673, %v4198
    %4200 = vmatprep.mubr.bf16.mxu0 %v187
    %4201 = vmatmul.mubr.bf16.gmra.mrb[0].mxu0 %v186
    %v4202 = vpop.f32.mrb[0].mxu0
    %v4203 = vadd.f32 %v669, %v4202
    %v4204 = vpop.f32.mrb[0].mxu0
    %v4205 = vadd.f32 %v673, %v4204
    %v4206 = vpop.f32.mrb[0].mxu0
    %v4207 = vadd.f32 %v669, %v4206
    %v4208 = vpop.f32.mrb[0].mxu0
    %v4209 = vadd.f32 %v673, %v4208
    %4210 = vmatprep.mubr.bf16.mxu0 %v191
    %4211 = vmatmul.mubr.bf16.gmra.mrb[0].mxu0 %v190
    %v4212 = vpop.f32.mrb[0].mxu0
    %v4213 = vadd.f32 %v669, %v4212
    %v4214 = vpop.f32.mrb[0].mxu0
    %v4215 = vadd.f32 %v673, %v4214
    %v4216 = vpop.f32.mrb[0].mxu0
    %v4217 = vadd.f32 %v669, %v4216
    %v4218 = vpop.f32.mrb[0].mxu0
    %v4219 = vadd.f32 %v673, %v4218
    %4220 = vmatprep.mubr.bf16.mxu0 %v195
    %4221 = vmatmul.mubr.bf16.gmra.mrb[0].mxu0 %v194
    %v4222 = vpop.f32.mrb[0].mxu0
    %v4223 = vadd.f32 %v669, %v4222
    %v4224 = vpop.f32.mrb[0].mxu0
    %v4225 = vadd.f32 %v673, %v4224
    %v4226 = vpop.f32.mrb[0].mxu0
    %v4227 = vadd.f32 %v669, %v4226
    %v4228 = vpop.f32.mrb[0].mxu0
    %v4229 = vadd.f32 %v673, %v4228
    %4230 = vmatprep.mubr.bf16.mxu0 %v199
    %4231 = vmatmul.mubr.bf16.gmra.mrb[0].mxu0 %v198
    %v4232 = vpop.f32.mrb[0].mxu0
    %v4233 = vadd.f32 %v669, %v4232
    %v4234 = vpop.f32.mrb[0].mxu0
    %v4235 = vadd.f32 %v673, %v4234
    %v4236 = vpop.f32.mrb[0].mxu0
    %v4237 = vadd.f32 %v669, %v4236
    %v4238 = vpop.f32.mrb[0].mxu0
    %v4239 = vadd.f32 %v673, %v4238
    %4240 = vmatprep.mubr.bf16.mxu0 %v203
    %4241 = vmatmul.mubr.bf16.gmra.mrb[0].mxu0 %v202
    %v4242 = vpop.f32.mrb[0].mxu0
    %v4243 = vadd.f32 %v669, %v4242
    %v4244 = vpop.f32.mrb[0].mxu0
    %v4245 = vadd.f32 %v673, %v4244
    %v4246 = vpop.f32.mrb[0].mxu0
    %v4247 = vadd.f32 %v669, %v4246
    %v4248 = vpop.f32.mrb[0].mxu0
    %v4249 = vadd.f32 %v673, %v4248
    %4250 = vmatprep.mubr.bf16.mxu0 %v207
    %4251 = vmatmul.mubr.bf16.gmra.mrb[0].mxu0 %v206
    %v4252 = vpop.f32.mrb[0].mxu0
    %v4253 = vadd.f32 %v669, %v4252
    %v4254 = vpop.f32.mrb[0].mxu0
    %v4255 = vadd.f32 %v673, %v4254
    %v4256 = vpop.f32.mrb[0].mxu0
    %v4257 = vadd.f32 %v669, %v4256
    %v4258 = vpop.f32.mrb[0].mxu0
    %v4259 = vadd.f32 %v673, %v4258
    %4260 = vmatprep.mubr.bf16.mxu0 %v211
    %4261 = vmatmul.mubr.bf16.gmra.mrb[0].mxu0 %v210
    %v4262 = vpop.f32.mrb[0].mxu0
    %v4263 = vadd.f32 %v669, %v4262
    %v4264 = vpop.f32.mrb[0].mxu0
    %v4265 = vadd.f32 %v673, %v4264
    %v4266 = vpop.f32.mrb[0].mxu0
    %v4267 = vadd.f32 %v669, %v4266
    %v4268 = vpop.f32.mrb[0].mxu0
    %v4269 = vadd.f32 %v673, %v4268
    %4270 = vmatprep.mubr.bf16.mxu0 %v215
    %4271 = vmatmul.mubr.bf16.gmra.mrb[0].mxu0 %v214
    %v4272 = vpop.f32.mrb[0].mxu0
    %v4273 = vadd.f32 %v669, %v4272
    %v4274 = vpop.f32.mrb[0].mxu0
    %v4275 = vadd.f32 %v673, %v4274
    %v4276 = vpop.f32.mrb[0].mxu0
    %v4277 = vadd.f32 %v669, %v4276
    %v4278 = vpop.f32.mrb[0].mxu0
    %v4279 = vadd.f32 %v673, %v4278
    %4280 = vmatprep.mubr.bf16.mxu0 %v219
    %4281 = vmatmul.mubr.bf16.gmra.mrb[0].mxu0 %v218
    %v4282 = vpop.f32.mrb[0].mxu0
    %v4283 = vadd.f32 %v669, %v4282
    %v4284 = vpop.f32.mrb[0].mxu0
    %v4285 = vadd.f32 %v673, %v4284
    %v4286 = vpop.f32.mrb[0].mxu0
    %v4287 = vadd.f32 %v669, %v4286
    %v4288 = vpop.f32.mrb[0].mxu0
    %v4289 = vadd.f32 %v673, %v4288
    %4290 = vmatprep.mubr.bf16.mxu0 %v223
    %4291 = vmatmul.mubr.bf16.gmra.mrb[0].mxu0 %v222
    %v4292 = vpop.f32.mrb[0].mxu0
    %v4293 = vadd.f32 %v669, %v4292
    %v4294 = vpop.f32.mrb[0].mxu0
    %v4295 = vadd.f32 %v673, %v4294
    %v4296 = vpop.f32.mrb[0].mxu0
    %v4297 = vadd.f32 %v669, %v4296
    %v4298 = vpop.f32.mrb[0].mxu0
    %v4299 = vadd.f32 %v673, %v4298
    %4300 = vmatprep.mubr.bf16.mxu0 %v227
    %4301 = vmatmul.mubr.bf16.gmra.mrb[0].mxu0 %v226
    %v4302 = vpop.f32.mrb[0].mxu0
    %v4303 = vadd.f32 %v669, %v4302
    %v4304 = vpop.f32.mrb[0].mxu0
    %v4305 = vadd.f32 %v673, %v4304
    %v4306 = vpop.f32.mrb[0].mxu0
    %v4307 = vadd.f32 %v669, %v4306
    %v4308 = vpop.f32.mrb[0].mxu0
    %v4309 = vadd.f32 %v673, %v4308
    %4310 = vmatprep.mubr.bf16.mxu0 %v231
    %4311 = vmatmul.mubr.bf16.gmra.mrb[0].mxu0 %v230
    %v4312 = vpop.f32.mrb[0].mxu0
    %v4313 = vadd.f32 %v669, %v4312
    %v4314 = vpop.f32.mrb[0].mxu0
    %v4315 = vadd.f32 %v673, %v4314
    %v4316 = vpop.f32.mrb[0].mxu0
    %v4317 = vadd.f32 %v669, %v4316
    %v4318 = vpop.f32.mrb[0].mxu0
    %v4319 = vadd.f32 %v673, %v4318
    %4320 = vmatprep.mubr.bf16.mxu0 %v235
    %4321 = vmatmul.mubr.bf16.gmra.mrb[0].mxu0 %v234
    %v4322 = vpop.f32.mrb[0].mxu0
    %v4323 = vadd.f32 %v669, %v4322
    %v4324 = vpop.f32.mrb[0].mxu0
    %v4325 = vadd.f32 %v673, %v4324
    %v4326 = vpop.f32.mrb[0].mxu0
    %v4327 = vadd.f32 %v669, %v4326
    %v4328 = vpop.f32.mrb[0].mxu0
    %v4329 = vadd.f32 %v673, %v4328
    %4330 = vmatprep.mubr.bf16.mxu0 %v239
    %4331 = vmatmul.mubr.bf16.gmra.mrb[0].mxu0 %v238
    %v4332 = vpop.f32.mrb[0].mxu0
    %v4333 = vadd.f32 %v669, %v4332
    %v4334 = vpop.f32.mrb[0].mxu0
    %v4335 = vadd.f32 %v673, %v4334
    %v4336 = vpop.f32.mrb[0].mxu0
    %v4337 = vadd.f32 %v669, %v4336
    %v4338 = vpop.f32.mrb[0].mxu0
    %v4339 = vadd.f32 %v673, %v4338
    %4340 = vmatprep.mubr.bf16.mxu0 %v243
    %4341 = vmatmul.mubr.bf16.gmra.mrb[0].mxu0 %v242
    %v4342 = vpop.f32.mrb[0].mxu0
    %v4343 = vadd.f32 %v669, %v4342
    %v4344 = vpop.f32.mrb[0].mxu0
    %v4345 = vadd.f32 %v673, %v4344
    %v4346 = vpop.f32.mrb[0].mxu0
    %v4347 = vadd.f32 %v669, %v4346
    %v4348 = vpop.f32.mrb[0].mxu0
    %v4349 = vadd.f32 %v673, %v4348
    %4350 = vdwg.mxu0
    %4351 = vmatprep.subr.bf16.mxu0 %v2047
    %4352 = vmatpush1.bf16.msra.mxu0 %v2046
    %4353 = vmatprep.subr.bf16.mxu0 %v2059
    %4354 = vmatpush1.bf16.msra.mxu0 %v2058
    %4355 = vmatprep.subr.bf16.mxu0 %v2071
    %4356 = vmatpush1.bf16.msra.mxu0 %v2070
    %4357 = vmatprep.subr.bf16.mxu0 %v2083
    %4358 = vmatpush1.bf16.msra.mxu0 %v2082
    %4359 = vmatprep.subr.bf16.mxu0 %v2095
    %4360 = vmatpush1.bf16.msra.mxu0 %v2094
    %4361 = vmatprep.subr.bf16.mxu0 %v2107
    %4362 = vmatpush1.bf16.msra.mxu0 %v2106
    %4363 = vmatprep.subr.bf16.mxu0 %v2119
    %4364 = vmatpush1.bf16.msra.mxu0 %v2118
    %4365 = vmatprep.subr.bf16.mxu0 %v2131
    %4366 = vmatpush1.bf16.msra.mxu0 %v2130
    %4367 = vmatprep.subr.bf16.mxu0 %v2143
    %4368 = vmatpush1.bf16.msra.mxu0 %v2142
    %4369 = vmatprep.subr.bf16.mxu0 %v2155
    %4370 = vmatpush1.bf16.msra.mxu0 %v2154
    %4371 = vmatprep.subr.bf16.mxu0 %v2167
    %4372 = vmatpush1.bf16.msra.mxu0 %v2166
    %4373 = vmatprep.subr.bf16.mxu0 %v2179
    %4374 = vmatpush1.bf16.msra.mxu0 %v2178
    %4375 = vmatprep.subr.bf16.mxu0 %v2191
    %4376 = vmatpush1.bf16.msra.mxu0 %v2190
    %4377 = vmatprep.subr.bf16.mxu0 %v2203
    %4378 = vmatpush1.bf16.msra.mxu0 %v2202
    %4379 = vmatprep.subr.bf16.mxu0 %v2215
    %4380 = vmatpush1.bf16.msra.mxu0 %v2214
    %4381 = vmatprep.subr.bf16.mxu0 %v2227
    %4382 = vmatpush1.bf16.msra.mxu0 %v2226
    %4383 = vmatprep.mubr.bf16.mxu0 %v185
    %4384 = vmatmul.mubr.bf16.gmra.mrb[0].mxu0 %v184
    %v4385 = vpop.f32.mrb[0].mxu0
    %v4386 = vadd.f32 %v4193, %v4385
    %v4387 = vpop.f32.mrb[0].mxu0
    %v4388 = vadd.f32 %v4195, %v4387
    %v4389 = vpop.f32.mrb[0].mxu0
    %v4390 = vadd.f32 %v4197, %v4389
    %v4391 = vpop.f32.mrb[0].mxu0
    %v4392 = vadd.f32 %v4199, %v4391
    %4393 = vmatprep.mubr.bf16.mxu0 %v189
    %4394 = vmatmul.mubr.bf16.gmra.mrb[0].mxu0 %v188
    %v4395 = vpop.f32.mrb[0].mxu0
    %v4396 = vadd.f32 %v4203, %v4395
    %v4397 = vpop.f32.mrb[0].mxu0
    %v4398 = vadd.f32 %v4205, %v4397
    %v4399 = vpop.f32.mrb[0].mxu0
    %v4400 = vadd.f32 %v4207, %v4399
    %v4401 = vpop.f32.mrb[0].mxu0
    %v4402 = vadd.f32 %v4209, %v4401
    %4403 = vmatprep.mubr.bf16.mxu0 %v193
    %4404 = vmatmul.mubr.bf16.gmra.mrb[0].mxu0 %v192
    %v4405 = vpop.f32.mrb[0].mxu0
    %v4406 = vadd.f32 %v4213, %v4405
    %v4407 = vpop.f32.mrb[0].mxu0
    %v4408 = vadd.f32 %v4215, %v4407
    %v4409 = vpop.f32.mrb[0].mxu0
    %v4410 = vadd.f32 %v4217, %v4409
    %v4411 = vpop.f32.mrb[0].mxu0
    %v4412 = vadd.f32 %v4219, %v4411
    %4413 = vmatprep.mubr.bf16.mxu0 %v197
    %4414 = vmatmul.mubr.bf16.gmra.mrb[0].mxu0 %v196
    %v4415 = vpop.f32.mrb[0].mxu0
    %v4416 = vadd.f32 %v4223, %v4415
    %v4417 = vpop.f32.mrb[0].mxu0
    %v4418 = vadd.f32 %v4225, %v4417
    %v4419 = vpop.f32.mrb[0].mxu0
    %v4420 = vadd.f32 %v4227, %v4419
    %v4421 = vpop.f32.mrb[0].mxu0
    %v4422 = vadd.f32 %v4229, %v4421
    %4423 = vmatprep.mubr.bf16.mxu0 %v201
    %4424 = vmatmul.mubr.bf16.gmra.mrb[0].mxu0 %v200
    %v4425 = vpop.f32.mrb[0].mxu0
    %v4426 = vadd.f32 %v4233, %v4425
    %v4427 = vpop.f32.mrb[0].mxu0
    %v4428 = vadd.f32 %v4235, %v4427
    %v4429 = vpop.f32.mrb[0].mxu0
    %v4430 = vadd.f32 %v4237, %v4429
    %v4431 = vpop.f32.mrb[0].mxu0
    %v4432 = vadd.f32 %v4239, %v4431
    %4433 = vmatprep.mubr.bf16.mxu0 %v205
    %4434 = vmatmul.mubr.bf16.gmra.mrb[0].mxu0 %v204
    %v4435 = vpop.f32.mrb[0].mxu0
    %v4436 = vadd.f32 %v4243, %v4435
    %v4437 = vpop.f32.mrb[0].mxu0
    %v4438 = vadd.f32 %v4245, %v4437
    %v4439 = vpop.f32.mrb[0].mxu0
    %v4440 = vadd.f32 %v4247, %v4439
    %v4441 = vpop.f32.mrb[0].mxu0
    %v4442 = vadd.f32 %v4249, %v4441
    %4443 = vmatprep.mubr.bf16.mxu0 %v209
    %4444 = vmatmul.mubr.bf16.gmra.mrb[0].mxu0 %v208
    %v4445 = vpop.f32.mrb[0].mxu0
    %v4446 = vadd.f32 %v4253, %v4445
    %v4447 = vpop.f32.mrb[0].mxu0
    %v4448 = vadd.f32 %v4255, %v4447
    %v4449 = vpop.f32.mrb[0].mxu0
    %v4450 = vadd.f32 %v4257, %v4449
    %v4451 = vpop.f32.mrb[0].mxu0
    %v4452 = vadd.f32 %v4259, %v4451
    %4453 = vmatprep.mubr.bf16.mxu0 %v213
    %4454 = vmatmul.mubr.bf16.gmra.mrb[0].mxu0 %v212
    %v4455 = vpop.f32.mrb[0].mxu0
    %v4456 = vadd.f32 %v4263, %v4455
    %v4457 = vpop.f32.mrb[0].mxu0
    %v4458 = vadd.f32 %v4265, %v4457
    %v4459 = vpop.f32.mrb[0].mxu0
    %v4460 = vadd.f32 %v4267, %v4459
    %v4461 = vpop.f32.mrb[0].mxu0
    %v4462 = vadd.f32 %v4269, %v4461
    %4463 = vmatprep.mubr.bf16.mxu0 %v217
    %4464 = vmatmul.mubr.bf16.gmra.mrb[0].mxu0 %v216
    %v4465 = vpop.f32.mrb[0].mxu0
    %v4466 = vadd.f32 %v4273, %v4465
    %v4467 = vpop.f32.mrb[0].mxu0
    %v4468 = vadd.f32 %v4275, %v4467
    %v4469 = vpop.f32.mrb[0].mxu0
    %v4470 = vadd.f32 %v4277, %v4469
    %v4471 = vpop.f32.mrb[0].mxu0
    %v4472 = vadd.f32 %v4279, %v4471
    %4473 = vmatprep.mubr.bf16.mxu0 %v221
    %4474 = vmatmul.mubr.bf16.gmra.mrb[0].mxu0 %v220
    %v4475 = vpop.f32.mrb[0].mxu0
    %v4476 = vadd.f32 %v4283, %v4475
    %v4477 = vpop.f32.mrb[0].mxu0
    %v4478 = vadd.f32 %v4285, %v4477
    %v4479 = vpop.f32.mrb[0].mxu0
    %v4480 = vadd.f32 %v4287, %v4479
    %v4481 = vpop.f32.mrb[0].mxu0
    %v4482 = vadd.f32 %v4289, %v4481
    %4483 = vmatprep.mubr.bf16.mxu0 %v225
    %4484 = vmatmul.mubr.bf16.gmra.mrb[0].mxu0 %v224
    %v4485 = vpop.f32.mrb[0].mxu0
    %v4486 = vadd.f32 %v4293, %v4485
    %v4487 = vpop.f32.mrb[0].mxu0
    %v4488 = vadd.f32 %v4295, %v4487
    %v4489 = vpop.f32.mrb[0].mxu0
    %v4490 = vadd.f32 %v4297, %v4489
    %v4491 = vpop.f32.mrb[0].mxu0
    %v4492 = vadd.f32 %v4299, %v4491
    %4493 = vmatprep.mubr.bf16.mxu0 %v229
    %4494 = vmatmul.mubr.bf16.gmra.mrb[0].mxu0 %v228
    %v4495 = vpop.f32.mrb[0].mxu0
    %v4496 = vadd.f32 %v4303, %v4495
    %v4497 = vpop.f32.mrb[0].mxu0
    %v4498 = vadd.f32 %v4305, %v4497
    %v4499 = vpop.f32.mrb[0].mxu0
    %v4500 = vadd.f32 %v4307, %v4499
    %v4501 = vpop.f32.mrb[0].mxu0
    %v4502 = vadd.f32 %v4309, %v4501
    %4503 = vmatprep.mubr.bf16.mxu0 %v233
    %4504 = vmatmul.mubr.bf16.gmra.mrb[0].mxu0 %v232
    %v4505 = vpop.f32.mrb[0].mxu0
    %v4506 = vadd.f32 %v4313, %v4505
    %v4507 = vpop.f32.mrb[0].mxu0
    %v4508 = vadd.f32 %v4315, %v4507
    %v4509 = vpop.f32.mrb[0].mxu0
    %v4510 = vadd.f32 %v4317, %v4509
    %v4511 = vpop.f32.mrb[0].mxu0
    %v4512 = vadd.f32 %v4319, %v4511
    %4513 = vmatprep.mubr.bf16.mxu0 %v237
    %4514 = vmatmul.mubr.bf16.gmra.mrb[0].mxu0 %v236
    %v4515 = vpop.f32.mrb[0].mxu0
    %v4516 = vadd.f32 %v4323, %v4515
    %v4517 = vpop.f32.mrb[0].mxu0
    %v4518 = vadd.f32 %v4325, %v4517
    %v4519 = vpop.f32.mrb[0].mxu0
    %v4520 = vadd.f32 %v4327, %v4519
    %v4521 = vpop.f32.mrb[0].mxu0
    %v4522 = vadd.f32 %v4329, %v4521
    %4523 = vmatprep.mubr.bf16.mxu0 %v241
    %4524 = vmatmul.mubr.bf16.gmra.mrb[0].mxu0 %v240
    %v4525 = vpop.f32.mrb[0].mxu0
    %v4526 = vadd.f32 %v4333, %v4525
    %v4527 = vpop.f32.mrb[0].mxu0
    %v4528 = vadd.f32 %v4335, %v4527
    %v4529 = vpop.f32.mrb[0].mxu0
    %v4530 = vadd.f32 %v4337, %v4529
    %v4531 = vpop.f32.mrb[0].mxu0
    %v4532 = vadd.f32 %v4339, %v4531
    %4533 = vmatprep.mubr.bf16.mxu0 %v245
    %4534 = vmatmul.mubr.bf16.gmra.mrb[0].mxu0 %v244
    %v4535 = vpop.f32.mrb[0].mxu0
    %v4536 = vadd.f32 %v4343, %v4535
    %v4537 = vpop.f32.mrb[0].mxu0
    %v4538 = vadd.f32 %v4345, %v4537
    %v4539 = vpop.f32.mrb[0].mxu0
    %v4540 = vadd.f32 %v4347, %v4539
    %v4541 = vpop.f32.mrb[0].mxu0
    %v4542 = vadd.f32 %v4349, %v4541
    %4543 = vdwg.mxu0
    %4544 = vmatprep.subr.bf16.mxu0 %v1857
    %4545 = vmatpush1.bf16.msra.mxu0 %v1856
    %4546 = vmatprep.subr.bf16.mxu0 %v1869
    %4547 = vmatpush1.bf16.msra.mxu0 %v1868
    %4548 = vmatprep.subr.bf16.mxu0 %v1881
    %4549 = vmatpush1.bf16.msra.mxu0 %v1880
    %4550 = vmatprep.subr.bf16.mxu0 %v1893
    %4551 = vmatpush1.bf16.msra.mxu0 %v1892
    %4552 = vmatprep.subr.bf16.mxu0 %v1905
    %4553 = vmatpush1.bf16.msra.mxu0 %v1904
    %4554 = vmatprep.subr.bf16.mxu0 %v1917
    %4555 = vmatpush1.bf16.msra.mxu0 %v1916
    %4556 = vmatprep.subr.bf16.mxu0 %v1929
    %4557 = vmatpush1.bf16.msra.mxu0 %v1928
    %4558 = vmatprep.subr.bf16.mxu0 %v1941
    %4559 = vmatpush1.bf16.msra.mxu0 %v1940
    %4560 = vmatprep.subr.bf16.mxu0 %v1953
    %4561 = vmatpush1.bf16.msra.mxu0 %v1952
    %4562 = vmatprep.subr.bf16.mxu0 %v1965
    %4563 = vmatpush1.bf16.msra.mxu0 %v1964
    %4564 = vmatprep.subr.bf16.mxu0 %v1977
    %4565 = vmatpush1.bf16.msra.mxu0 %v1976
    %4566 = vmatprep.subr.bf16.mxu0 %v1989
    %4567 = vmatpush1.bf16.msra.mxu0 %v1988
    %4568 = vmatprep.subr.bf16.mxu0 %v2001
    %4569 = vmatpush1.bf16.msra.mxu0 %v2000
    %4570 = vmatprep.subr.bf16.mxu0 %v2013
    %4571 = vmatpush1.bf16.msra.mxu0 %v2012
    %4572 = vmatprep.subr.bf16.mxu0 %v2025
    %4573 = vmatpush1.bf16.msra.mxu0 %v2024
    %4574 = vmatprep.subr.bf16.mxu0 %v2037
    %4575 = vmatpush1.bf16.msra.mxu0 %v2036
    %4576 = vmatprep.mubr.bf16.mxu0 %v183
    %4577 = vmatmul.mubr.bf16.gmra.mrb[0].mxu0 %v182
    %v4578 = vpop.f32.mrb[0].mxu0
    %v4579 = vadd.f32 %v677, %v4578
    %v4580 = vpop.f32.mrb[0].mxu0
    %v4581 = vadd.f32 %v681, %v4580
    %v4582 = vpop.f32.mrb[0].mxu0
    %v4583 = vadd.f32 %v677, %v4582
    %v4584 = vpop.f32.mrb[0].mxu0
    %v4585 = vadd.f32 %v681, %v4584
    %4586 = vmatprep.mubr.bf16.mxu0 %v187
    %4587 = vmatmul.mubr.bf16.gmra.mrb[0].mxu0 %v186
    %v4588 = vpop.f32.mrb[0].mxu0
    %v4589 = vadd.f32 %v677, %v4588
    %v4590 = vpop.f32.mrb[0].mxu0
    %v4591 = vadd.f32 %v681, %v4590
    %v4592 = vpop.f32.mrb[0].mxu0
    %v4593 = vadd.f32 %v677, %v4592
    %v4594 = vpop.f32.mrb[0].mxu0
    %v4595 = vadd.f32 %v681, %v4594
    %4596 = vmatprep.mubr.bf16.mxu0 %v191
    %4597 = vmatmul.mubr.bf16.gmra.mrb[0].mxu0 %v190
    %v4598 = vpop.f32.mrb[0].mxu0
    %v4599 = vadd.f32 %v677, %v4598
    %v4600 = vpop.f32.mrb[0].mxu0
    %v4601 = vadd.f32 %v681, %v4600
    %v4602 = vpop.f32.mrb[0].mxu0
    %v4603 = vadd.f32 %v677, %v4602
    %v4604 = vpop.f32.mrb[0].mxu0
    %v4605 = vadd.f32 %v681, %v4604
    %4606 = vmatprep.mubr.bf16.mxu0 %v195
    %4607 = vmatmul.mubr.bf16.gmra.mrb[0].mxu0 %v194
    %v4608 = vpop.f32.mrb[0].mxu0
    %v4609 = vadd.f32 %v677, %v4608
    %v4610 = vpop.f32.mrb[0].mxu0
    %v4611 = vadd.f32 %v681, %v4610
    %v4612 = vpop.f32.mrb[0].mxu0
    %v4613 = vadd.f32 %v677, %v4612
    %v4614 = vpop.f32.mrb[0].mxu0
    %v4615 = vadd.f32 %v681, %v4614
    %4616 = vmatprep.mubr.bf16.mxu0 %v199
    %4617 = vmatmul.mubr.bf16.gmra.mrb[0].mxu0 %v198
    %v4618 = vpop.f32.mrb[0].mxu0
    %v4619 = vadd.f32 %v677, %v4618
    %v4620 = vpop.f32.mrb[0].mxu0
    %v4621 = vadd.f32 %v681, %v4620
    %v4622 = vpop.f32.mrb[0].mxu0
    %v4623 = vadd.f32 %v677, %v4622
    %v4624 = vpop.f32.mrb[0].mxu0
    %v4625 = vadd.f32 %v681, %v4624
    %4626 = vmatprep.mubr.bf16.mxu0 %v203
    %4627 = vmatmul.mubr.bf16.gmra.mrb[0].mxu0 %v202
    %v4628 = vpop.f32.mrb[0].mxu0
    %v4629 = vadd.f32 %v677, %v4628
    %v4630 = vpop.f32.mrb[0].mxu0
    %v4631 = vadd.f32 %v681, %v4630
    %v4632 = vpop.f32.mrb[0].mxu0
    %v4633 = vadd.f32 %v677, %v4632
    %v4634 = vpop.f32.mrb[0].mxu0
    %v4635 = vadd.f32 %v681, %v4634
    %4636 = vmatprep.mubr.bf16.mxu0 %v207
    %4637 = vmatmul.mubr.bf16.gmra.mrb[0].mxu0 %v206
    %v4638 = vpop.f32.mrb[0].mxu0
    %v4639 = vadd.f32 %v677, %v4638
    %v4640 = vpop.f32.mrb[0].mxu0
    %v4641 = vadd.f32 %v681, %v4640
    %v4642 = vpop.f32.mrb[0].mxu0
    %v4643 = vadd.f32 %v677, %v4642
    %v4644 = vpop.f32.mrb[0].mxu0
    %v4645 = vadd.f32 %v681, %v4644
    %4646 = vmatprep.mubr.bf16.mxu0 %v211
    %4647 = vmatmul.mubr.bf16.gmra.mrb[0].mxu0 %v210
    %v4648 = vpop.f32.mrb[0].mxu0
    %v4649 = vadd.f32 %v677, %v4648
    %v4650 = vpop.f32.mrb[0].mxu0
    %v4651 = vadd.f32 %v681, %v4650
    %v4652 = vpop.f32.mrb[0].mxu0
    %v4653 = vadd.f32 %v677, %v4652
    %v4654 = vpop.f32.mrb[0].mxu0
    %v4655 = vadd.f32 %v681, %v4654
    %4656 = vmatprep.mubr.bf16.mxu0 %v215
    %4657 = vmatmul.mubr.bf16.gmra.mrb[0].mxu0 %v214
    %v4658 = vpop.f32.mrb[0].mxu0
    %v4659 = vadd.f32 %v677, %v4658
    %v4660 = vpop.f32.mrb[0].mxu0
    %v4661 = vadd.f32 %v681, %v4660
    %v4662 = vpop.f32.mrb[0].mxu0
    %v4663 = vadd.f32 %v677, %v4662
    %v4664 = vpop.f32.mrb[0].mxu0
    %v4665 = vadd.f32 %v681, %v4664
    %4666 = vmatprep.mubr.bf16.mxu0 %v219
    %4667 = vmatmul.mubr.bf16.gmra.mrb[0].mxu0 %v218
    %v4668 = vpop.f32.mrb[0].mxu0
    %v4669 = vadd.f32 %v677, %v4668
    %v4670 = vpop.f32.mrb[0].mxu0
    %v4671 = vadd.f32 %v681, %v4670
    %v4672 = vpop.f32.mrb[0].mxu0
    %v4673 = vadd.f32 %v677, %v4672
    %v4674 = vpop.f32.mrb[0].mxu0
    %v4675 = vadd.f32 %v681, %v4674
    %4676 = vmatprep.mubr.bf16.mxu0 %v223
    %4677 = vmatmul.mubr.bf16.gmra.mrb[0].mxu0 %v222
    %v4678 = vpop.f32.mrb[0].mxu0
    %v4679 = vadd.f32 %v677, %v4678
    %v4680 = vpop.f32.mrb[0].mxu0
    %v4681 = vadd.f32 %v681, %v4680
    %v4682 = vpop.f32.mrb[0].mxu0
    %v4683 = vadd.f32 %v677, %v4682
    %v4684 = vpop.f32.mrb[0].mxu0
    %v4685 = vadd.f32 %v681, %v4684
    %4686 = vmatprep.mubr.bf16.mxu0 %v227
    %4687 = vmatmul.mubr.bf16.gmra.mrb[0].mxu0 %v226
    %v4688 = vpop.f32.mrb[0].mxu0
    %v4689 = vadd.f32 %v677, %v4688
    %v4690 = vpop.f32.mrb[0].mxu0
    %v4691 = vadd.f32 %v681, %v4690
    %v4692 = vpop.f32.mrb[0].mxu0
    %v4693 = vadd.f32 %v677, %v4692
    %v4694 = vpop.f32.mrb[0].mxu0
    %v4695 = vadd.f32 %v681, %v4694
    %4696 = vmatprep.mubr.bf16.mxu0 %v231
    %4697 = vmatmul.mubr.bf16.gmra.mrb[0].mxu0 %v230
    %v4698 = vpop.f32.mrb[0].mxu0
    %v4699 = vadd.f32 %v677, %v4698
    %v4700 = vpop.f32.mrb[0].mxu0
    %v4701 = vadd.f32 %v681, %v4700
    %v4702 = vpop.f32.mrb[0].mxu0
    %v4703 = vadd.f32 %v677, %v4702
    %v4704 = vpop.f32.mrb[0].mxu0
    %v4705 = vadd.f32 %v681, %v4704
    %4706 = vmatprep.mubr.bf16.mxu0 %v235
    %4707 = vmatmul.mubr.bf16.gmra.mrb[0].mxu0 %v234
    %v4708 = vpop.f32.mrb[0].mxu0
    %v4709 = vadd.f32 %v677, %v4708
    %v4710 = vpop.f32.mrb[0].mxu0
    %v4711 = vadd.f32 %v681, %v4710
    %v4712 = vpop.f32.mrb[0].mxu0
    %v4713 = vadd.f32 %v677, %v4712
    %v4714 = vpop.f32.mrb[0].mxu0
    %v4715 = vadd.f32 %v681, %v4714
    %4716 = vmatprep.mubr.bf16.mxu0 %v239
    %4717 = vmatmul.mubr.bf16.gmra.mrb[0].mxu0 %v238
    %v4718 = vpop.f32.mrb[0].mxu0
    %v4719 = vadd.f32 %v677, %v4718
    %v4720 = vpop.f32.mrb[0].mxu0
    %v4721 = vadd.f32 %v681, %v4720
    %v4722 = vpop.f32.mrb[0].mxu0
    %v4723 = vadd.f32 %v677, %v4722
    %v4724 = vpop.f32.mrb[0].mxu0
    %v4725 = vadd.f32 %v681, %v4724
    %4726 = vmatprep.mubr.bf16.mxu0 %v243
    %4727 = vmatmul.mubr.bf16.gmra.mrb[0].mxu0 %v242
    %v4728 = vpop.f32.mrb[0].mxu0
    %v4729 = vadd.f32 %v677, %v4728
    %v4730 = vpop.f32.mrb[0].mxu0
    %v4731 = vadd.f32 %v681, %v4730
    %v4732 = vpop.f32.mrb[0].mxu0
    %v4733 = vadd.f32 %v677, %v4732
    %v4734 = vpop.f32.mrb[0].mxu0
    %v4735 = vadd.f32 %v681, %v4734
    %4736 = vdwg.mxu0
    %4737 = vmatprep.subr.bf16.mxu0 %v2049
    %4738 = vmatpush1.bf16.msra.mxu0 %v2048
    %4739 = vmatprep.subr.bf16.mxu0 %v2061
    %4740 = vmatpush1.bf16.msra.mxu0 %v2060
    %4741 = vmatprep.subr.bf16.mxu0 %v2073
    %4742 = vmatpush1.bf16.msra.mxu0 %v2072
    %4743 = vmatprep.subr.bf16.mxu0 %v2085
    %4744 = vmatpush1.bf16.msra.mxu0 %v2084
    %4745 = vmatprep.subr.bf16.mxu0 %v2097
    %4746 = vmatpush1.bf16.msra.mxu0 %v2096
    %4747 = vmatprep.subr.bf16.mxu0 %v2109
    %4748 = vmatpush1.bf16.msra.mxu0 %v2108
    %4749 = vmatprep.subr.bf16.mxu0 %v2121
    %4750 = vmatpush1.bf16.msra.mxu0 %v2120
    %4751 = vmatprep.subr.bf16.mxu0 %v2133
    %4752 = vmatpush1.bf16.msra.mxu0 %v2132
    %4753 = vmatprep.subr.bf16.mxu0 %v2145
    %4754 = vmatpush1.bf16.msra.mxu0 %v2144
    %4755 = vmatprep.subr.bf16.mxu0 %v2157
    %4756 = vmatpush1.bf16.msra.mxu0 %v2156
    %4757 = vmatprep.subr.bf16.mxu0 %v2169
    %4758 = vmatpush1.bf16.msra.mxu0 %v2168
    %4759 = vmatprep.subr.bf16.mxu0 %v2181
    %4760 = vmatpush1.bf16.msra.mxu0 %v2180
    %4761 = vmatprep.subr.bf16.mxu0 %v2193
    %4762 = vmatpush1.bf16.msra.mxu0 %v2192
    %4763 = vmatprep.subr.bf16.mxu0 %v2205
    %4764 = vmatpush1.bf16.msra.mxu0 %v2204
    %4765 = vmatprep.subr.bf16.mxu0 %v2217
    %4766 = vmatpush1.bf16.msra.mxu0 %v2216
    %4767 = vmatprep.subr.bf16.mxu0 %v2229
    %4768 = vmatpush1.bf16.msra.mxu0 %v2228
    %4769 = vmatprep.mubr.bf16.mxu0 %v185
    %4770 = vmatmul.mubr.bf16.gmra.mrb[0].mxu0 %v184
    %v4771 = vpop.f32.mrb[0].mxu0
    %v4772 = vadd.f32 %v4579, %v4771
    %v4773 = vpop.f32.mrb[0].mxu0
    %v4774 = vadd.f32 %v4581, %v4773
    %v4775 = vpop.f32.mrb[0].mxu0
    %v4776 = vadd.f32 %v4583, %v4775
    %v4777 = vpop.f32.mrb[0].mxu0
    %v4778 = vadd.f32 %v4585, %v4777
    %4779 = vmatprep.mubr.bf16.mxu0 %v189
    %4780 = vmatmul.mubr.bf16.gmra.mrb[0].mxu0 %v188
    %v4781 = vpop.f32.mrb[0].mxu0
    %v4782 = vadd.f32 %v4589, %v4781
    %v4783 = vpop.f32.mrb[0].mxu0
    %v4784 = vadd.f32 %v4591, %v4783
    %v4785 = vpop.f32.mrb[0].mxu0
    %v4786 = vadd.f32 %v4593, %v4785
    %v4787 = vpop.f32.mrb[0].mxu0
    %v4788 = vadd.f32 %v4595, %v4787
    %4789 = vmatprep.mubr.bf16.mxu0 %v193
    %4790 = vmatmul.mubr.bf16.gmra.mrb[0].mxu0 %v192
    %v4791 = vpop.f32.mrb[0].mxu0
    %v4792 = vadd.f32 %v4599, %v4791
    %v4793 = vpop.f32.mrb[0].mxu0
    %v4794 = vadd.f32 %v4601, %v4793
    %v4795 = vpop.f32.mrb[0].mxu0
    %v4796 = vadd.f32 %v4603, %v4795
    %v4797 = vpop.f32.mrb[0].mxu0
    %v4798 = vadd.f32 %v4605, %v4797
    %4799 = vmatprep.mubr.bf16.mxu0 %v197
    %4800 = vmatmul.mubr.bf16.gmra.mrb[0].mxu0 %v196
    %v4801 = vpop.f32.mrb[0].mxu0
    %v4802 = vadd.f32 %v4609, %v4801
    %v4803 = vpop.f32.mrb[0].mxu0
    %v4804 = vadd.f32 %v4611, %v4803
    %v4805 = vpop.f32.mrb[0].mxu0
    %v4806 = vadd.f32 %v4613, %v4805
    %v4807 = vpop.f32.mrb[0].mxu0
    %v4808 = vadd.f32 %v4615, %v4807
    %4809 = vmatprep.mubr.bf16.mxu0 %v201
    %4810 = vmatmul.mubr.bf16.gmra.mrb[0].mxu0 %v200
    %v4811 = vpop.f32.mrb[0].mxu0
    %v4812 = vadd.f32 %v4619, %v4811
    %v4813 = vpop.f32.mrb[0].mxu0
    %v4814 = vadd.f32 %v4621, %v4813
    %v4815 = vpop.f32.mrb[0].mxu0
    %v4816 = vadd.f32 %v4623, %v4815
    %v4817 = vpop.f32.mrb[0].mxu0
    %v4818 = vadd.f32 %v4625, %v4817
    %4819 = vmatprep.mubr.bf16.mxu0 %v205
    %4820 = vmatmul.mubr.bf16.gmra.mrb[0].mxu0 %v204
    %v4821 = vpop.f32.mrb[0].mxu0
    %v4822 = vadd.f32 %v4629, %v4821
    %v4823 = vpop.f32.mrb[0].mxu0
    %v4824 = vadd.f32 %v4631, %v4823
    %v4825 = vpop.f32.mrb[0].mxu0
    %v4826 = vadd.f32 %v4633, %v4825
    %v4827 = vpop.f32.mrb[0].mxu0
    %v4828 = vadd.f32 %v4635, %v4827
    %4829 = vmatprep.mubr.bf16.mxu0 %v209
    %4830 = vmatmul.mubr.bf16.gmra.mrb[0].mxu0 %v208
    %v4831 = vpop.f32.mrb[0].mxu0
    %v4832 = vadd.f32 %v4639, %v4831
    %v4833 = vpop.f32.mrb[0].mxu0
    %v4834 = vadd.f32 %v4641, %v4833
    %v4835 = vpop.f32.mrb[0].mxu0
    %v4836 = vadd.f32 %v4643, %v4835
    %v4837 = vpop.f32.mrb[0].mxu0
    %v4838 = vadd.f32 %v4645, %v4837
    %4839 = vmatprep.mubr.bf16.mxu0 %v213
    %4840 = vmatmul.mubr.bf16.gmra.mrb[0].mxu0 %v212
    %v4841 = vpop.f32.mrb[0].mxu0
    %v4842 = vadd.f32 %v4649, %v4841
    %v4843 = vpop.f32.mrb[0].mxu0
    %v4844 = vadd.f32 %v4651, %v4843
    %v4845 = vpop.f32.mrb[0].mxu0
    %v4846 = vadd.f32 %v4653, %v4845
    %v4847 = vpop.f32.mrb[0].mxu0
    %v4848 = vadd.f32 %v4655, %v4847
    %4849 = vmatprep.mubr.bf16.mxu0 %v217
    %4850 = vmatmul.mubr.bf16.gmra.mrb[0].mxu0 %v216
    %v4851 = vpop.f32.mrb[0].mxu0
    %v4852 = vadd.f32 %v4659, %v4851
    %v4853 = vpop.f32.mrb[0].mxu0
    %v4854 = vadd.f32 %v4661, %v4853
    %v4855 = vpop.f32.mrb[0].mxu0
    %v4856 = vadd.f32 %v4663, %v4855
    %v4857 = vpop.f32.mrb[0].mxu0
    %v4858 = vadd.f32 %v4665, %v4857
    %4859 = vmatprep.mubr.bf16.mxu0 %v221
    %4860 = vmatmul.mubr.bf16.gmra.mrb[0].mxu0 %v220
    %v4861 = vpop.f32.mrb[0].mxu0
    %v4862 = vadd.f32 %v4669, %v4861
    %v4863 = vpop.f32.mrb[0].mxu0
    %v4864 = vadd.f32 %v4671, %v4863
    %v4865 = vpop.f32.mrb[0].mxu0
    %v4866 = vadd.f32 %v4673, %v4865
    %v4867 = vpop.f32.mrb[0].mxu0
    %v4868 = vadd.f32 %v4675, %v4867
    %4869 = vmatprep.mubr.bf16.mxu0 %v225
    %4870 = vmatmul.mubr.bf16.gmra.mrb[0].mxu0 %v224
    %v4871 = vpop.f32.mrb[0].mxu0
    %v4872 = vadd.f32 %v4679, %v4871
    %v4873 = vpop.f32.mrb[0].mxu0
    %v4874 = vadd.f32 %v4681, %v4873
    %v4875 = vpop.f32.mrb[0].mxu0
    %v4876 = vadd.f32 %v4683, %v4875
    %v4877 = vpop.f32.mrb[0].mxu0
    %v4878 = vadd.f32 %v4685, %v4877
    %4879 = vmatprep.mubr.bf16.mxu0 %v229
    %4880 = vmatmul.mubr.bf16.gmra.mrb[0].mxu0 %v228
    %v4881 = vpop.f32.mrb[0].mxu0
    %v4882 = vadd.f32 %v4689, %v4881
    %v4883 = vpop.f32.mrb[0].mxu0
    %v4884 = vadd.f32 %v4691, %v4883
    %v4885 = vpop.f32.mrb[0].mxu0
    %v4886 = vadd.f32 %v4693, %v4885
    %v4887 = vpop.f32.mrb[0].mxu0
    %v4888 = vadd.f32 %v4695, %v4887
    %4889 = vmatprep.mubr.bf16.mxu0 %v233
    %4890 = vmatmul.mubr.bf16.gmra.mrb[0].mxu0 %v232
    %v4891 = vpop.f32.mrb[0].mxu0
    %v4892 = vadd.f32 %v4699, %v4891
    %v4893 = vpop.f32.mrb[0].mxu0
    %v4894 = vadd.f32 %v4701, %v4893
    %v4895 = vpop.f32.mrb[0].mxu0
    %v4896 = vadd.f32 %v4703, %v4895
    %v4897 = vpop.f32.mrb[0].mxu0
    %v4898 = vadd.f32 %v4705, %v4897
    %4899 = vmatprep.mubr.bf16.mxu0 %v237
    %4900 = vmatmul.mubr.bf16.gmra.mrb[0].mxu0 %v236
    %v4901 = vpop.f32.mrb[0].mxu0
    %v4902 = vadd.f32 %v4709, %v4901
    %v4903 = vpop.f32.mrb[0].mxu0
    %v4904 = vadd.f32 %v4711, %v4903
    %v4905 = vpop.f32.mrb[0].mxu0
    %v4906 = vadd.f32 %v4713, %v4905
    %v4907 = vpop.f32.mrb[0].mxu0
    %v4908 = vadd.f32 %v4715, %v4907
    %4909 = vmatprep.mubr.bf16.mxu0 %v241
    %4910 = vmatmul.mubr.bf16.gmra.mrb[0].mxu0 %v240
    %v4911 = vpop.f32.mrb[0].mxu0
    %v4912 = vadd.f32 %v4719, %v4911
    %v4913 = vpop.f32.mrb[0].mxu0
    %v4914 = vadd.f32 %v4721, %v4913
    %v4915 = vpop.f32.mrb[0].mxu0
    %v4916 = vadd.f32 %v4723, %v4915
    %v4917 = vpop.f32.mrb[0].mxu0
    %v4918 = vadd.f32 %v4725, %v4917
    %4919 = vmatprep.mubr.bf16.mxu0 %v245
    %4920 = vmatmul.mubr.bf16.gmra.mrb[0].mxu0 %v244
    %v4921 = vpop.f32.mrb[0].mxu0
    %v4922 = vadd.f32 %v4729, %v4921
    %v4923 = vpop.f32.mrb[0].mxu0
    %v4924 = vadd.f32 %v4731, %v4923
    %v4925 = vpop.f32.mrb[0].mxu0
    %v4926 = vadd.f32 %v4733, %v4925
    %v4927 = vpop.f32.mrb[0].mxu0
    %v4928 = vadd.f32 %v4735, %v4927
    %4929 = vdwg.mxu0
    %v4930 = vpack.c.bf16 %v2846, %v2842
    %v4931 = vpack.c.bf16 %v2848, %v2844
    %v4932 = vpack.c.bf16 %v3232, %v3228
    %v4933 = vpack.c.bf16 %v3234, %v3230
    %v4934 = vpack.c.bf16 %v3618, %v3614
    %v4935 = vpack.c.bf16 %v3620, %v3616
    %v4936 = vpack.c.bf16 %v4004, %v4000
    %v4937 = vpack.c.bf16 %v4006, %v4002
    %v4938 = vpack.c.bf16 %v4390, %v4386
    %v4939 = vpack.c.bf16 %v4392, %v4388
    %v4940 = vpack.c.bf16 %v4776, %v4772
    %v4941 = vpack.c.bf16 %v4778, %v4774
    %v4942 = vpack.c.bf16 %v2856, %v2852
    %v4943 = vpack.c.bf16 %v2858, %v2854
    %v4944 = vpack.c.bf16 %v3242, %v3238
    %v4945 = vpack.c.bf16 %v3244, %v3240
    %v4946 = vpack.c.bf16 %v3628, %v3624
    %v4947 = vpack.c.bf16 %v3630, %v3626
    %v4948 = vpack.c.bf16 %v4014, %v4010
    %v4949 = vpack.c.bf16 %v4016, %v4012
    %v4950 = vpack.c.bf16 %v4400, %v4396
    %v4951 = vpack.c.bf16 %v4402, %v4398
    %v4952 = vpack.c.bf16 %v4786, %v4782
    %v4953 = vpack.c.bf16 %v4788, %v4784
    %v4954 = vpack.c.bf16 %v2866, %v2862
    %v4955 = vpack.c.bf16 %v2868, %v2864
    %v4956 = vpack.c.bf16 %v3252, %v3248
    %v4957 = vpack.c.bf16 %v3254, %v3250
    %v4958 = vpack.c.bf16 %v3638, %v3634
    %v4959 = vpack.c.bf16 %v3640, %v3636
    %v4960 = vpack.c.bf16 %v4024, %v4020
    %v4961 = vpack.c.bf16 %v4026, %v4022
    %v4962 = vpack.c.bf16 %v4410, %v4406
    %v4963 = vpack.c.bf16 %v4412, %v4408
    %v4964 = vpack.c.bf16 %v4796, %v4792
    %v4965 = vpack.c.bf16 %v4798, %v4794
    %v4966 = vpack.c.bf16 %v2876, %v2872
    %v4967 = vpack.c.bf16 %v2878, %v2874
    %v4968 = vpack.c.bf16 %v3262, %v3258
    %v4969 = vpack.c.bf16 %v3264, %v3260
    %v4970 = vpack.c.bf16 %v3648, %v3644
    %v4971 = vpack.c.bf16 %v3650, %v3646
    %v4972 = vpack.c.bf16 %v4034, %v4030
    %v4973 = vpack.c.bf16 %v4036, %v4032
    %v4974 = vpack.c.bf16 %v4420, %v4416
    %v4975 = vpack.c.bf16 %v4422, %v4418
    %v4976 = vpack.c.bf16 %v4806, %v4802
    %v4977 = vpack.c.bf16 %v4808, %v4804
    %v4978 = vpack.c.bf16 %v2886, %v2882
    %v4979 = vpack.c.bf16 %v2888, %v2884
    %v4980 = vpack.c.bf16 %v3272, %v3268
    %v4981 = vpack.c.bf16 %v3274, %v3270
    %v4982 = vpack.c.bf16 %v3658, %v3654
    %v4983 = vpack.c.bf16 %v3660, %v3656
    %v4984 = vpack.c.bf16 %v4044, %v4040
    %v4985 = vpack.c.bf16 %v4046, %v4042
    %v4986 = vpack.c.bf16 %v4430, %v4426
    %v4987 = vpack.c.bf16 %v4432, %v4428
    %v4988 = vpack.c.bf16 %v4816, %v4812
    %v4989 = vpack.c.bf16 %v4818, %v4814
    %v4990 = vpack.c.bf16 %v2896, %v2892
    %v4991 = vpack.c.bf16 %v2898, %v2894
    %v4992 = vpack.c.bf16 %v3282, %v3278
    %v4993 = vpack.c.bf16 %v3284, %v3280
    %v4994 = vpack.c.bf16 %v3668, %v3664
    %v4995 = vpack.c.bf16 %v3670, %v3666
    %v4996 = vpack.c.bf16 %v4054, %v4050
    %v4997 = vpack.c.bf16 %v4056, %v4052
    %v4998 = vpack.c.bf16 %v4440, %v4436
    %v4999 = vpack.c.bf16 %v4442, %v4438
    %v5000 = vpack.c.bf16 %v4826, %v4822
    %v5001 = vpack.c.bf16 %v4828, %v4824
    %v5002 = vpack.c.bf16 %v2906, %v2902
    %v5003 = vpack.c.bf16 %v2908, %v2904
    %v5004 = vpack.c.bf16 %v3292, %v3288
    %v5005 = vpack.c.bf16 %v3294, %v3290
    %v5006 = vpack.c.bf16 %v3678, %v3674
    %v5007 = vpack.c.bf16 %v3680, %v3676
    %v5008 = vpack.c.bf16 %v4064, %v4060
    %v5009 = vpack.c.bf16 %v4066, %v4062
    %v5010 = vpack.c.bf16 %v4450, %v4446
    %v5011 = vpack.c.bf16 %v4452, %v4448
    %v5012 = vpack.c.bf16 %v4836, %v4832
    %v5013 = vpack.c.bf16 %v4838, %v4834
    %v5014 = vpack.c.bf16 %v2916, %v2912
    %v5015 = vpack.c.bf16 %v2918, %v2914
    %v5016 = vpack.c.bf16 %v3302, %v3298
    %v5017 = vpack.c.bf16 %v3304, %v3300
    %v5018 = vpack.c.bf16 %v3688, %v3684
    %v5019 = vpack.c.bf16 %v3690, %v3686
    %v5020 = vpack.c.bf16 %v4074, %v4070
    %v5021 = vpack.c.bf16 %v4076, %v4072
    %v5022 = vpack.c.bf16 %v4460, %v4456
    %v5023 = vpack.c.bf16 %v4462, %v4458
    %v5024 = vpack.c.bf16 %v4846, %v4842
    %v5025 = vpack.c.bf16 %v4848, %v4844
    %v5026 = vpack.c.bf16 %v2926, %v2922
    %v5027 = vpack.c.bf16 %v2928, %v2924
    %v5028 = vpack.c.bf16 %v3312, %v3308
    %v5029 = vpack.c.bf16 %v3314, %v3310
    %v5030 = vpack.c.bf16 %v3698, %v3694
    %v5031 = vpack.c.bf16 %v3700, %v3696
    %v5032 = vpack.c.bf16 %v4084, %v4080
    %v5033 = vpack.c.bf16 %v4086, %v4082
    %v5034 = vpack.c.bf16 %v4470, %v4466
    %v5035 = vpack.c.bf16 %v4472, %v4468
    %v5036 = vpack.c.bf16 %v4856, %v4852
    %v5037 = vpack.c.bf16 %v4858, %v4854
    %v5038 = vpack.c.bf16 %v2936, %v2932
    %v5039 = vpack.c.bf16 %v2938, %v2934
    %v5040 = vpack.c.bf16 %v3322, %v3318
    %v5041 = vpack.c.bf16 %v3324, %v3320
    %v5042 = vpack.c.bf16 %v3708, %v3704
    %v5043 = vpack.c.bf16 %v3710, %v3706
    %v5044 = vpack.c.bf16 %v4094, %v4090
    %v5045 = vpack.c.bf16 %v4096, %v4092
    %v5046 = vpack.c.bf16 %v4480, %v4476
    %v5047 = vpack.c.bf16 %v4482, %v4478
    %v5048 = vpack.c.bf16 %v4866, %v4862
    %v5049 = vpack.c.bf16 %v4868, %v4864
    %v5050 = vpack.c.bf16 %v2946, %v2942
    %v5051 = vpack.c.bf16 %v2948, %v2944
    %v5052 = vpack.c.bf16 %v3332, %v3328
    %v5053 = vpack.c.bf16 %v3334, %v3330
    %v5054 = vpack.c.bf16 %v3718, %v3714
    %v5055 = vpack.c.bf16 %v3720, %v3716
    %v5056 = vpack.c.bf16 %v4104, %v4100
    %v5057 = vpack.c.bf16 %v4106, %v4102
    %v5058 = vpack.c.bf16 %v4490, %v4486
    %v5059 = vpack.c.bf16 %v4492, %v4488
    %v5060 = vpack.c.bf16 %v4876, %v4872
    %v5061 = vpack.c.bf16 %v4878, %v4874
    %v5062 = vpack.c.bf16 %v2956, %v2952
    %v5063 = vpack.c.bf16 %v2958, %v2954
    %v5064 = vpack.c.bf16 %v3342, %v3338
    %v5065 = vpack.c.bf16 %v3344, %v3340
    %v5066 = vpack.c.bf16 %v3728, %v3724
    %v5067 = vpack.c.bf16 %v3730, %v3726
    %v5068 = vpack.c.bf16 %v4114, %v4110
    %v5069 = vpack.c.bf16 %v4116, %v4112
    %v5070 = vpack.c.bf16 %v4500, %v4496
    %v5071 = vpack.c.bf16 %v4502, %v4498
    %v5072 = vpack.c.bf16 %v4886, %v4882
    %v5073 = vpack.c.bf16 %v4888, %v4884
    %v5074 = vpack.c.bf16 %v2966, %v2962
    %v5075 = vpack.c.bf16 %v2968, %v2964
    %v5076 = vpack.c.bf16 %v3352, %v3348
    %v5077 = vpack.c.bf16 %v3354, %v3350
    %v5078 = vpack.c.bf16 %v3738, %v3734
    %v5079 = vpack.c.bf16 %v3740, %v3736
    %v5080 = vpack.c.bf16 %v4124, %v4120
    %v5081 = vpack.c.bf16 %v4126, %v4122
    %v5082 = vpack.c.bf16 %v4510, %v4506
    %v5083 = vpack.c.bf16 %v4512, %v4508
    %v5084 = vpack.c.bf16 %v4896, %v4892
    %v5085 = vpack.c.bf16 %v4898, %v4894
    %v5086 = vpack.c.bf16 %v2976, %v2972
    %v5087 = vpack.c.bf16 %v2978, %v2974
    %v5088 = vpack.c.bf16 %v3362, %v3358
    %v5089 = vpack.c.bf16 %v3364, %v3360
    %v5090 = vpack.c.bf16 %v3748, %v3744
    %v5091 = vpack.c.bf16 %v3750, %v3746
    %v5092 = vpack.c.bf16 %v4134, %v4130
    %v5093 = vpack.c.bf16 %v4136, %v4132
    %v5094 = vpack.c.bf16 %v4520, %v4516
    %v5095 = vpack.c.bf16 %v4522, %v4518
    %v5096 = vpack.c.bf16 %v4906, %v4902
    %v5097 = vpack.c.bf16 %v4908, %v4904
    %v5098 = vpack.c.bf16 %v2986, %v2982
    %v5099 = vpack.c.bf16 %v2988, %v2984
    %v5100 = vpack.c.bf16 %v3372, %v3368
    %v5101 = vpack.c.bf16 %v3374, %v3370
    %v5102 = vpack.c.bf16 %v3758, %v3754
    %v5103 = vpack.c.bf16 %v3760, %v3756
    %v5104 = vpack.c.bf16 %v4144, %v4140
    %v5105 = vpack.c.bf16 %v4146, %v4142
    %v5106 = vpack.c.bf16 %v4530, %v4526
    %v5107 = vpack.c.bf16 %v4532, %v4528
    %v5108 = vpack.c.bf16 %v4916, %v4912
    %v5109 = vpack.c.bf16 %v4918, %v4914
    %v5110 = vpack.c.bf16 %v2996, %v2992
    %v5111 = vpack.c.bf16 %v2998, %v2994
    %v5112 = vpack.c.bf16 %v3382, %v3378
    %v5113 = vpack.c.bf16 %v3384, %v3380
    %v5114 = vpack.c.bf16 %v3768, %v3764
    %v5115 = vpack.c.bf16 %v3770, %v3766
    %v5116 = vpack.c.bf16 %v4154, %v4150
    %v5117 = vpack.c.bf16 %v4156, %v4152
    %v5118 = vpack.c.bf16 %v4540, %v4536
    %v5119 = vpack.c.bf16 %v4542, %v4538
    %v5120 = vpack.c.bf16 %v4926, %v4922
    %v5121 = vpack.c.bf16 %v4928, %v4924
    %v5314 = vunpack.c.l.b16 %v4930
    %v5315 = vunpack.c.l.b16 %v4931
    %v5316 = vunpack.c.l.b16 %v4932
    %v5317 = vunpack.c.l.b16 %v4933
    %v5318 = vunpack.c.l.b16 %v4934
    %v5319 = vunpack.c.l.b16 %v4935
    %v5320 = vunpack.c.l.b16 %v4936
    %v5321 = vunpack.c.l.b16 %v4937
    %v5322 = vunpack.c.l.b16 %v4938
    %v5323 = vunpack.c.l.b16 %v4939
    %v5324 = vunpack.c.l.b16 %v4940
    %v5325 = vunpack.c.l.b16 %v4941
    %v5326 = vunpack.c.h.b16 %v4930
    %v5327 = vunpack.c.h.b16 %v4931
    %v5328 = vunpack.c.h.b16 %v4932
    %v5329 = vunpack.c.h.b16 %v4933
    %v5330 = vunpack.c.h.b16 %v4934
    %v5331 = vunpack.c.h.b16 %v4935
    %v5332 = vunpack.c.h.b16 %v4936
    %v5333 = vunpack.c.h.b16 %v4937
    %v5334 = vunpack.c.h.b16 %v4938
    %v5335 = vunpack.c.h.b16 %v4939
    %v5336 = vunpack.c.h.b16 %v4940
    %v5337 = vunpack.c.h.b16 %v4941
    %v5338 = vunpack.c.l.b16 %v4942
    %v5339 = vunpack.c.l.b16 %v4943
    %v5340 = vunpack.c.l.b16 %v4944
    %v5341 = vunpack.c.l.b16 %v4945
    %v5342 = vunpack.c.l.b16 %v4946
    %v5343 = vunpack.c.l.b16 %v4947
    %v5344 = vunpack.c.l.b16 %v4948
    %v5345 = vunpack.c.l.b16 %v4949
    %v5346 = vunpack.c.l.b16 %v4950
    %v5347 = vunpack.c.l.b16 %v4951
    %v5348 = vunpack.c.l.b16 %v4952
    %v5349 = vunpack.c.l.b16 %v4953
    %v5350 = vunpack.c.h.b16 %v4942
    %v5351 = vunpack.c.h.b16 %v4943
    %v5352 = vunpack.c.h.b16 %v4944
    %v5353 = vunpack.c.h.b16 %v4945
    %v5354 = vunpack.c.h.b16 %v4946
    %v5355 = vunpack.c.h.b16 %v4947
    %v5356 = vunpack.c.h.b16 %v4948
    %v5357 = vunpack.c.h.b16 %v4949
    %v5358 = vunpack.c.h.b16 %v4950
    %v5359 = vunpack.c.h.b16 %v4951
    %v5360 = vunpack.c.h.b16 %v4952
    %v5361 = vunpack.c.h.b16 %v4953
    %v5362 = vunpack.c.l.b16 %v4954
    %v5363 = vunpack.c.l.b16 %v4955
    %v5364 = vunpack.c.l.b16 %v4956
    %v5365 = vunpack.c.l.b16 %v4957
    %v5366 = vunpack.c.l.b16 %v4958
    %v5367 = vunpack.c.l.b16 %v4959
    %v5368 = vunpack.c.l.b16 %v4960
    %v5369 = vunpack.c.l.b16 %v4961
    %v5370 = vunpack.c.l.b16 %v4962
    %v5371 = vunpack.c.l.b16 %v4963
    %v5372 = vunpack.c.l.b16 %v4964
    %v5373 = vunpack.c.l.b16 %v4965
    %v5374 = vunpack.c.h.b16 %v4954
    %v5375 = vunpack.c.h.b16 %v4955
    %v5376 = vunpack.c.h.b16 %v4956
    %v5377 = vunpack.c.h.b16 %v4957
    %v5378 = vunpack.c.h.b16 %v4958
    %v5379 = vunpack.c.h.b16 %v4959
    %v5380 = vunpack.c.h.b16 %v4960
    %v5381 = vunpack.c.h.b16 %v4961
    %v5382 = vunpack.c.h.b16 %v4962
    %v5383 = vunpack.c.h.b16 %v4963
    %v5384 = vunpack.c.h.b16 %v4964
    %v5385 = vunpack.c.h.b16 %v4965
    %v5386 = vunpack.c.l.b16 %v4966
    %v5387 = vunpack.c.l.b16 %v4967
    %v5388 = vunpack.c.l.b16 %v4968
    %v5389 = vunpack.c.l.b16 %v4969
    %v5390 = vunpack.c.l.b16 %v4970
    %v5391 = vunpack.c.l.b16 %v4971
    %v5392 = vunpack.c.l.b16 %v4972
    %v5393 = vunpack.c.l.b16 %v4973
    %v5394 = vunpack.c.l.b16 %v4974
    %v5395 = vunpack.c.l.b16 %v4975
    %v5396 = vunpack.c.l.b16 %v4976
    %v5397 = vunpack.c.l.b16 %v4977
    %v5398 = vunpack.c.h.b16 %v4966
    %v5399 = vunpack.c.h.b16 %v4967
    %v5400 = vunpack.c.h.b16 %v4968
    %v5401 = vunpack.c.h.b16 %v4969
    %v5402 = vunpack.c.h.b16 %v4970
    %v5403 = vunpack.c.h.b16 %v4971
    %v5404 = vunpack.c.h.b16 %v4972
    %v5405 = vunpack.c.h.b16 %v4973
    %v5406 = vunpack.c.h.b16 %v4974
    %v5407 = vunpack.c.h.b16 %v4975
    %v5408 = vunpack.c.h.b16 %v4976
    %v5409 = vunpack.c.h.b16 %v4977
    %v5410 = vunpack.c.l.b16 %v4978
    %v5411 = vunpack.c.l.b16 %v4979
    %v5412 = vunpack.c.l.b16 %v4980
    %v5413 = vunpack.c.l.b16 %v4981
    %v5414 = vunpack.c.l.b16 %v4982
    %v5415 = vunpack.c.l.b16 %v4983
    %v5416 = vunpack.c.l.b16 %v4984
    %v5417 = vunpack.c.l.b16 %v4985
    %v5418 = vunpack.c.l.b16 %v4986
    %v5419 = vunpack.c.l.b16 %v4987
    %v5420 = vunpack.c.l.b16 %v4988
    %v5421 = vunpack.c.l.b16 %v4989
    %v5422 = vunpack.c.h.b16 %v4978
    %v5423 = vunpack.c.h.b16 %v4979
    %v5424 = vunpack.c.h.b16 %v4980
    %v5425 = vunpack.c.h.b16 %v4981
    %v5426 = vunpack.c.h.b16 %v4982
    %v5427 = vunpack.c.h.b16 %v4983
    %v5428 = vunpack.c.h.b16 %v4984
    %v5429 = vunpack.c.h.b16 %v4985
    %v5430 = vunpack.c.h.b16 %v4986
    %v5431 = vunpack.c.h.b16 %v4987
    %v5432 = vunpack.c.h.b16 %v4988
    %v5433 = vunpack.c.h.b16 %v4989
    %v5434 = vunpack.c.l.b16 %v4990
    %v5435 = vunpack.c.l.b16 %v4991
    %v5436 = vunpack.c.l.b16 %v4992
    %v5437 = vunpack.c.l.b16 %v4993
    %v5438 = vunpack.c.l.b16 %v4994
    %v5439 = vunpack.c.l.b16 %v4995
    %v5440 = vunpack.c.l.b16 %v4996
    %v5441 = vunpack.c.l.b16 %v4997
    %v5442 = vunpack.c.l.b16 %v4998
    %v5443 = vunpack.c.l.b16 %v4999
    %v5444 = vunpack.c.l.b16 %v5000
    %v5445 = vunpack.c.l.b16 %v5001
    %v5446 = vunpack.c.h.b16 %v4990
    %v5447 = vunpack.c.h.b16 %v4991
    %v5448 = vunpack.c.h.b16 %v4992
    %v5449 = vunpack.c.h.b16 %v4993
    %v5450 = vunpack.c.h.b16 %v4994
    %v5451 = vunpack.c.h.b16 %v4995
    %v5452 = vunpack.c.h.b16 %v4996
    %v5453 = vunpack.c.h.b16 %v4997
    %v5454 = vunpack.c.h.b16 %v4998
    %v5455 = vunpack.c.h.b16 %v4999
    %v5456 = vunpack.c.h.b16 %v5000
    %v5457 = vunpack.c.h.b16 %v5001
    %v5458 = vunpack.c.l.b16 %v5002
    %v5459 = vunpack.c.l.b16 %v5003
    %v5460 = vunpack.c.l.b16 %v5004
    %v5461 = vunpack.c.l.b16 %v5005
    %v5462 = vunpack.c.l.b16 %v5006
    %v5463 = vunpack.c.l.b16 %v5007
    %v5464 = vunpack.c.l.b16 %v5008
    %v5465 = vunpack.c.l.b16 %v5009
    %v5466 = vunpack.c.l.b16 %v5010
    %v5467 = vunpack.c.l.b16 %v5011
    %v5468 = vunpack.c.l.b16 %v5012
    %v5469 = vunpack.c.l.b16 %v5013
    %v5470 = vunpack.c.h.b16 %v5002
    %v5471 = vunpack.c.h.b16 %v5003
    %v5472 = vunpack.c.h.b16 %v5004
    %v5473 = vunpack.c.h.b16 %v5005
    %v5474 = vunpack.c.h.b16 %v5006
    %v5475 = vunpack.c.h.b16 %v5007
    %v5476 = vunpack.c.h.b16 %v5008
    %v5477 = vunpack.c.h.b16 %v5009
    %v5478 = vunpack.c.h.b16 %v5010
    %v5479 = vunpack.c.h.b16 %v5011
    %v5480 = vunpack.c.h.b16 %v5012
    %v5481 = vunpack.c.h.b16 %v5013
    %v5482 = vunpack.c.l.b16 %v5014
    %v5483 = vunpack.c.l.b16 %v5015
    %v5484 = vunpack.c.l.b16 %v5016
    %v5485 = vunpack.c.l.b16 %v5017
    %v5486 = vunpack.c.l.b16 %v5018
    %v5487 = vunpack.c.l.b16 %v5019
    %v5488 = vunpack.c.l.b16 %v5020
    %v5489 = vunpack.c.l.b16 %v5021
    %v5490 = vunpack.c.l.b16 %v5022
    %v5491 = vunpack.c.l.b16 %v5023
    %v5492 = vunpack.c.l.b16 %v5024
    %v5493 = vunpack.c.l.b16 %v5025
    %v5494 = vunpack.c.h.b16 %v5014
    %v5495 = vunpack.c.h.b16 %v5015
    %v5496 = vunpack.c.h.b16 %v5016
    %v5497 = vunpack.c.h.b16 %v5017
    %v5498 = vunpack.c.h.b16 %v5018
    %v5499 = vunpack.c.h.b16 %v5019
    %v5500 = vunpack.c.h.b16 %v5020
    %v5501 = vunpack.c.h.b16 %v5021
    %v5502 = vunpack.c.h.b16 %v5022
    %v5503 = vunpack.c.h.b16 %v5023
    %v5504 = vunpack.c.h.b16 %v5024
    %v5505 = vunpack.c.h.b16 %v5025
    %v5506 = vunpack.c.l.b16 %v5026
    %v5507 = vunpack.c.l.b16 %v5027
    %v5508 = vunpack.c.l.b16 %v5028
    %v5509 = vunpack.c.l.b16 %v5029
    %v5510 = vunpack.c.l.b16 %v5030
    %v5511 = vunpack.c.l.b16 %v5031
    %v5512 = vunpack.c.l.b16 %v5032
    %v5513 = vunpack.c.l.b16 %v5033
    %v5514 = vunpack.c.l.b16 %v5034
    %v5515 = vunpack.c.l.b16 %v5035
    %v5516 = vunpack.c.l.b16 %v5036
    %v5517 = vunpack.c.l.b16 %v5037
    %v5518 = vunpack.c.h.b16 %v5026
    %v5519 = vunpack.c.h.b16 %v5027
    %v5520 = vunpack.c.h.b16 %v5028
    %v5521 = vunpack.c.h.b16 %v5029
    %v5522 = vunpack.c.h.b16 %v5030
    %v5523 = vunpack.c.h.b16 %v5031
    %v5524 = vunpack.c.h.b16 %v5032
    %v5525 = vunpack.c.h.b16 %v5033
    %v5526 = vunpack.c.h.b16 %v5034
    %v5527 = vunpack.c.h.b16 %v5035
    %v5528 = vunpack.c.h.b16 %v5036
    %v5529 = vunpack.c.h.b16 %v5037
    %v5530 = vunpack.c.l.b16 %v5038
    %v5531 = vunpack.c.l.b16 %v5039
    %v5532 = vunpack.c.l.b16 %v5040
    %v5533 = vunpack.c.l.b16 %v5041
    %v5534 = vunpack.c.l.b16 %v5042
    %v5535 = vunpack.c.l.b16 %v5043
    %v5536 = vunpack.c.l.b16 %v5044
    %v5537 = vunpack.c.l.b16 %v5045
    %v5538 = vunpack.c.l.b16 %v5046
    %v5539 = vunpack.c.l.b16 %v5047
    %v5540 = vunpack.c.l.b16 %v5048
    %v5541 = vunpack.c.l.b16 %v5049
    %v5542 = vunpack.c.h.b16 %v5038
    %v5543 = vunpack.c.h.b16 %v5039
    %v5544 = vunpack.c.h.b16 %v5040
    %v5545 = vunpack.c.h.b16 %v5041
    %v5546 = vunpack.c.h.b16 %v5042
    %v5547 = vunpack.c.h.b16 %v5043
    %v5548 = vunpack.c.h.b16 %v5044
    %v5549 = vunpack.c.h.b16 %v5045
    %v5550 = vunpack.c.h.b16 %v5046
    %v5551 = vunpack.c.h.b16 %v5047
    %v5552 = vunpack.c.h.b16 %v5048
    %v5553 = vunpack.c.h.b16 %v5049
    %v5554 = vunpack.c.l.b16 %v5050
    %v5555 = vunpack.c.l.b16 %v5051
    %v5556 = vunpack.c.l.b16 %v5052
    %v5557 = vunpack.c.l.b16 %v5053
    %v5558 = vunpack.c.l.b16 %v5054
    %v5559 = vunpack.c.l.b16 %v5055
    %v5560 = vunpack.c.l.b16 %v5056
    %v5561 = vunpack.c.l.b16 %v5057
    %v5562 = vunpack.c.l.b16 %v5058
    %v5563 = vunpack.c.l.b16 %v5059
    %v5564 = vunpack.c.l.b16 %v5060
    %v5565 = vunpack.c.l.b16 %v5061
    %v5566 = vunpack.c.h.b16 %v5050
    %v5567 = vunpack.c.h.b16 %v5051
    %v5568 = vunpack.c.h.b16 %v5052
    %v5569 = vunpack.c.h.b16 %v5053
    %v5570 = vunpack.c.h.b16 %v5054
    %v5571 = vunpack.c.h.b16 %v5055
    %v5572 = vunpack.c.h.b16 %v5056
    %v5573 = vunpack.c.h.b16 %v5057
    %v5574 = vunpack.c.h.b16 %v5058
    %v5575 = vunpack.c.h.b16 %v5059
    %v5576 = vunpack.c.h.b16 %v5060
    %v5577 = vunpack.c.h.b16 %v5061
    %v5578 = vunpack.c.l.b16 %v5062
    %v5579 = vunpack.c.l.b16 %v5063
    %v5580 = vunpack.c.l.b16 %v5064
    %v5581 = vunpack.c.l.b16 %v5065
    %v5582 = vunpack.c.l.b16 %v5066
    %v5583 = vunpack.c.l.b16 %v5067
    %v5584 = vunpack.c.l.b16 %v5068
    %v5585 = vunpack.c.l.b16 %v5069
    %v5586 = vunpack.c.l.b16 %v5070
    %v5587 = vunpack.c.l.b16 %v5071
    %v5588 = vunpack.c.l.b16 %v5072
    %v5589 = vunpack.c.l.b16 %v5073
    %v5590 = vunpack.c.h.b16 %v5062
    %v5591 = vunpack.c.h.b16 %v5063
    %v5592 = vunpack.c.h.b16 %v5064
    %v5593 = vunpack.c.h.b16 %v5065
    %v5594 = vunpack.c.h.b16 %v5066
    %v5595 = vunpack.c.h.b16 %v5067
    %v5596 = vunpack.c.h.b16 %v5068
    %v5597 = vunpack.c.h.b16 %v5069
    %v5598 = vunpack.c.h.b16 %v5070
    %v5599 = vunpack.c.h.b16 %v5071
    %v5600 = vunpack.c.h.b16 %v5072
    %v5601 = vunpack.c.h.b16 %v5073
    %v5602 = vunpack.c.l.b16 %v5074
    %v5603 = vunpack.c.l.b16 %v5075
    %v5604 = vunpack.c.l.b16 %v5076
    %v5605 = vunpack.c.l.b16 %v5077
    %v5606 = vunpack.c.l.b16 %v5078
    %v5607 = vunpack.c.l.b16 %v5079
    %v5608 = vunpack.c.l.b16 %v5080
    %v5609 = vunpack.c.l.b16 %v5081
    %v5610 = vunpack.c.l.b16 %v5082
    %v5611 = vunpack.c.l.b16 %v5083
    %v5612 = vunpack.c.l.b16 %v5084
    %v5613 = vunpack.c.l.b16 %v5085
    %v5614 = vunpack.c.h.b16 %v5074
    %v5615 = vunpack.c.h.b16 %v5075
    %v5616 = vunpack.c.h.b16 %v5076
    %v5617 = vunpack.c.h.b16 %v5077
    %v5618 = vunpack.c.h.b16 %v5078
    %v5619 = vunpack.c.h.b16 %v5079
    %v5620 = vunpack.c.h.b16 %v5080
    %v5621 = vunpack.c.h.b16 %v5081
    %v5622 = vunpack.c.h.b16 %v5082
    %v5623 = vunpack.c.h.b16 %v5083
    %v5624 = vunpack.c.h.b16 %v5084
    %v5625 = vunpack.c.h.b16 %v5085
    %v5626 = vunpack.c.l.b16 %v5086
    %v5627 = vunpack.c.l.b16 %v5087
    %v5628 = vunpack.c.l.b16 %v5088
    %v5629 = vunpack.c.l.b16 %v5089
    %v5630 = vunpack.c.l.b16 %v5090
    %v5631 = vunpack.c.l.b16 %v5091
    %v5632 = vunpack.c.l.b16 %v5092
    %v5633 = vunpack.c.l.b16 %v5093
    %v5634 = vunpack.c.l.b16 %v5094
    %v5635 = vunpack.c.l.b16 %v5095
    %v5636 = vunpack.c.l.b16 %v5096
    %v5637 = vunpack.c.l.b16 %v5097
    %v5638 = vunpack.c.h.b16 %v5086
    %v5639 = vunpack.c.h.b16 %v5087
    %v5640 = vunpack.c.h.b16 %v5088
    %v5641 = vunpack.c.h.b16 %v5089
    %v5642 = vunpack.c.h.b16 %v5090
    %v5643 = vunpack.c.h.b16 %v5091
    %v5644 = vunpack.c.h.b16 %v5092
    %v5645 = vunpack.c.h.b16 %v5093
    %v5646 = vunpack.c.h.b16 %v5094
    %v5647 = vunpack.c.h.b16 %v5095
    %v5648 = vunpack.c.h.b16 %v5096
    %v5649 = vunpack.c.h.b16 %v5097
    %v5650 = vunpack.c.l.b16 %v5098
    %v5651 = vunpack.c.l.b16 %v5099
    %v5652 = vunpack.c.l.b16 %v5100
    %v5653 = vunpack.c.l.b16 %v5101
    %v5654 = vunpack.c.l.b16 %v5102
    %v5655 = vunpack.c.l.b16 %v5103
    %v5656 = vunpack.c.l.b16 %v5104
    %v5657 = vunpack.c.l.b16 %v5105
    %v5658 = vunpack.c.l.b16 %v5106
    %v5659 = vunpack.c.l.b16 %v5107
    %v5660 = vunpack.c.l.b16 %v5108
    %v5661 = vunpack.c.l.b16 %v5109
    %v5662 = vunpack.c.h.b16 %v5098
    %v5663 = vunpack.c.h.b16 %v5099
    %v5664 = vunpack.c.h.b16 %v5100
    %v5665 = vunpack.c.h.b16 %v5101
    %v5666 = vunpack.c.h.b16 %v5102
    %v5667 = vunpack.c.h.b16 %v5103
    %v5668 = vunpack.c.h.b16 %v5104
    %v5669 = vunpack.c.h.b16 %v5105
    %v5670 = vunpack.c.h.b16 %v5106
    %v5671 = vunpack.c.h.b16 %v5107
    %v5672 = vunpack.c.h.b16 %v5108
    %v5673 = vunpack.c.h.b16 %v5109
    %v5674 = vunpack.c.l.b16 %v5110
    %v5675 = vunpack.c.l.b16 %v5111
    %v5676 = vunpack.c.l.b16 %v5112
    %v5677 = vunpack.c.l.b16 %v5113
    %v5678 = vunpack.c.l.b16 %v5114
    %v5679 = vunpack.c.l.b16 %v5115
    %v5680 = vunpack.c.l.b16 %v5116
    %v5681 = vunpack.c.l.b16 %v5117
    %v5682 = vunpack.c.l.b16 %v5118
    %v5683 = vunpack.c.l.b16 %v5119
    %v5684 = vunpack.c.l.b16 %v5120
    %v5685 = vunpack.c.l.b16 %v5121
    %v5686 = vunpack.c.h.b16 %v5110
    %v5687 = vunpack.c.h.b16 %v5111
    %v5688 = vunpack.c.h.b16 %v5112
    %v5689 = vunpack.c.h.b16 %v5113
    %v5690 = vunpack.c.h.b16 %v5114
    %v5691 = vunpack.c.h.b16 %v5115
    %v5692 = vunpack.c.h.b16 %v5116
    %v5693 = vunpack.c.h.b16 %v5117
    %v5694 = vunpack.c.h.b16 %v5118
    %v5695 = vunpack.c.h.b16 %v5119
    %v5696 = vunpack.c.h.b16 %v5120
    %v5697 = vunpack.c.h.b16 %v5121
    %v5698 = vpack.c.b16 %v5315, %v5314
    %v5699 = vpack.c.b16 %v5317, %v5316
    %v5700 = vpack.c.b16 %v5319, %v5318
    %v5701 = vpack.c.b16 %v5321, %v5320
    %v5702 = vpack.c.b16 %v5323, %v5322
    %v5703 = vpack.c.b16 %v5325, %v5324
    %v5704 = vpack.c.b16 %v5327, %v5326
    %v5705 = vpack.c.b16 %v5329, %v5328
    %v5706 = vpack.c.b16 %v5331, %v5330
    %v5707 = vpack.c.b16 %v5333, %v5332
    %v5708 = vpack.c.b16 %v5335, %v5334
    %v5709 = vpack.c.b16 %v5337, %v5336
    %v5710 = vpack.c.b16 %v5339, %v5338
    %v5711 = vpack.c.b16 %v5341, %v5340
    %v5712 = vpack.c.b16 %v5343, %v5342
    %v5713 = vpack.c.b16 %v5345, %v5344
    %v5714 = vpack.c.b16 %v5347, %v5346
    %v5715 = vpack.c.b16 %v5349, %v5348
    %v5716 = vpack.c.b16 %v5351, %v5350
    %v5717 = vpack.c.b16 %v5353, %v5352
    %v5718 = vpack.c.b16 %v5355, %v5354
    %v5719 = vpack.c.b16 %v5357, %v5356
    %v5720 = vpack.c.b16 %v5359, %v5358
    %v5721 = vpack.c.b16 %v5361, %v5360
    %v5722 = vpack.c.b16 %v5363, %v5362
    %v5723 = vpack.c.b16 %v5365, %v5364
    %v5724 = vpack.c.b16 %v5367, %v5366
    %v5725 = vpack.c.b16 %v5369, %v5368
    %v5726 = vpack.c.b16 %v5371, %v5370
    %v5727 = vpack.c.b16 %v5373, %v5372
    %v5728 = vpack.c.b16 %v5375, %v5374
    %v5729 = vpack.c.b16 %v5377, %v5376
    %v5730 = vpack.c.b16 %v5379, %v5378
    %v5731 = vpack.c.b16 %v5381, %v5380
    %v5732 = vpack.c.b16 %v5383, %v5382
    %v5733 = vpack.c.b16 %v5385, %v5384
    %v5734 = vpack.c.b16 %v5387, %v5386
    %v5735 = vpack.c.b16 %v5389, %v5388
    %v5736 = vpack.c.b16 %v5391, %v5390
    %v5737 = vpack.c.b16 %v5393, %v5392
    %v5738 = vpack.c.b16 %v5395, %v5394
    %v5739 = vpack.c.b16 %v5397, %v5396
    %v5740 = vpack.c.b16 %v5399, %v5398
    %v5741 = vpack.c.b16 %v5401, %v5400
    %v5742 = vpack.c.b16 %v5403, %v5402
    %v5743 = vpack.c.b16 %v5405, %v5404
    %v5744 = vpack.c.b16 %v5407, %v5406
    %v5745 = vpack.c.b16 %v5409, %v5408
    %v5746 = vpack.c.b16 %v5411, %v5410
    %v5747 = vpack.c.b16 %v5413, %v5412
    %v5748 = vpack.c.b16 %v5415, %v5414
    %v5749 = vpack.c.b16 %v5417, %v5416
    %v5750 = vpack.c.b16 %v5419, %v5418
    %v5751 = vpack.c.b16 %v5421, %v5420
    %v5752 = vpack.c.b16 %v5423, %v5422
    %v5753 = vpack.c.b16 %v5425, %v5424
    %v5754 = vpack.c.b16 %v5427, %v5426
    %v5755 = vpack.c.b16 %v5429, %v5428
    %v5756 = vpack.c.b16 %v5431, %v5430
    %v5757 = vpack.c.b16 %v5433, %v5432
    %v5758 = vpack.c.b16 %v5435, %v5434
    %v5759 = vpack.c.b16 %v5437, %v5436
    %v5760 = vpack.c.b16 %v5439, %v5438
    %v5761 = vpack.c.b16 %v5441, %v5440
    %v5762 = vpack.c.b16 %v5443, %v5442
    %v5763 = vpack.c.b16 %v5445, %v5444
    %v5764 = vpack.c.b16 %v5447, %v5446
    %v5765 = vpack.c.b16 %v5449, %v5448
    %v5766 = vpack.c.b16 %v5451, %v5450
    %v5767 = vpack.c.b16 %v5453, %v5452
    %v5768 = vpack.c.b16 %v5455, %v5454
    %v5769 = vpack.c.b16 %v5457, %v5456
    %v5770 = vpack.c.b16 %v5459, %v5458
    %v5771 = vpack.c.b16 %v5461, %v5460
    %v5772 = vpack.c.b16 %v5463, %v5462
    %v5773 = vpack.c.b16 %v5465, %v5464
    %v5774 = vpack.c.b16 %v5467, %v5466
    %v5775 = vpack.c.b16 %v5469, %v5468
    %v5776 = vpack.c.b16 %v5471, %v5470
    %v5777 = vpack.c.b16 %v5473, %v5472
    %v5778 = vpack.c.b16 %v5475, %v5474
    %v5779 = vpack.c.b16 %v5477, %v5476
    %v5780 = vpack.c.b16 %v5479, %v5478
    %v5781 = vpack.c.b16 %v5481, %v5480
    %v5782 = vpack.c.b16 %v5483, %v5482
    %v5783 = vpack.c.b16 %v5485, %v5484
    %v5784 = vpack.c.b16 %v5487, %v5486
    %v5785 = vpack.c.b16 %v5489, %v5488
    %v5786 = vpack.c.b16 %v5491, %v5490
    %v5787 = vpack.c.b16 %v5493, %v5492
    %v5788 = vpack.c.b16 %v5495, %v5494
    %v5789 = vpack.c.b16 %v5497, %v5496
    %v5790 = vpack.c.b16 %v5499, %v5498
    %v5791 = vpack.c.b16 %v5501, %v5500
    %v5792 = vpack.c.b16 %v5503, %v5502
    %v5793 = vpack.c.b16 %v5505, %v5504
    %v5794 = vpack.c.b16 %v5507, %v5506
    %v5795 = vpack.c.b16 %v5509, %v5508
    %v5796 = vpack.c.b16 %v5511, %v5510
    %v5797 = vpack.c.b16 %v5513, %v5512
    %v5798 = vpack.c.b16 %v5515, %v5514
    %v5799 = vpack.c.b16 %v5517, %v5516
    %v5800 = vpack.c.b16 %v5519, %v5518
    %v5801 = vpack.c.b16 %v5521, %v5520
    %v5802 = vpack.c.b16 %v5523, %v5522
    %v5803 = vpack.c.b16 %v5525, %v5524
    %v5804 = vpack.c.b16 %v5527, %v5526
    %v5805 = vpack.c.b16 %v5529, %v5528
    %v5806 = vpack.c.b16 %v5531, %v5530
    %v5807 = vpack.c.b16 %v5533, %v5532
    %v5808 = vpack.c.b16 %v5535, %v5534
    %v5809 = vpack.c.b16 %v5537, %v5536
    %v5810 = vpack.c.b16 %v5539, %v5538
    %v5811 = vpack.c.b16 %v5541, %v5540
    %v5812 = vpack.c.b16 %v5543, %v5542
    %v5813 = vpack.c.b16 %v5545, %v5544
    %v5814 = vpack.c.b16 %v5547, %v5546
    %v5815 = vpack.c.b16 %v5549, %v5548
    %v5816 = vpack.c.b16 %v5551, %v5550
    %v5817 = vpack.c.b16 %v5553, %v5552
    %v5818 = vpack.c.b16 %v5555, %v5554
    %v5819 = vpack.c.b16 %v5557, %v5556
    %v5820 = vpack.c.b16 %v5559, %v5558
    %v5821 = vpack.c.b16 %v5561, %v5560
    %v5822 = vpack.c.b16 %v5563, %v5562
    %v5823 = vpack.c.b16 %v5565, %v5564
    %v5824 = vpack.c.b16 %v5567, %v5566
    %v5825 = vpack.c.b16 %v5569, %v5568
    %v5826 = vpack.c.b16 %v5571, %v5570
    %v5827 = vpack.c.b16 %v5573, %v5572
    %v5828 = vpack.c.b16 %v5575, %v5574
    %v5829 = vpack.c.b16 %v5577, %v5576
    %v5830 = vpack.c.b16 %v5579, %v5578
    %v5831 = vpack.c.b16 %v5581, %v5580
    %v5832 = vpack.c.b16 %v5583, %v5582
    %v5833 = vpack.c.b16 %v5585, %v5584
    %v5834 = vpack.c.b16 %v5587, %v5586
    %v5835 = vpack.c.b16 %v5589, %v5588
    %v5836 = vpack.c.b16 %v5591, %v5590
    %v5837 = vpack.c.b16 %v5593, %v5592
    %v5838 = vpack.c.b16 %v5595, %v5594
    %v5839 = vpack.c.b16 %v5597, %v5596
    %v5840 = vpack.c.b16 %v5599, %v5598
    %v5841 = vpack.c.b16 %v5601, %v5600
    %v5842 = vpack.c.b16 %v5603, %v5602
    %v5843 = vpack.c.b16 %v5605, %v5604
    %v5844 = vpack.c.b16 %v5607, %v5606
    %v5845 = vpack.c.b16 %v5609, %v5608
    %v5846 = vpack.c.b16 %v5611, %v5610
    %v5847 = vpack.c.b16 %v5613, %v5612
    %v5848 = vpack.c.b16 %v5615, %v5614
    %v5849 = vpack.c.b16 %v5617, %v5616
    %v5850 = vpack.c.b16 %v5619, %v5618
    %v5851 = vpack.c.b16 %v5621, %v5620
    %v5852 = vpack.c.b16 %v5623, %v5622
    %v5853 = vpack.c.b16 %v5625, %v5624
    %v5854 = vpack.c.b16 %v5627, %v5626
    %v5855 = vpack.c.b16 %v5629, %v5628
    %v5856 = vpack.c.b16 %v5631, %v5630
    %v5857 = vpack.c.b16 %v5633, %v5632
    %v5858 = vpack.c.b16 %v5635, %v5634
    %v5859 = vpack.c.b16 %v5637, %v5636
    %v5860 = vpack.c.b16 %v5639, %v5638
    %v5861 = vpack.c.b16 %v5641, %v5640
    %v5862 = vpack.c.b16 %v5643, %v5642
    %v5863 = vpack.c.b16 %v5645, %v5644
    %v5864 = vpack.c.b16 %v5647, %v5646
    %v5865 = vpack.c.b16 %v5649, %v5648
    %v5866 = vpack.c.b16 %v5651, %v5650
    %v5867 = vpack.c.b16 %v5653, %v5652
    %v5868 = vpack.c.b16 %v5655, %v5654
    %v5869 = vpack.c.b16 %v5657, %v5656
    %v5870 = vpack.c.b16 %v5659, %v5658
    %v5871 = vpack.c.b16 %v5661, %v5660
    %v5872 = vpack.c.b16 %v5663, %v5662
    %v5873 = vpack.c.b16 %v5665, %v5664
    %v5874 = vpack.c.b16 %v5667, %v5666
    %v5875 = vpack.c.b16 %v5669, %v5668
    %v5876 = vpack.c.b16 %v5671, %v5670
    %v5877 = vpack.c.b16 %v5673, %v5672
    %v5878 = vpack.c.b16 %v5675, %v5674
    %v5879 = vpack.c.b16 %v5677, %v5676
    %v5880 = vpack.c.b16 %v5679, %v5678
    %v5881 = vpack.c.b16 %v5681, %v5680
    %v5882 = vpack.c.b16 %v5683, %v5682
    %v5883 = vpack.c.b16 %v5685, %v5684
    %v5884 = vpack.c.b16 %v5687, %v5686
    %v5885 = vpack.c.b16 %v5689, %v5688
    %v5886 = vpack.c.b16 %v5691, %v5690
    %v5887 = vpack.c.b16 %v5693, %v5692
    %v5888 = vpack.c.b16 %v5695, %v5694
    %v5889 = vpack.c.b16 %v5697, %v5696
    %6082 = vst [vmem:[#allocation8] sm:$0xff] %v5698
    %6083 = vst [vmem:[#allocation8 + $0x8] sm:$0xff] %v5699
    %6084 = vst [vmem:[#allocation8 + $0x10] sm:$0xff] %v5700
    %6085 = vst [vmem:[#allocation8 + $0x18] sm:$0xff] %v5701
    %6086 = vst [vmem:[#allocation8 + $0x20] sm:$0xff] %v5702
    %6087 = vst [vmem:[#allocation8 + $0x28] sm:$0xff] %v5703
    %6088 = vst [vmem:[#allocation8 + $0x30] sm:$0xff] %v5704
    %6089 = vst [vmem:[#allocation8 + $0x38] sm:$0xff] %v5705
    %6090 = vst [vmem:[#allocation8 + $0x40] sm:$0xff] %v5706
    %6091 = vst [vmem:[#allocation8 + $0x48] sm:$0xff] %v5707
    %6092 = vst [vmem:[#allocation8 + $0x50] sm:$0xff] %v5708
    %6093 = vst [vmem:[#allocation8 + $0x58] sm:$0xff] %v5709
    %6094 = vst [vmem:[#allocation8 + $0x60] sm:$0xff] %v5710
    %6095 = vst [vmem:[#allocation8 + $0x68] sm:$0xff] %v5711
    %6096 = vst [vmem:[#allocation8 + $0x70] sm:$0xff] %v5712
    %6097 = vst [vmem:[#allocation8 + $0x78] sm:$0xff] %v5713
    %6098 = vst [vmem:[#allocation8 + $0x80] sm:$0xff] %v5714
    %6099 = vst [vmem:[#allocation8 + $0x88] sm:$0xff] %v5715
    %6100 = vst [vmem:[#allocation8 + $0x90] sm:$0xff] %v5716
    %6101 = vst [vmem:[#allocation8 + $0x98] sm:$0xff] %v5717
    %6102 = vst [vmem:[#allocation8 + $0xa0] sm:$0xff] %v5718
    %6103 = vst [vmem:[#allocation8 + $0xa8] sm:$0xff] %v5719
    %6104 = vst [vmem:[#allocation8 + $0xb0] sm:$0xff] %v5720
    %6105 = vst [vmem:[#allocation8 + $0xb8] sm:$0xff] %v5721
    %6106 = vst [vmem:[#allocation8 + $0xc0] sm:$0xff] %v5722
    %6107 = vst [vmem:[#allocation8 + $0xc8] sm:$0xff] %v5723
    %6108 = vst [vmem:[#allocation8 + $0xd0] sm:$0xff] %v5724
    %6109 = vst [vmem:[#allocation8 + $0xd8] sm:$0xff] %v5725
    %6110 = vst [vmem:[#allocation8 + $0xe0] sm:$0xff] %v5726
    %6111 = vst [vmem:[#allocation8 + $0xe8] sm:$0xff] %v5727
    %6112 = vst [vmem:[#allocation8 + $0xf0] sm:$0xff] %v5728
    %6113 = vst [vmem:[#allocation8 + $0xf8] sm:$0xff] %v5729
    %6114 = vst [vmem:[#allocation8 + $0x100] sm:$0xff] %v5730
    %6115 = vst [vmem:[#allocation8 + $0x108] sm:$0xff] %v5731
    %6116 = vst [vmem:[#allocation8 + $0x110] sm:$0xff] %v5732
    %6117 = vst [vmem:[#allocation8 + $0x118] sm:$0xff] %v5733
    %6118 = vst [vmem:[#allocation8 + $0x120] sm:$0xff] %v5734
    %6119 = vst [vmem:[#allocation8 + $0x128] sm:$0xff] %v5735
    %6120 = vst [vmem:[#allocation8 + $0x130] sm:$0xff] %v5736
    %6121 = vst [vmem:[#allocation8 + $0x138] sm:$0xff] %v5737
    %6122 = vst [vmem:[#allocation8 + $0x140] sm:$0xff] %v5738
    %6123 = vst [vmem:[#allocation8 + $0x148] sm:$0xff] %v5739
    %6124 = vst [vmem:[#allocation8 + $0x150] sm:$0xff] %v5740
    %6125 = vst [vmem:[#allocation8 + $0x158] sm:$0xff] %v5741
    %6126 = vst [vmem:[#allocation8 + $0x160] sm:$0xff] %v5742
    %6127 = vst [vmem:[#allocation8 + $0x168] sm:$0xff] %v5743
    %6128 = vst [vmem:[#allocation8 + $0x170] sm:$0xff] %v5744
    %6129 = vst [vmem:[#allocation8 + $0x178] sm:$0xff] %v5745
    %6130 = vst [vmem:[#allocation8 + $0x180] sm:$0xff] %v5746
    %6131 = vst [vmem:[#allocation8 + $0x188] sm:$0xff] %v5747
    %6132 = vst [vmem:[#allocation8 + $0x190] sm:$0xff] %v5748
    %6133 = vst [vmem:[#allocation8 + $0x198] sm:$0xff] %v5749
    %6134 = vst [vmem:[#allocation8 + $0x1a0] sm:$0xff] %v5750
    %6135 = vst [vmem:[#allocation8 + $0x1a8] sm:$0xff] %v5751
    %6136 = vst [vmem:[#allocation8 + $0x1b0] sm:$0xff] %v5752
    %6137 = vst [vmem:[#allocation8 + $0x1b8] sm:$0xff] %v5753
    %6138 = vst [vmem:[#allocation8 + $0x1c0] sm:$0xff] %v5754
    %6139 = vst [vmem:[#allocation8 + $0x1c8] sm:$0xff] %v5755
    %6140 = vst [vmem:[#allocation8 + $0x1d0] sm:$0xff] %v5756
    %6141 = vst [vmem:[#allocation8 + $0x1d8] sm:$0xff] %v5757
    %6142 = vst [vmem:[#allocation8 + $0x1e0] sm:$0xff] %v5758
    %6143 = vst [vmem:[#allocation8 + $0x1e8] sm:$0xff] %v5759
    %6144 = vst [vmem:[#allocation8 + $0x1f0] sm:$0xff] %v5760
    %6145 = vst [vmem:[#allocation8 + $0x1f8] sm:$0xff] %v5761
    %6146 = vst [vmem:[#allocation8 + $0x200] sm:$0xff] %v5762
    %6147 = vst [vmem:[#allocation8 + $0x208] sm:$0xff] %v5763
    %6148 = vst [vmem:[#allocation8 + $0x210] sm:$0xff] %v5764
    %6149 = vst [vmem:[#allocation8 + $0x218] sm:$0xff] %v5765
    %6150 = vst [vmem:[#allocation8 + $0x220] sm:$0xff] %v5766
    %6151 = vst [vmem:[#allocation8 + $0x228] sm:$0xff] %v5767
    %6152 = vst [vmem:[#allocation8 + $0x230] sm:$0xff] %v5768
    %6153 = vst [vmem:[#allocation8 + $0x238] sm:$0xff] %v5769
    %6154 = vst [vmem:[#allocation8 + $0x240] sm:$0xff] %v5770
    %6155 = vst [vmem:[#allocation8 + $0x248] sm:$0xff] %v5771
    %6156 = vst [vmem:[#allocation8 + $0x250] sm:$0xff] %v5772
    %6157 = vst [vmem:[#allocation8 + $0x258] sm:$0xff] %v5773
    %6158 = vst [vmem:[#allocation8 + $0x260] sm:$0xff] %v5774
    %6159 = vst [vmem:[#allocation8 + $0x268] sm:$0xff] %v5775
    %6160 = vst [vmem:[#allocation8 + $0x270] sm:$0xff] %v5776
    %6161 = vst [vmem:[#allocation8 + $0x278] sm:$0xff] %v5777
    %6162 = vst [vmem:[#allocation8 + $0x280] sm:$0xff] %v5778
    %6163 = vst [vmem:[#allocation8 + $0x288] sm:$0xff] %v5779
    %6164 = vst [vmem:[#allocation8 + $0x290] sm:$0xff] %v5780
    %6165 = vst [vmem:[#allocation8 + $0x298] sm:$0xff] %v5781
    %6166 = vst [vmem:[#allocation8 + $0x2a0] sm:$0xff] %v5782
    %6167 = vst [vmem:[#allocation8 + $0x2a8] sm:$0xff] %v5783
    %6168 = vst [vmem:[#allocation8 + $0x2b0] sm:$0xff] %v5784
    %6169 = vst [vmem:[#allocation8 + $0x2b8] sm:$0xff] %v5785
    %6170 = vst [vmem:[#allocation8 + $0x2c0] sm:$0xff] %v5786
    %6171 = vst [vmem:[#allocation8 + $0x2c8] sm:$0xff] %v5787
    %6172 = vst [vmem:[#allocation8 + $0x2d0] sm:$0xff] %v5788
    %6173 = vst [vmem:[#allocation8 + $0x2d8] sm:$0xff] %v5789
    %6174 = vst [vmem:[#allocation8 + $0x2e0] sm:$0xff] %v5790
    %6175 = vst [vmem:[#allocation8 + $0x2e8] sm:$0xff] %v5791
    %6176 = vst [vmem:[#allocation8 + $0x2f0] sm:$0xff] %v5792
    %6177 = vst [vmem:[#allocation8 + $0x2f8] sm:$0xff] %v5793
    %6178 = vst [vmem:[#allocation8 + $0x300] sm:$0xff] %v5794
    %6179 = vst [vmem:[#allocation8 + $0x308] sm:$0xff] %v5795
    %6180 = vst [vmem:[#allocation8 + $0x310] sm:$0xff] %v5796
    %6181 = vst [vmem:[#allocation8 + $0x318] sm:$0xff] %v5797
    %6182 = vst [vmem:[#allocation8 + $0x320] sm:$0xff] %v5798
    %6183 = vst [vmem:[#allocation8 + $0x328] sm:$0xff] %v5799
    %6184 = vst [vmem:[#allocation8 + $0x330] sm:$0xff] %v5800
    %6185 = vst [vmem:[#allocation8 + $0x338] sm:$0xff] %v5801
    %6186 = vst [vmem:[#allocation8 + $0x340] sm:$0xff] %v5802
    %6187 = vst [vmem:[#allocation8 + $0x348] sm:$0xff] %v5803
    %6188 = vst [vmem:[#allocation8 + $0x350] sm:$0xff] %v5804
    %6189 = vst [vmem:[#allocation8 + $0x358] sm:$0xff] %v5805
    %6190 = vst [vmem:[#allocation8 + $0x360] sm:$0xff] %v5806
    %6191 = vst [vmem:[#allocation8 + $0x368] sm:$0xff] %v5807
    %6192 = vst [vmem:[#allocation8 + $0x370] sm:$0xff] %v5808
    %6193 = vst [vmem:[#allocation8 + $0x378] sm:$0xff] %v5809
    %6194 = vst [vmem:[#allocation8 + $0x380] sm:$0xff] %v5810
    %6195 = vst [vmem:[#allocation8 + $0x388] sm:$0xff] %v5811
    %6196 = vst [vmem:[#allocation8 + $0x390] sm:$0xff] %v5812
    %6197 = vst [vmem:[#allocation8 + $0x398] sm:$0xff] %v5813
    %6198 = vst [vmem:[#allocation8 + $0x3a0] sm:$0xff] %v5814
    %6199 = vst [vmem:[#allocation8 + $0x3a8] sm:$0xff] %v5815
    %6200 = vst [vmem:[#allocation8 + $0x3b0] sm:$0xff] %v5816
    %6201 = vst [vmem:[#allocation8 + $0x3b8] sm:$0xff] %v5817
    %6202 = vst [vmem:[#allocation8 + $0x3c0] sm:$0xff] %v5818
    %6203 = vst [vmem:[#allocation8 + $0x3c8] sm:$0xff] %v5819
    %6204 = vst [vmem:[#allocation8 + $0x3d0] sm:$0xff] %v5820
    %6205 = vst [vmem:[#allocation8 + $0x3d8] sm:$0xff] %v5821
    %6206 = vst [vmem:[#allocation8 + $0x3e0] sm:$0xff] %v5822
    %6207 = vst [vmem:[#allocation8 + $0x3e8] sm:$0xff] %v5823
    %6208 = vst [vmem:[#allocation8 + $0x3f0] sm:$0xff] %v5824
    %6209 = vst [vmem:[#allocation8 + $0x3f8] sm:$0xff] %v5825
    %6210 = vst [vmem:[#allocation8 + $0x400] sm:$0xff] %v5826
    %6211 = vst [vmem:[#allocation8 + $0x408] sm:$0xff] %v5827
    %6212 = vst [vmem:[#allocation8 + $0x410] sm:$0xff] %v5828
    %6213 = vst [vmem:[#allocation8 + $0x418] sm:$0xff] %v5829
    %6214 = vst [vmem:[#allocation8 + $0x420] sm:$0xff] %v5830
    %6215 = vst [vmem:[#allocation8 + $0x428] sm:$0xff] %v5831
    %6216 = vst [vmem:[#allocation8 + $0x430] sm:$0xff] %v5832
    %6217 = vst [vmem:[#allocation8 + $0x438] sm:$0xff] %v5833
    %6218 = vst [vmem:[#allocation8 + $0x440] sm:$0xff] %v5834
    %6219 = vst [vmem:[#allocation8 + $0x448] sm:$0xff] %v5835
    %6220 = vst [vmem:[#allocation8 + $0x450] sm:$0xff] %v5836
    %6221 = vst [vmem:[#allocation8 + $0x458] sm:$0xff] %v5837
    %6222 = vst [vmem:[#allocation8 + $0x460] sm:$0xff] %v5838
    %6223 = vst [vmem:[#allocation8 + $0x468] sm:$0xff] %v5839
    %6224 = vst [vmem:[#allocation8 + $0x470] sm:$0xff] %v5840
    %6225 = vst [vmem:[#allocation8 + $0x478] sm:$0xff] %v5841
    %6226 = vst [vmem:[#allocation8 + $0x480] sm:$0xff] %v5842
    %6227 = vst [vmem:[#allocation8 + $0x488] sm:$0xff] %v5843
    %6228 = vst [vmem:[#allocation8 + $0x490] sm:$0xff] %v5844
    %6229 = vst [vmem:[#allocation8 + $0x498] sm:$0xff] %v5845
    %6230 = vst [vmem:[#allocation8 + $0x4a0] sm:$0xff] %v5846
    %6231 = vst [vmem:[#allocation8 + $0x4a8] sm:$0xff] %v5847
    %6232 = vst [vmem:[#allocation8 + $0x4b0] sm:$0xff] %v5848
    %6233 = vst [vmem:[#allocation8 + $0x4b8] sm:$0xff] %v5849
    %6234 = vst [vmem:[#allocation8 + $0x4c0] sm:$0xff] %v5850
    %6235 = vst [vmem:[#allocation8 + $0x4c8] sm:$0xff] %v5851
    %6236 = vst [vmem:[#allocation8 + $0x4d0] sm:$0xff] %v5852
    %6237 = vst [vmem:[#allocation8 + $0x4d8] sm:$0xff] %v5853
    %6238 = vst [vmem:[#allocation8 + $0x4e0] sm:$0xff] %v5854
    %6239 = vst [vmem:[#allocation8 + $0x4e8] sm:$0xff] %v5855
    %6240 = vst [vmem:[#allocation8 + $0x4f0] sm:$0xff] %v5856
    %6241 = vst [vmem:[#allocation8 + $0x4f8] sm:$0xff] %v5857
    %6242 = vst [vmem:[#allocation8 + $0x500] sm:$0xff] %v5858
    %6243 = vst [vmem:[#allocation8 + $0x508] sm:$0xff] %v5859
    %6244 = vst [vmem:[#allocation8 + $0x510] sm:$0xff] %v5860
    %6245 = vst [vmem:[#allocation8 + $0x518] sm:$0xff] %v5861
    %6246 = vst [vmem:[#allocation8 + $0x520] sm:$0xff] %v5862
    %6247 = vst [vmem:[#allocation8 + $0x528] sm:$0xff] %v5863
    %6248 = vst [vmem:[#allocation8 + $0x530] sm:$0xff] %v5864
    %6249 = vst [vmem:[#allocation8 + $0x538] sm:$0xff] %v5865
    %6250 = vst [vmem:[#allocation8 + $0x540] sm:$0xff] %v5866
    %6251 = vst [vmem:[#allocation8 + $0x548] sm:$0xff] %v5867
    %6252 = vst [vmem:[#allocation8 + $0x550] sm:$0xff] %v5868
    %6253 = vst [vmem:[#allocation8 + $0x558] sm:$0xff] %v5869
    %6254 = vst [vmem:[#allocation8 + $0x560] sm:$0xff] %v5870
    %6255 = vst [vmem:[#allocation8 + $0x568] sm:$0xff] %v5871
    %6256 = vst [vmem:[#allocation8 + $0x570] sm:$0xff] %v5872
    %6257 = vst [vmem:[#allocation8 + $0x578] sm:$0xff] %v5873
    %6258 = vst [vmem:[#allocation8 + $0x580] sm:$0xff] %v5874
    %6259 = vst [vmem:[#allocation8 + $0x588] sm:$0xff] %v5875
    %6260 = vst [vmem:[#allocation8 + $0x590] sm:$0xff] %v5876
    %6261 = vst [vmem:[#allocation8 + $0x598] sm:$0xff] %v5877
    %6262 = vst [vmem:[#allocation8 + $0x5a0] sm:$0xff] %v5878
    %6263 = vst [vmem:[#allocation8 + $0x5a8] sm:$0xff] %v5879
    %6264 = vst [vmem:[#allocation8 + $0x5b0] sm:$0xff] %v5880
    %6265 = vst [vmem:[#allocation8 + $0x5b8] sm:$0xff] %v5881
    %6266 = vst [vmem:[#allocation8 + $0x5c0] sm:$0xff] %v5882
    %6267 = vst [vmem:[#allocation8 + $0x5c8] sm:$0xff] %v5883
    %6268 = vst [vmem:[#allocation8 + $0x5d0] sm:$0xff] %v5884
    %6269 = vst [vmem:[#allocation8 + $0x5d8] sm:$0xff] %v5885
    %6270 = vst [vmem:[#allocation8 + $0x5e0] sm:$0xff] %v5886
    %6271 = vst [vmem:[#allocation8 + $0x5e8] sm:$0xff] %v5887
    %6272 = vst [vmem:[#allocation8 + $0x5f0] sm:$0xff] %v5888
    %6273 = vst [vmem:[#allocation8 + $0x5f8] sm:$0xff] %v5889
    // Predicated region
    $region26: #{tpu_custom_call.1} parent=1 // pred_check
      _
    $region27: #{tpu_custom_call.1} parent=1 // pred_check_branch
      %6275 = sbr.rel (0) target = $region29
    $region28: #{tpu_custom_call.1} parent=1 // pred_region
      %s6277 = ssub.s32 24576, 24576
      %6278 = vsyncadd [#allocation4], %s6277
      %s6279 = sshll.u32 [#allocation8], 4
      %s6280 = int_to_ptr.vmem [resolvable:$true] %s6279
      %6285 = dma.vmem_to_hbm [thread:$0]  %s6280, 24576, %s3, [#allocation4], 768, 768, 48
    $region29: #{tpu_custom_call.1} parent=1 // pred_fallthru
      _
    // Predicated region
    $region30: #{tpu_custom_call.1} parent=1 // pred_check
      _
    $region31: #{tpu_custom_call.1} parent=1 // pred_check_branch
      %6287 = sbr.rel (0) target = $region33
    $region32: #{tpu_custom_call.1} parent=1 // pred_region
      %6288 = dma.done [#allocation4], 24576
    $region33: #{tpu_custom_call.1} parent=1 // pred_fallthru
      _
    %6289 = vsyncpa [#allocation3], 1
    %6290 = vsyncpa [#allocation6], 1
    %6291 = vsyncpa [#allocation4], 1

</llo_original>
